<compile_context>
chip_gen: v7x
topology: tpu7x:2x2x1
jax: 0.10.0
libtpu: 0.0.40
codegen_flags: <defaults>
</compile_context>

<pallas_src>
import functools
import math

import jax
import jax.numpy as jnp
from jax import lax
from jax.experimental import pallas as pl
from jax.experimental.pallas import tpu as pltpu


# ------------------------------ Pallas kernel --------------------------------

def _flash_qkv_kernel(q_ref, k_ref, v_ref, o_ref, m_sc, l_sc, acc_sc, *,
                      scale, num_heads, head_dim):
    """Flash-attention step: one (batch, q-tile) over one KV tile, all heads fused.

    q_ref:        (1, H, tq, D) bf16
    k_ref, v_ref: (1, H, tk, D) bf16
    o_ref:        (1, tq, H*D)  f32   (lane-dense, written on last KV step only)
    scratch:      m_sc/l_sc (H, tq, 1) f32, acc_sc (H, tq, D) f32
    """
    ki = pl.program_id(2)

    @pl.when(ki == 0)
    def _init():
        m_sc[...] = jnp.full_like(m_sc, -jnp.inf)
        l_sc[...] = jnp.zeros_like(l_sc)
        acc_sc[...] = jnp.zeros_like(acc_sc)

    # Static unroll over heads (H is small); each head is an independent attention.
    for h in range(num_heads):
        q = q_ref[0, h]                             # (tq, D) bf16
        k = k_ref[0, h]                             # (tk, D) bf16
        v = v_ref[0, h]                             # (tk, D) bf16

        # scores: bf16 operands on the MXU, f32 accumulation, f32 softmax math.
        s = lax.dot_general(q, k, (((1,), (1,)), ((), ())),
                            preferred_element_type=jnp.float32) * scale    # (tq, tk)

        m_prev = m_sc[h]                                                    # (tq, 1)
        m_new = jnp.maximum(m_prev, jnp.max(s, axis=-1, keepdims=True))
        alpha = jnp.exp(m_prev - m_new)
        p = jnp.exp(s - m_new)                                              # (tq, tk)

        l_sc[h] = alpha * l_sc[h] + jnp.sum(p, axis=-1, keepdims=True)
        acc_sc[h] = alpha * acc_sc[h] + jnp.dot(
            p.astype(jnp.bfloat16), v, preferred_element_type=jnp.float32)  # (tq, D)
        m_sc[h] = m_new

    @pl.when(ki == pl.num_programs(2) - 1)
    def _finalize():
        for h in range(num_heads):
            inv = pl.reciprocal(l_sc[h], approx=True)                       # (tq, 1)
            o_ref[0, :, h * head_dim:(h + 1) * head_dim] = (
                acc_sc[h] * inv).astype(o_ref.dtype)


# ------------------------------ Python wrapper --------------------------------

def qkv_flash_attention(qkv, num_heads, *, q_tile=128, kv_tile=128):
    """QKVFlashAttention.forward:  qkv (B, 3*H*D, S) f32  ->  (B, H*D, S) f32."""
    B, three_c, S = qkv.shape
    assert three_c % 3 == 0
    C = three_c // 3
    H = num_heads
    assert C % H == 0, "embed_dim must be divisible by num_heads"
    D = C // H
    assert D in (16, 32, 64), "Only support head_dim == 16, 32, or 64"
    scale = 1.0 / math.sqrt(D)

    # Tile sizes: 128-aligned when possible, otherwise fall back to full-sequence tiles
    # (full-extent blocks always satisfy the (8,128) BlockSpec rule).
    tq = q_tile if S % q_tile == 0 else S
    tk = kv_tile if S % kv_tile == 0 else S

    # 'b (three h d) s -> b s three h d' split, laid out as (B, H, S, D); cast to bf16
    # here so the transpose+cast fuse in XLA and the kernel DMAs half the bytes.
    qkv5 = qkv.reshape(B, 3, H, D, S)
    q = qkv5[:, 0].transpose(0, 1, 3, 2).astype(jnp.bfloat16)   # (B, H, S, D)
    k = qkv5[:, 1].transpose(0, 1, 3, 2).astype(jnp.bfloat16)
    v = qkv5[:, 2].transpose(0, 1, 3, 2).astype(jnp.bfloat16)

    kern = functools.partial(_flash_qkv_kernel, scale=scale,
                             num_heads=H, head_dim=D)

    out_bsc = pl.pallas_call(
        kern,
        out_shape=jax.ShapeDtypeStruct((B, S, C), jnp.float32),
        grid_spec=pltpu.PrefetchScalarGridSpec(
            num_scalar_prefetch=0,
            grid=(B, S // tq, S // tk),
            in_specs=[
                pl.BlockSpec((1, H, tq, D), lambda b, qi, ki: (b, 0, qi, 0)),
                pl.BlockSpec((1, H, tk, D), lambda b, qi, ki: (b, 0, ki, 0)),
                pl.BlockSpec((1, H, tk, D), lambda b, qi, ki: (b, 0, ki, 0)),
            ],
            out_specs=pl.BlockSpec((1, tq, C), lambda b, qi, ki: (b, qi, 0)),
            scratch_shapes=[
                pltpu.VMEM((H, tq, 1), jnp.float32),   # running max  m
                pltpu.VMEM((H, tq, 1), jnp.float32),   # running sum  l
                pltpu.VMEM((H, tq, D), jnp.float32),   # f32 accumulator
            ]),
        compiler_params=pltpu.CompilerParams(
            dimension_semantics=("parallel", "parallel", "arbitrary")),
    )(q, k, v)

    # 'b s (h d) -> b (h d) s'
    return out_bsc.transpose(0, 2, 1)


# ------------------------------ pure-JAX reference ----------------------------

def reference_qkv_attention(qkv, num_heads, *, compute_dtype=jnp.float32):
    """Full (non-flash) attention reference; compute_dtype=bf16 mimics the MXU-operand
    precision the kernel (and PyTorch flash-attn, which is half-precision-only) uses."""
    B, three_c, S = qkv.shape
    C = three_c // 3
    D = C // num_heads
    qkv5 = qkv.reshape(B, 3, num_heads, D, S)
    q = qkv5[:, 0].transpose(0, 1, 3, 2).astype(compute_dtype).astype(jnp.float32)
    k = qkv5[:, 1].transpose(0, 1, 3, 2).astype(compute_dtype).astype(jnp.float32)
    v = qkv5[:, 2].transpose(0, 1, 3, 2).astype(compute_dtype).astype(jnp.float32)
    s = jnp.einsum('bhqd,bhkd->bhqk', q, k) / math.sqrt(D)
    w = jax.nn.softmax(s, axis=-1)
    o = jnp.einsum('bhqk,bhkd->bhqd', w, v)                      # (B, H, S, D)
    return o.transpose(0, 1, 3, 2).reshape(B, C, S)              # b (h d) s


# ---------------------------------- main ---------------------------------------

if __name__ == "__main__":
    key = jax.random.PRNGKey(0)
    k1, k2 = jax.random.split(key)

    def check(qkv, num_heads, name):
        out = jax.block_until_ready(qkv_flash_attention(qkv, num_heads))
        B, three_c, S = qkv.shape
        assert out.shape == (B, three_c // 3, S), out.shape
        # vs reference with bf16-quantized operands (same precision regime as kernel/MXU)
        ref_bf16 = reference_qkv_attention(qkv, num_heads, compute_dtype=jnp.bfloat16)
        err = float(jnp.max(jnp.abs(out - ref_bf16)))
        tol = 1e-2 * (1.0 + float(jnp.max(jnp.abs(ref_bf16))))
        assert err < tol, f"{name}: bf16-ref mismatch, max abs err {err} >= {tol}"
        # loose sanity check vs full-f32 reference
        ref_f32 = reference_qkv_attention(qkv, num_heads)
        err32 = float(jnp.max(jnp.abs(out - ref_f32)))
        tol32 = 5e-2 * (1.0 + float(jnp.max(jnp.abs(ref_f32))))
        assert err32 < tol32, f"{name}: f32-ref mismatch, max abs err {err32} >= {tol32}"

    # Config 1: embed_dim=128, num_heads=2 (head_dim=64), seq=256, batch=2.
    #           -> grid (2, 2, 2): exercises multiple KV tiles / online softmax.
    qkv1 = jax.random.normal(k1, (2, 3 * 128, 256), jnp.float32)
    check(qkv1, num_heads=2, name="cfg1")

    # Config 2: embed_dim=128, num_heads=4 (head_dim=32), seq=64 (full-sequence tiles).
    qkv2 = jax.random.normal(k2, (2, 3 * 128, 64), jnp.float32)
    check(qkv2, num_heads=4, name="cfg2")

    print("KERNEL_OK")
</pallas_src>

<mosaic_0001>
module attributes {stable_mosaic.version = 11 : i64} {
  func.func @_flash_qkv_kernel(%arg0: i32, %arg1: i32, %arg2: i32, %arg3: memref<1x2x128x64xbf16, #tpu.memory_space<vmem>>, %arg4: memref<1x2x128x64xbf16, #tpu.memory_space<vmem>>, %arg5: memref<1x2x128x64xbf16, #tpu.memory_space<vmem>>, %arg6: memref<1x128x128xf32, #tpu.memory_space<vmem>>, %arg7: memref<2x128x1xf32, #tpu.memory_space<vmem>>, %arg8: memref<2x128x1xf32, #tpu.memory_space<vmem>>, %arg9: memref<2x128x64xf32, #tpu.memory_space<vmem>>) attributes {dimension_semantics = [#tpu.dimension_semantics<parallel>, #tpu.dimension_semantics<parallel>, #tpu.dimension_semantics<arbitrary>], iteration_bounds = array<i64: 2, 2, 2>, scalar_prefetch = 0 : i64, scratch_operands = 3 : i64, tpu.core_type = #tpu.core_type<tc>, window_params = [{transform_indices = @transform_0, window_bounds = array<i64: 1, 2, 128, 64>}, {transform_indices = @transform_1, window_bounds = array<i64: 1, 2, 128, 64>}, {transform_indices = @transform_2, window_bounds = array<i64: 1, 2, 128, 64>}, {transform_indices = @transform_3, window_bounds = array<i64: 1, 128, 128>}]} {
    %c0_i32 = arith.constant 0 : i32
    %0 = arith.cmpi eq, %arg2, %c0_i32 : i32
    %1 = arith.extui %0 : i1 to i32
    %c0_i32_0 = arith.constant 0 : i32
    %2 = arith.cmpi ne, %1, %c0_i32_0 : i32
    scf.if %2 {
      %cst_69 = arith.constant 0xFF800000 : f32
      %88 = vector.broadcast %cst_69 : f32 to vector<2x128x1xf32>
      %c0_70 = arith.constant 0 : index
      %c0_71 = arith.constant 0 : index
      %c0_72 = arith.constant 0 : index
      %89 = vector.load %arg7[%c0_70, %c0_71, %c0_72] : memref<2x128x1xf32, #tpu.memory_space<vmem>>, vector<2x128x1xf32>
      tpu.vector_store %arg7[%c0_70, %c0_71, %c0_72], %88 {strides = array<i32>} : memref<2x128x1xf32, #tpu.memory_space<vmem>>, vector<2x128x1xf32>,
      %cst_73 = arith.constant 0.000000e+00 : f32
      %90 = vector.broadcast %cst_73 : f32 to vector<2x128x1xf32>
      %c0_74 = arith.constant 0 : index
      %c0_75 = arith.constant 0 : index
      %c0_76 = arith.constant 0 : index
      %91 = vector.load %arg8[%c0_74, %c0_75, %c0_76] : memref<2x128x1xf32, #tpu.memory_space<vmem>>, vector<2x128x1xf32>
      tpu.vector_store %arg8[%c0_74, %c0_75, %c0_76], %90 {strides = array<i32>} : memref<2x128x1xf32, #tpu.memory_space<vmem>>, vector<2x128x1xf32>,
      %cst_77 = arith.constant 0.000000e+00 : f32
      %92 = vector.broadcast %cst_77 : f32 to vector<2x128x64xf32>
      %c0_78 = arith.constant 0 : index
      %c0_79 = arith.constant 0 : index
      %c0_80 = arith.constant 0 : index
      %93 = vector.load %arg9[%c0_78, %c0_79, %c0_80] : memref<2x128x64xf32, #tpu.memory_space<vmem>>, vector<2x128x64xf32>
      tpu.vector_store %arg9[%c0_78, %c0_79, %c0_80], %92 {strides = array<i32>} : memref<2x128x64xf32, #tpu.memory_space<vmem>>, vector<2x128x64xf32>,
    } else {
    }
    %c0 = arith.constant 0 : index
    %c0_1 = arith.constant 0 : index
    %c0_2 = arith.constant 0 : index
    %c0_3 = arith.constant 0 : index
    %3 = vector.load %arg3[%c0, %c0_1, %c0_2, %c0_3] : memref<1x2x128x64xbf16, #tpu.memory_space<vmem>>, vector<1x1x128x64xbf16>
    %4 = vector.shape_cast %3 : vector<1x1x128x64xbf16> to vector<128x64xbf16>
    %c0_4 = arith.constant 0 : index
    %c0_5 = arith.constant 0 : index
    %c0_6 = arith.constant 0 : index
    %c0_7 = arith.constant 0 : index
    %5 = vector.load %arg4[%c0_4, %c0_5, %c0_6, %c0_7] : memref<1x2x128x64xbf16, #tpu.memory_space<vmem>>, vector<1x1x128x64xbf16>
    %6 = vector.shape_cast %5 : vector<1x1x128x64xbf16> to vector<128x64xbf16>
    %c0_8 = arith.constant 0 : index
    %c0_9 = arith.constant 0 : index
    %c0_10 = arith.constant 0 : index
    %c0_11 = arith.constant 0 : index
    %7 = vector.load %arg5[%c0_8, %c0_9, %c0_10, %c0_11] : memref<1x2x128x64xbf16, #tpu.memory_space<vmem>>, vector<1x1x128x64xbf16>
    %8 = vector.shape_cast %7 : vector<1x1x128x64xbf16> to vector<128x64xbf16>
    %cst = arith.constant dense<0.000000e+00> : vector<128x128xf32>
    %9 = tpu.matmul %4, %6, %cst {dimension_numbers = #tpu.dot_dimension_numbers<[1], [1], [0], [0], [0, 0, 1, 0], [], []>} : vector<128x64xbf16>, vector<128x64xbf16>, vector<128x128xf32> -> vector<128x128xf32>
    %cst_12 = arith.constant 1.250000e-01 : f32
    %10 = vector.broadcast %cst_12 : f32 to vector<128x128xf32>
    %11 = arith.mulf %9, %10 : vector<128x128xf32>
    %c0_13 = arith.constant 0 : index
    %c0_14 = arith.constant 0 : index
    %c0_15 = arith.constant 0 : index
    %12 = vector.load %arg7[%c0_13, %c0_14, %c0_15] : memref<2x128x1xf32, #tpu.memory_space<vmem>>, vector<1x128x1xf32>
    %13 = vector.shape_cast %12 : vector<1x128x1xf32> to vector<128x1xf32>
    %cst_16 = arith.constant dense<0xFF800000> : vector<128xf32>
    %14 = vector.multi_reduction <maximumf>, %11, %cst_16 [1] : vector<128x128xf32> to vector<128xf32>
    %15 = vector.shape_cast %14 : vector<128xf32> to vector<128x1xf32>
    %16 = arith.maximumf %13, %15 : vector<128x1xf32>
    %17 = arith.subf %13, %16 : vector<128x1xf32>
    %18 = math.exp %17 : vector<128x1xf32>
    %19 = vector.broadcast %16 : vector<128x1xf32> to vector<128x128xf32>
    %20 = arith.subf %11, %19 : vector<128x128xf32>
    %21 = math.exp %20 : vector<128x128xf32>
    %c0_17 = arith.constant 0 : index
    %c0_18 = arith.constant 0 : index
    %c0_19 = arith.constant 0 : index
    %22 = vector.load %arg8[%c0_17, %c0_18, %c0_19] : memref<2x128x1xf32, #tpu.memory_space<vmem>>, vector<1x128x1xf32>
    %23 = vector.shape_cast %22 : vector<1x128x1xf32> to vector<128x1xf32>
    %24 = arith.mulf %18, %23 : vector<128x1xf32>
    %cst_20 = arith.constant dense<0.000000e+00> : vector<128xf32>
    %25 = vector.multi_reduction <add>, %21, %cst_20 [1] : vector<128x128xf32> to vector<128xf32>
    %26 = vector.shape_cast %25 : vector<128xf32> to vector<128x1xf32>
    %27 = arith.addf %24, %26 : vector<128x1xf32>
    %c0_21 = arith.constant 0 : index
    %c0_22 = arith.constant 0 : index
    %c0_23 = arith.constant 0 : index
    %28 = vector.load %arg8[%c0_21, %c0_22, %c0_23] : memref<2x128x1xf32, #tpu.memory_space<vmem>>, vector<1x128x1xf32>
    %29 = vector.shape_cast %28 : vector<1x128x1xf32> to vector<128x1xf32>
    %30 = vector.shape_cast %27 : vector<128x1xf32> to vector<1x128x1xf32>
    tpu.vector_store %arg8[%c0_21, %c0_22, %c0_23], %30 {strides = array<i32>} : memref<2x128x1xf32, #tpu.memory_space<vmem>>, vector<1x128x1xf32>,
    %c0_24 = arith.constant 0 : index
    %c0_25 = arith.constant 0 : index
    %c0_26 = arith.constant 0 : index
    %31 = vector.load %arg9[%c0_24, %c0_25, %c0_26] : memref<2x128x64xf32, #tpu.memory_space<vmem>>, vector<1x128x64xf32>
    %32 = vector.shape_cast %31 : vector<1x128x64xf32> to vector<128x64xf32>
    %33 = vector.broadcast %18 : vector<128x1xf32> to vector<128x64xf32>
    %34 = arith.mulf %33, %32 : vector<128x64xf32>
    %35 = arith.truncf %21 : vector<128x128xf32> to vector<128x128xbf16>
    %cst_27 = arith.constant dense<0.000000e+00> : vector<128x64xf32>
    %36 = tpu.matmul %35, %8, %cst_27 {dimension_numbers = #tpu.dot_dimension_numbers<[1], [0], [0], [1], [0, 0, 1, 1], [], []>} : vector<128x128xbf16>, vector<128x64xbf16>, vector<128x64xf32> -> vector<128x64xf32>
    %37 = arith.addf %34, %36 : vector<128x64xf32>
    %c0_28 = arith.constant 0 : index
    %c0_29 = arith.constant 0 : index
    %c0_30 = arith.constant 0 : index
    %38 = vector.load %arg9[%c0_28, %c0_29, %c0_30] : memref<2x128x64xf32, #tpu.memory_space<vmem>>, vector<1x128x64xf32>
    %39 = vector.shape_cast %38 : vector<1x128x64xf32> to vector<128x64xf32>
    %40 = vector.shape_cast %37 : vector<128x64xf32> to vector<1x128x64xf32>
    tpu.vector_store %arg9[%c0_28, %c0_29, %c0_30], %40 {strides = array<i32>} : memref<2x128x64xf32, #tpu.memory_space<vmem>>, vector<1x128x64xf32>,
    %c0_31 = arith.constant 0 : index
    %c0_32 = arith.constant 0 : index
    %c0_33 = arith.constant 0 : index
    %41 = vector.load %arg7[%c0_31, %c0_32, %c0_33] : memref<2x128x1xf32, #tpu.memory_space<vmem>>, vector<1x128x1xf32>
    %42 = vector.shape_cast %41 : vector<1x128x1xf32> to vector<128x1xf32>
    %43 = vector.shape_cast %16 : vector<128x1xf32> to vector<1x128x1xf32>
    tpu.vector_store %arg7[%c0_31, %c0_32, %c0_33], %43 {strides = array<i32>} : memref<2x128x1xf32, #tpu.memory_space<vmem>>, vector<1x128x1xf32>,
    %c0_34 = arith.constant 0 : index
    %c1 = arith.constant 1 : index
    %c0_35 = arith.constant 0 : index
    %c0_36 = arith.constant 0 : index
    %44 = vector.load %arg3[%c0_34, %c1, %c0_35, %c0_36] : memref<1x2x128x64xbf16, #tpu.memory_space<vmem>>, vector<1x1x128x64xbf16>
    %45 = vector.shape_cast %44 : vector<1x1x128x64xbf16> to vector<128x64xbf16>
    %c0_37 = arith.constant 0 : index
    %c1_38 = arith.constant 1 : index
    %c0_39 = arith.constant 0 : index
    %c0_40 = arith.constant 0 : index
    %46 = vector.load %arg4[%c0_37, %c1_38, %c0_39, %c0_40] : memref<1x2x128x64xbf16, #tpu.memory_space<vmem>>, vector<1x1x128x64xbf16>
    %47 = vector.shape_cast %46 : vector<1x1x128x64xbf16> to vector<128x64xbf16>
    %c0_41 = arith.constant 0 : index
    %c1_42 = arith.constant 1 : index
    %c0_43 = arith.constant 0 : index
    %c0_44 = arith.constant 0 : index
    %48 = vector.load %arg5[%c0_41, %c1_42, %c0_43, %c0_44] : memref<1x2x128x64xbf16, #tpu.memory_space<vmem>>, vector<1x1x128x64xbf16>
    %49 = vector.shape_cast %48 : vector<1x1x128x64xbf16> to vector<128x64xbf16>
    %cst_45 = arith.constant dense<0.000000e+00> : vector<128x128xf32>
    %50 = tpu.matmul %45, %47, %cst_45 {dimension_numbers = #tpu.dot_dimension_numbers<[1], [1], [0], [0], [0, 0, 1, 0], [], []>} : vector<128x64xbf16>, vector<128x64xbf16>, vector<128x128xf32> -> vector<128x128xf32>
    %cst_46 = arith.constant 1.250000e-01 : f32
    %51 = vector.broadcast %cst_46 : f32 to vector<128x128xf32>
    %52 = arith.mulf %50, %51 : vector<128x128xf32>
    %c1_47 = arith.constant 1 : index
    %c0_48 = arith.constant 0 : index
    %c0_49 = arith.constant 0 : index
    %53 = vector.load %arg7[%c1_47, %c0_48, %c0_49] : memref<2x128x1xf32, #tpu.memory_space<vmem>>, vector<1x128x1xf32>
    %54 = vector.shape_cast %53 : vector<1x128x1xf32> to vector<128x1xf32>
    %cst_50 = arith.constant dense<0xFF800000> : vector<128xf32>
    %55 = vector.multi_reduction <maximumf>, %52, %cst_50 [1] : vector<128x128xf32> to vector<128xf32>
    %56 = vector.shape_cast %55 : vector<128xf32> to vector<128x1xf32>
    %57 = arith.maximumf %54, %56 : vector<128x1xf32>
    %58 = arith.subf %54, %57 : vector<128x1xf32>
    %59 = math.exp %58 : vector<128x1xf32>
    %60 = vector.broadcast %57 : vector<128x1xf32> to vector<128x128xf32>
    %61 = arith.subf %52, %60 : vector<128x128xf32>
    %62 = math.exp %61 : vector<128x128xf32>
    %c1_51 = arith.constant 1 : index
    %c0_52 = arith.constant 0 : index
    %c0_53 = arith.constant 0 : index
    %63 = vector.load %arg8[%c1_51, %c0_52, %c0_53] : memref<2x128x1xf32, #tpu.memory_space<vmem>>, vector<1x128x1xf32>
    %64 = vector.shape_cast %63 : vector<1x128x1xf32> to vector<128x1xf32>
    %65 = arith.mulf %59, %64 : vector<128x1xf32>
    %cst_54 = arith.constant dense<0.000000e+00> : vector<128xf32>
    %66 = vector.multi_reduction <add>, %62, %cst_54 [1] : vector<128x128xf32> to vector<128xf32>
    %67 = vector.shape_cast %66 : vector<128xf32> to vector<128x1xf32>
    %68 = arith.addf %65, %67 : vector<128x1xf32>
    %c1_55 = arith.constant 1 : index
    %c0_56 = arith.constant 0 : index
    %c0_57 = arith.constant 0 : index
    %69 = vector.load %arg8[%c1_55, %c0_56, %c0_57] : memref<2x128x1xf32, #tpu.memory_space<vmem>>, vector<1x128x1xf32>
    %70 = vector.shape_cast %69 : vector<1x128x1xf32> to vector<128x1xf32>
    %71 = vector.shape_cast %68 : vector<128x1xf32> to vector<1x128x1xf32>
    tpu.vector_store %arg8[%c1_55, %c0_56, %c0_57], %71 {strides = array<i32>} : memref<2x128x1xf32, #tpu.memory_space<vmem>>, vector<1x128x1xf32>,
    %c1_58 = arith.constant 1 : index
    %c0_59 = arith.constant 0 : index
    %c0_60 = arith.constant 0 : index
    %72 = vector.load %arg9[%c1_58, %c0_59, %c0_60] : memref<2x128x64xf32, #tpu.memory_space<vmem>>, vector<1x128x64xf32>
    %73 = vector.shape_cast %72 : vector<1x128x64xf32> to vector<128x64xf32>
    %74 = vector.broadcast %59 : vector<128x1xf32> to vector<128x64xf32>
    %75 = arith.mulf %74, %73 : vector<128x64xf32>
    %76 = arith.truncf %62 : vector<128x128xf32> to vector<128x128xbf16>
    %cst_61 = arith.constant dense<0.000000e+00> : vector<128x64xf32>
    %77 = tpu.matmul %76, %49, %cst_61 {dimension_numbers = #tpu.dot_dimension_numbers<[1], [0], [0], [1], [0, 0, 1, 1], [], []>} : vector<128x128xbf16>, vector<128x64xbf16>, vector<128x64xf32> -> vector<128x64xf32>
    %78 = arith.addf %75, %77 : vector<128x64xf32>
    %c1_62 = arith.constant 1 : index
    %c0_63 = arith.constant 0 : index
    %c0_64 = arith.constant 0 : index
    %79 = vector.load %arg9[%c1_62, %c0_63, %c0_64] : memref<2x128x64xf32, #tpu.memory_space<vmem>>, vector<1x128x64xf32>
    %80 = vector.shape_cast %79 : vector<1x128x64xf32> to vector<128x64xf32>
    %81 = vector.shape_cast %78 : vector<128x64xf32> to vector<1x128x64xf32>
    tpu.vector_store %arg9[%c1_62, %c0_63, %c0_64], %81 {strides = array<i32>} : memref<2x128x64xf32, #tpu.memory_space<vmem>>, vector<1x128x64xf32>,
    %c1_65 = arith.constant 1 : index
    %c0_66 = arith.constant 0 : index
    %c0_67 = arith.constant 0 : index
    %82 = vector.load %arg7[%c1_65, %c0_66, %c0_67] : memref<2x128x1xf32, #tpu.memory_space<vmem>>, vector<1x128x1xf32>
    %83 = vector.shape_cast %82 : vector<1x128x1xf32> to vector<128x1xf32>
    %84 = vector.shape_cast %57 : vector<128x1xf32> to vector<1x128x1xf32>
    tpu.vector_store %arg7[%c1_65, %c0_66, %c0_67], %84 {strides = array<i32>} : memref<2x128x1xf32, #tpu.memory_space<vmem>>, vector<1x128x1xf32>,
    %c1_i32 = arith.constant 1 : i32
    %85 = arith.cmpi eq, %arg2, %c1_i32 : i32
    %86 = arith.extui %85 : i1 to i32
    %c0_i32_68 = arith.constant 0 : i32
    %87 = arith.cmpi ne, %86, %c0_i32_68 : i32
    scf.if %87 {
      %c0_69 = arith.constant 0 : index
      %c0_70 = arith.constant 0 : index
      %c0_71 = arith.constant 0 : index
      %88 = vector.load %arg8[%c0_69, %c0_70, %c0_71] : memref<2x128x1xf32, #tpu.memory_space<vmem>>, vector<1x128x1xf32>
      %89 = vector.shape_cast %88 : vector<1x128x1xf32> to vector<128x1xf32>
      %90 = tpu.reciprocal %89 {approx = true} : vector<128x1xf32> -> vector<128x1xf32>
      %c0_72 = arith.constant 0 : index
      %c0_73 = arith.constant 0 : index
      %c0_74 = arith.constant 0 : index
      %91 = vector.load %arg9[%c0_72, %c0_73, %c0_74] : memref<2x128x64xf32, #tpu.memory_space<vmem>>, vector<1x128x64xf32>
      %92 = vector.shape_cast %91 : vector<1x128x64xf32> to vector<128x64xf32>
      %93 = vector.broadcast %90 : vector<128x1xf32> to vector<128x64xf32>
      %94 = arith.mulf %92, %93 : vector<128x64xf32>
      %c0_75 = arith.constant 0 : index
      %c0_76 = arith.constant 0 : index
      %c0_77 = arith.constant 0 : index
      %95 = vector.load %arg6[%c0_75, %c0_76, %c0_77] : memref<1x128x128xf32, #tpu.memory_space<vmem>>, vector<1x128x64xf32>
      %96 = vector.shape_cast %95 : vector<1x128x64xf32> to vector<128x64xf32>
      %97 = vector.shape_cast %94 : vector<128x64xf32> to vector<1x128x64xf32>
      tpu.vector_store %arg6[%c0_75, %c0_76, %c0_77], %97 {strides = array<i32>} : memref<1x128x128xf32, #tpu.memory_space<vmem>>, vector<1x128x64xf32>,
      %c1_78 = arith.constant 1 : index
      %c0_79 = arith.constant 0 : index
      %c0_80 = arith.constant 0 : index
      %98 = vector.load %arg8[%c1_78, %c0_79, %c0_80] : memref<2x128x1xf32, #tpu.memory_space<vmem>>, vector<1x128x1xf32>
      %99 = vector.shape_cast %98 : vector<1x128x1xf32> to vector<128x1xf32>
      %100 = tpu.reciprocal %99 {approx = true} : vector<128x1xf32> -> vector<128x1xf32>
      %c1_81 = arith.constant 1 : index
      %c0_82 = arith.constant 0 : index
      %c0_83 = arith.constant 0 : index
      %101 = vector.load %arg9[%c1_81, %c0_82, %c0_83] : memref<2x128x64xf32, #tpu.memory_space<vmem>>, vector<1x128x64xf32>
      %102 = vector.shape_cast %101 : vector<1x128x64xf32> to vector<128x64xf32>
      %103 = vector.broadcast %100 : vector<128x1xf32> to vector<128x64xf32>
      %104 = arith.mulf %102, %103 : vector<128x64xf32>
      %c0_84 = arith.constant 0 : index
      %c0_85 = arith.constant 0 : index
      %c64 = arith.constant 64 : index
      %105 = vector.load %arg6[%c0_84, %c0_85, %c64] : memref<1x128x128xf32, #tpu.memory_space<vmem>>, vector<1x128x64xf32>
      %106 = vector.shape_cast %105 : vector<1x128x64xf32> to vector<128x64xf32>
      %107 = vector.shape_cast %104 : vector<128x64xf32> to vector<1x128x64xf32>
      tpu.vector_store %arg6[%c0_84, %c0_85, %c64], %107 {strides = array<i32>} : memref<1x128x128xf32, #tpu.memory_space<vmem>>, vector<1x128x64xf32>,
    } else {
    }
    return
  }
  func.func @transform_0(%arg0: i32, %arg1: i32, %arg2: i32) -> (i32, i32, i32, i32) {
    %c0_i32 = arith.constant 0 : i32
    %c0_i32_0 = arith.constant 0 : i32
    %c0_i32_1 = arith.constant 0 : i32
    return %arg0, %c0_i32, %arg1, %c0_i32_0 : i32, i32, i32, i32
  }
  func.func @transform_1(%arg0: i32, %arg1: i32, %arg2: i32) -> (i32, i32, i32, i32) {
    %c0_i32 = arith.constant 0 : i32
    %c0_i32_0 = arith.constant 0 : i32
    %c0_i32_1 = arith.constant 0 : i32
    return %arg0, %c0_i32, %arg2, %c0_i32_0 : i32, i32, i32, i32
  }
  func.func @transform_2(%arg0: i32, %arg1: i32, %arg2: i32) -> (i32, i32, i32, i32) {
    %c0_i32 = arith.constant 0 : i32
    %c0_i32_0 = arith.constant 0 : i32
    %c0_i32_1 = arith.constant 0 : i32
    return %arg0, %c0_i32, %arg2, %c0_i32_0 : i32, i32, i32, i32
  }
  func.func @transform_3(%arg0: i32, %arg1: i32, %arg2: i32) -> (i32, i32, i32) {
    %c0_i32 = arith.constant 0 : i32
    %c0_i32_0 = arith.constant 0 : i32
    return %arg0, %arg1, %c0_i32 : i32, i32, i32
  }
}

</mosaic_0001>

<llo_original>
// kernel: tpu_custom_call.1
$region0: #{tpu_custom_call.1}
  #allocation0 [shape = 'u32[]', space=smem, size = 0x4, offset = 0x4, fixed_abs, tag = 'smem constant byte address 0x4 - core index']
  #allocation1 [shape = 'u32[144,128]{1,0:T(1,128)}', space=vmem, size = 0x12000, scoped, tag = 'internal scratch']
  #allocation2 [shape = 'f32[2,128,1]{2,1,0:T(8,128)}', space=vmem, size = 0x20000, scoped, tag = 'scratch operand']
  #allocation3 [shape = 'f32[2,128,1]{2,1,0:T(8,128)}', space=vmem, size = 0x20000, scoped, tag = 'scratch operand']
  #allocation4 [shape = 'f32[2,128,64]{2,1,0:T(8,128)}', space=vmem, size = 0x20000, scoped, tag = 'scratch operand']
  %s0 = inlined_call_operand.vmem [shape: bf16[2,2,256,64], index: 0, kind: input, shape index: {}]
  %s1 = inlined_call_operand.vmem [shape: bf16[2,2,256,64], index: 1, kind: input, shape index: {}]
  %s2 = inlined_call_operand.vmem [shape: bf16[2,2,256,64], index: 2, kind: input, shape index: {}]
  %s3 = inlined_call_operand.hbm [shape: f32[2,256,128], index: 3, kind: output, shape index: {}]
  %s4 = sld [smem:[#allocation0]]
  $region176: #{tpu_custom_call.1} parent=0
    _
  %s6 = ssub.s32 1, %s4
  %s7 = scalar_select 0, %s6, %s4
  $region1: #{tpu_custom_call.1} parent=0
    #allocation5 [shape = 'u8[131072]{0}', space=vmem, size = 0x20000, scoped, tag = 'input window, operand 0']
    #allocation6 [shape = 'u8[131072]{0}', space=vmem, size = 0x20000, scoped, tag = 'input window, operand 1']
    #allocation7 [shape = 'u8[131072]{0}', space=vmem, size = 0x20000, scoped, tag = 'input window, operand 2']
    #allocation8 [shape = 'u8[131072]{0}', space=vmem, size = 0x20000, scoped, tag = 'output window, operand 0']
    #allocation9 [shape = 's32[2]{0}', space=sflag, size = 0x8, scoped, tag = 'scoped memory for tpu_custom_call.1']
    %8 = vsyncpa [#allocation9], 0
    %s9 = scalar_lea.sflag [#allocation9], 1
    %10 = vsyncpa %s9, 0
    loop: start=0, step=1, limit=10
    $region2: #{tpu_custom_call.1} parent=1 // loop_pre_header
      _
    $region3: #{tpu_custom_call.1} parent=1 // loop_header
      %s12 = sphi 0, %s16
      %p13 = scmp.ge.s32.totalorder %s12, 10
      %s19 = sphi 0, %s38
      %s20 = sphi 0, %s34
      %s21 = sphi 0, %s30
      %s22 = sphi 0, %s19
      %s23 = sphi 0, %s20
      %s24 = sphi 0, %s21
      %s25 = sphi 0, %s22
      %s26 = sphi 0, %s23
      %s27 = sphi 0, %s24
      %s43 = sphi 0, %s45
      %s46 = sphi 0, %s43
      %s47 = sphi 0, %s46
      %s63 = sphi 0, %s47
      %s71 = sphi 0, %s73
      %s74 = sphi 0, %s71
      %s75 = sphi 0, %s74
      %s91 = sphi 0, %s75
      %s99 = sphi 0, %s101
      %s102 = sphi 0, %s99
      %s103 = sphi 0, %s102
      %s119 = sphi 0, %s103
      %s127 = sphi 0, %s129
      %s130 = sphi 0, %s127
      %s131 = sphi 0, %s130
      %s147 = sphi 0, %s131
    $region4: #{tpu_custom_call.1} parent=1 // loop_header_branch
      %15 = sbr.rel (%p13) target = $region8
    $region5: #{tpu_custom_call.1} parent=1 // loop_body
      %s17 = ssub.s32 %s12, 1
      %s18 = ssub.s32 %s12, 2
      %s28 = sadd.s32 1, %s21
      %p29 = scmp.ge.s32.totalorder %s28, 2
      %s30 = scalar_select %p29, 0, %s28
      %s31 = sadd.s32 1, %s20
      %s32 = scalar_select %p29, %s31, %s20
      %p33 = scmp.ge.s32.totalorder %s32, 2
      %s34 = scalar_select %p33, 0, %s32
      %s35 = sadd.s32 1, %s19
      %s36 = scalar_select %p33, %s35, %s19
      %p37 = scmp.ge.s32.totalorder %s36, 2
      %s38 = scalar_select %p37, 0, %s36
      %s39 = ssub.s32 %s19, %s38
      %s40 = ssub.s32 %s20, %s34
      %s41 = sor.u32 %s39, %s40
      %p42 = scmp.eq.s32.totalorder %s41, 0
      %s44 = sadd.s32 %s43, 1
      %s45 = scalar_select %p42, %s43, %s44
      %p48 = pneg %p42
      %p49 = scmp.eq.s32.totalorder %s12, 7
      %p50 = por %p48, %p49
      %p51 = scmp.ne.s32.totalorder %s43, %s46
      %p52 = scmp.eq.s32.totalorder %s12, 0
      %p53 = por %p51, %p52
      %p54 = scmp.ne.s32.totalorder %s43, %s46
      %p55 = scmp.eq.s32.totalorder %s17, 7
      %p56 = por %p54, %p55
      %p57 = scmp.ne.s32.totalorder %s46, %s47
      %p58 = scmp.eq.s32.totalorder %s17, 0
      %p59 = por %p57, %p58
      %p60 = scmp.ne.s32.totalorder %s46, %s47
      %p61 = scmp.eq.s32.totalorder %s18, 7
      %p62 = por %p60, %p61
      %p64 = scmp.ne.s32.totalorder %s47, %s63
      %p65 = scmp.eq.s32.totalorder %s18, 0
      %p66 = por %p64, %p65
      %s67 = ssub.s32 %s19, %s38
      %s68 = ssub.s32 %s21, %s30
      %s69 = sor.u32 %s67, %s68
      %p70 = scmp.eq.s32.totalorder %s69, 0
      %s72 = sadd.s32 %s71, 1
      %s73 = scalar_select %p70, %s71, %s72
      %p76 = pneg %p70
      %p77 = scmp.eq.s32.totalorder %s12, 7
      %p78 = por %p76, %p77
      %p79 = scmp.ne.s32.totalorder %s71, %s74
      %p80 = scmp.eq.s32.totalorder %s12, 0
      %p81 = por %p79, %p80
      %p82 = scmp.ne.s32.totalorder %s71, %s74
      %p83 = scmp.eq.s32.totalorder %s17, 7
      %p84 = por %p82, %p83
      %p85 = scmp.ne.s32.totalorder %s74, %s75
      %p86 = scmp.eq.s32.totalorder %s17, 0
      %p87 = por %p85, %p86
      %p88 = scmp.ne.s32.totalorder %s74, %s75
      %p89 = scmp.eq.s32.totalorder %s18, 7
      %p90 = por %p88, %p89
      %p92 = scmp.ne.s32.totalorder %s75, %s91
      %p93 = scmp.eq.s32.totalorder %s18, 0
      %p94 = por %p92, %p93
      %s95 = ssub.s32 %s19, %s38
      %s96 = ssub.s32 %s21, %s30
      %s97 = sor.u32 %s95, %s96
      %p98 = scmp.eq.s32.totalorder %s97, 0
      %s100 = sadd.s32 %s99, 1
      %s101 = scalar_select %p98, %s99, %s100
      %p104 = pneg %p98
      %p105 = scmp.eq.s32.totalorder %s12, 7
      %p106 = por %p104, %p105
      %p107 = scmp.ne.s32.totalorder %s99, %s102
      %p108 = scmp.eq.s32.totalorder %s12, 0
      %p109 = por %p107, %p108
      %p110 = scmp.ne.s32.totalorder %s99, %s102
      %p111 = scmp.eq.s32.totalorder %s17, 7
      %p112 = por %p110, %p111
      %p113 = scmp.ne.s32.totalorder %s102, %s103
      %p114 = scmp.eq.s32.totalorder %s17, 0
      %p115 = por %p113, %p114
      %p116 = scmp.ne.s32.totalorder %s102, %s103
      %p117 = scmp.eq.s32.totalorder %s18, 7
      %p118 = por %p116, %p117
      %p120 = scmp.ne.s32.totalorder %s103, %s119
      %p121 = scmp.eq.s32.totalorder %s18, 0
      %p122 = por %p120, %p121
      %s123 = ssub.s32 %s19, %s38
      %s124 = ssub.s32 %s20, %s34
      %s125 = sor.u32 %s123, %s124
      %p126 = scmp.eq.s32.totalorder %s125, 0
      %s128 = sadd.s32 %s127, 1
      %s129 = scalar_select %p126, %s127, %s128
      %p132 = pneg %p126
      %p133 = scmp.eq.s32.totalorder %s12, 7
      %p134 = por %p132, %p133
      %p135 = scmp.ne.s32.totalorder %s127, %s130
      %p136 = scmp.eq.s32.totalorder %s12, 0
      %p137 = por %p135, %p136
      %p138 = scmp.ne.s32.totalorder %s127, %s130
      %p139 = scmp.eq.s32.totalorder %s17, 7
      %p140 = por %p138, %p139
      %p141 = scmp.ne.s32.totalorder %s130, %s131
      %p142 = scmp.eq.s32.totalorder %s17, 0
      %p143 = por %p141, %p142
      %p144 = scmp.ne.s32.totalorder %s130, %s131
      %p145 = scmp.eq.s32.totalorder %s18, 7
      %p146 = por %p144, %p145
      %p148 = scmp.ne.s32.totalorder %s131, %s147
      %p149 = scmp.eq.s32.totalorder %s18, 0
      %p150 = por %p148, %p149
      %p151 = scmp.le.s32.totalorder 1, %s12
      %p152 = scmp.lt.s32.totalorder %s12, 9
      %p153 = pnand %p151, %p152
      %p154 = pneg %p153
      // Predicated region
      $region9: #{tpu_custom_call.1} parent=5 // pred_check
        _
      $region10: #{tpu_custom_call.1} parent=5 // pred_check_branch
        %156 = sbr.rel (%p153) target = $region12
      $region11: #{tpu_custom_call.1} parent=5 // pred_region
        %s157 = ssub.s32 %s12, 1
      $region12: #{tpu_custom_call.1} parent=5 // pred_fallthru
        _
      %p158 = scmp.lt.s32.totalorder %s12, 8
      // Predicated region
      $region13: #{tpu_custom_call.1} parent=5 // pred_check
        %p159 = pneg %p158
      $region14: #{tpu_custom_call.1} parent=5 // pred_check_branch
        %161 = sbr.rel (%p159) target = $region16
      $region15: #{tpu_custom_call.1} parent=5 // pred_region
        // Predicated region
        $region17: #{tpu_custom_call.1} parent=15 // pred_check
          %p162 = pneg %p53
        $region18: #{tpu_custom_call.1} parent=15 // pred_check_branch
          %164 = sbr.rel (%p162) target = $region20
        $region19: #{tpu_custom_call.1} parent=15 // pred_region
          %s165 = sand.u32 %s43, 1
          %s166 = sand.u32 %s43, 1
          %s167 = smul.addr %s166, 128
          %s168 = scalar_lea.vmem [#allocation5], %s167
          %s169 = smul.u32 16, %s20
          %s170 = smul.addr %s19, 64
          %s171 = sadd.s32 %s169, %s170
          %s172 = smul.addr %s171, 4
          %s173 = scalar_lea.vmem %s0, %s172
          // Predicated region
          $region21: #{tpu_custom_call.1} parent=19 // pred_check
            _
          $region22: #{tpu_custom_call.1} parent=19 // pred_check_branch
            %175 = sbr.rel (0) target = $region24
          $region23: #{tpu_custom_call.1} parent=19 // pred_region
            // Predicated region
            $region25: #{tpu_custom_call.1} parent=23 // pred_check
              _
            $region26: #{tpu_custom_call.1} parent=23 // pred_check_branch
              %177 = sbr.rel target = $region28
            $region27: #{tpu_custom_call.1} parent=23 // pred_region
              // Predicated region
              $region40: #{tpu_custom_call.1} parent=27 // pred_check
                _
              $region41: #{tpu_custom_call.1} parent=27 // pred_check_branch
                %254 = sbr.rel (0) target = $region43
              $region42: #{tpu_custom_call.1} parent=27 // pred_region
                loop: start=0, step=1, limit=1
                $region44: #{tpu_custom_call.1} parent=42 // loop_pre_header
                  _
                $region45: #{tpu_custom_call.1} parent=42 // loop_header
                  %s256 = sphi 0, %s260
                  %p257 = scmp.ge.s32.totalorder %s256, 1
                  %s261 = sphi %s173, %s173
                  %s262 = sphi %s168, %s168
                $region46: #{tpu_custom_call.1} parent=42 // loop_header_branch
                  %259 = sbr.rel (%p257) target = $region50
                $region47: #{tpu_custom_call.1} parent=42 // loop_body
                  _
                $region48: #{tpu_custom_call.1} parent=42 // loop_footer
                  %s260 = sadd.s32 1, %s256
                $region49: #{tpu_custom_call.1} parent=42 // loop_footer_branch
                  %255 = sbr.rel target = $region45
                $region50: #{tpu_custom_call.1} parent=42 // loop_exit
                  _
                loop: start=0, step=1, limit=1
                $region51: #{tpu_custom_call.1} parent=42 // loop_pre_header
                  _
                $region52: #{tpu_custom_call.1} parent=42 // loop_header
                  %s265 = sphi 0, %s269
                  %p266 = scmp.ge.s32.totalorder %s265, 1
                  %s270 = sphi %s173, %s173
                  %s271 = sphi %s168, %s168
                $region53: #{tpu_custom_call.1} parent=42 // loop_header_branch
                  %268 = sbr.rel (%p266) target = $region57
                $region54: #{tpu_custom_call.1} parent=42 // loop_body
                  %v272 = vld [vmem:[%s270] sm:$0xf]
                  %273 = vst [vmem:[%s271] sm:$0xf] %v272
                  %v274 = vld [vmem:[%s270 + $0x4] sm:$0xf]
                  %275 = vst [vmem:[%s271 + $0x4] sm:$0xf] %v274
                  %v276 = vld [vmem:[%s270 + $0x8] sm:$0xf]
                  %277 = vst [vmem:[%s271 + $0x8] sm:$0xf] %v276
                  %v278 = vld [vmem:[%s270 + $0xc] sm:$0xf]
                  %279 = vst [vmem:[%s271 + $0xc] sm:$0xf] %v278
                  %v280 = vld [vmem:[%s270 + $0x10] sm:$0xf]
                  %281 = vst [vmem:[%s271 + $0x10] sm:$0xf] %v280
                  %v282 = vld [vmem:[%s270 + $0x14] sm:$0xf]
                  %283 = vst [vmem:[%s271 + $0x14] sm:$0xf] %v282
                  %v284 = vld [vmem:[%s270 + $0x18] sm:$0xf]
                  %285 = vst [vmem:[%s271 + $0x18] sm:$0xf] %v284
                  %v286 = vld [vmem:[%s270 + $0x1c] sm:$0xf]
                  %287 = vst [vmem:[%s271 + $0x1c] sm:$0xf] %v286
                  %v288 = vld [vmem:[%s270 + $0x20] sm:$0xf]
                  %289 = vst [vmem:[%s271 + $0x20] sm:$0xf] %v288
                  %v290 = vld [vmem:[%s270 + $0x24] sm:$0xf]
                  %291 = vst [vmem:[%s271 + $0x24] sm:$0xf] %v290
                  %v292 = vld [vmem:[%s270 + $0x28] sm:$0xf]
                  %293 = vst [vmem:[%s271 + $0x28] sm:$0xf] %v292
                  %v294 = vld [vmem:[%s270 + $0x2c] sm:$0xf]
                  %295 = vst [vmem:[%s271 + $0x2c] sm:$0xf] %v294
                  %v296 = vld [vmem:[%s270 + $0x30] sm:$0xf]
                  %297 = vst [vmem:[%s271 + $0x30] sm:$0xf] %v296
                  %v298 = vld [vmem:[%s270 + $0x34] sm:$0xf]
                  %299 = vst [vmem:[%s271 + $0x34] sm:$0xf] %v298
                  %v300 = vld [vmem:[%s270 + $0x38] sm:$0xf]
                  %301 = vst [vmem:[%s271 + $0x38] sm:$0xf] %v300
                  %v302 = vld [vmem:[%s270 + $0x3c] sm:$0xf]
                  %303 = vst [vmem:[%s271 + $0x3c] sm:$0xf] %v302
                  %v304 = vld [vmem:[%s270 + $0x80] sm:$0xf]
                  %305 = vst [vmem:[%s271 + $0x40] sm:$0xf] %v304
                  %v306 = vld [vmem:[%s270 + $0x84] sm:$0xf]
                  %307 = vst [vmem:[%s271 + $0x44] sm:$0xf] %v306
                  %v308 = vld [vmem:[%s270 + $0x88] sm:$0xf]
                  %309 = vst [vmem:[%s271 + $0x48] sm:$0xf] %v308
                  %v310 = vld [vmem:[%s270 + $0x8c] sm:$0xf]
                  %311 = vst [vmem:[%s271 + $0x4c] sm:$0xf] %v310
                  %v312 = vld [vmem:[%s270 + $0x90] sm:$0xf]
                  %313 = vst [vmem:[%s271 + $0x50] sm:$0xf] %v312
                  %v314 = vld [vmem:[%s270 + $0x94] sm:$0xf]
                  %315 = vst [vmem:[%s271 + $0x54] sm:$0xf] %v314
                  %v316 = vld [vmem:[%s270 + $0x98] sm:$0xf]
                  %317 = vst [vmem:[%s271 + $0x58] sm:$0xf] %v316
                  %v318 = vld [vmem:[%s270 + $0x9c] sm:$0xf]
                  %319 = vst [vmem:[%s271 + $0x5c] sm:$0xf] %v318
                  %v320 = vld [vmem:[%s270 + $0xa0] sm:$0xf]
                  %321 = vst [vmem:[%s271 + $0x60] sm:$0xf] %v320
                  %v322 = vld [vmem:[%s270 + $0xa4] sm:$0xf]
                  %323 = vst [vmem:[%s271 + $0x64] sm:$0xf] %v322
                  %v324 = vld [vmem:[%s270 + $0xa8] sm:$0xf]
                  %325 = vst [vmem:[%s271 + $0x68] sm:$0xf] %v324
                  %v326 = vld [vmem:[%s270 + $0xac] sm:$0xf]
                  %327 = vst [vmem:[%s271 + $0x6c] sm:$0xf] %v326
                  %v328 = vld [vmem:[%s270 + $0xb0] sm:$0xf]
                  %329 = vst [vmem:[%s271 + $0x70] sm:$0xf] %v328
                  %v330 = vld [vmem:[%s270 + $0xb4] sm:$0xf]
                  %331 = vst [vmem:[%s271 + $0x74] sm:$0xf] %v330
                  %v332 = vld [vmem:[%s270 + $0xb8] sm:$0xf]
                  %333 = vst [vmem:[%s271 + $0x78] sm:$0xf] %v332
                  %v334 = vld [vmem:[%s270 + $0xbc] sm:$0xf]
                  %335 = vst [vmem:[%s271 + $0x7c] sm:$0xf] %v334
                $region55: #{tpu_custom_call.1} parent=42 // loop_footer
                  %s269 = sadd.s32 1, %s265
                $region56: #{tpu_custom_call.1} parent=42 // loop_footer_branch
                  %264 = sbr.rel target = $region52
                $region57: #{tpu_custom_call.1} parent=42 // loop_exit
                  _
              $region43: #{tpu_custom_call.1} parent=27 // pred_fallthru
                _
            $region28: #{tpu_custom_call.1} parent=23 // pred_fallthru
              _
            // Predicated region
            $region29: #{tpu_custom_call.1} parent=23 // pred_check
              _
            $region30: #{tpu_custom_call.1} parent=23 // pred_check_branch
              %179 = sbr.rel (0) target = $region32
            $region31: #{tpu_custom_call.1} parent=23 // pred_region
              loop: start=0, step=1, limit=1
              $region33: #{tpu_custom_call.1} parent=31 // loop_pre_header
                _
              $region34: #{tpu_custom_call.1} parent=31 // loop_header
                %s182 = sphi 0, %s186
                %p183 = scmp.ge.s32.totalorder %s182, 1
                %s187 = sphi %s173, %s173
                %s188 = sphi %s168, %s168
              $region35: #{tpu_custom_call.1} parent=31 // loop_header_branch
                %185 = sbr.rel (%p183) target = $region39
              $region36: #{tpu_custom_call.1} parent=31 // loop_body
                %v189 = vld [vmem:[%s187] sm:$0xf]
                %190 = vst [vmem:[%s188] sm:$0xf] %v189
                %v191 = vld [vmem:[%s187 + $0x4] sm:$0xf]
                %192 = vst [vmem:[%s188 + $0x4] sm:$0xf] %v191
                %v193 = vld [vmem:[%s187 + $0x8] sm:$0xf]
                %194 = vst [vmem:[%s188 + $0x8] sm:$0xf] %v193
                %v195 = vld [vmem:[%s187 + $0xc] sm:$0xf]
                %196 = vst [vmem:[%s188 + $0xc] sm:$0xf] %v195
                %v197 = vld [vmem:[%s187 + $0x10] sm:$0xf]
                %198 = vst [vmem:[%s188 + $0x10] sm:$0xf] %v197
                %v199 = vld [vmem:[%s187 + $0x14] sm:$0xf]
                %200 = vst [vmem:[%s188 + $0x14] sm:$0xf] %v199
                %v201 = vld [vmem:[%s187 + $0x18] sm:$0xf]
                %202 = vst [vmem:[%s188 + $0x18] sm:$0xf] %v201
                %v203 = vld [vmem:[%s187 + $0x1c] sm:$0xf]
                %204 = vst [vmem:[%s188 + $0x1c] sm:$0xf] %v203
                %v205 = vld [vmem:[%s187 + $0x20] sm:$0xf]
                %206 = vst [vmem:[%s188 + $0x20] sm:$0xf] %v205
                %v207 = vld [vmem:[%s187 + $0x24] sm:$0xf]
                %208 = vst [vmem:[%s188 + $0x24] sm:$0xf] %v207
                %v209 = vld [vmem:[%s187 + $0x28] sm:$0xf]
                %210 = vst [vmem:[%s188 + $0x28] sm:$0xf] %v209
                %v211 = vld [vmem:[%s187 + $0x2c] sm:$0xf]
                %212 = vst [vmem:[%s188 + $0x2c] sm:$0xf] %v211
                %v213 = vld [vmem:[%s187 + $0x30] sm:$0xf]
                %214 = vst [vmem:[%s188 + $0x30] sm:$0xf] %v213
                %v215 = vld [vmem:[%s187 + $0x34] sm:$0xf]
                %216 = vst [vmem:[%s188 + $0x34] sm:$0xf] %v215
                %v217 = vld [vmem:[%s187 + $0x38] sm:$0xf]
                %218 = vst [vmem:[%s188 + $0x38] sm:$0xf] %v217
                %v219 = vld [vmem:[%s187 + $0x3c] sm:$0xf]
                %220 = vst [vmem:[%s188 + $0x3c] sm:$0xf] %v219
                %v221 = vld [vmem:[%s187 + $0x80] sm:$0xf]
                %222 = vst [vmem:[%s188 + $0x40] sm:$0xf] %v221
                %v223 = vld [vmem:[%s187 + $0x84] sm:$0xf]
                %224 = vst [vmem:[%s188 + $0x44] sm:$0xf] %v223
                %v225 = vld [vmem:[%s187 + $0x88] sm:$0xf]
                %226 = vst [vmem:[%s188 + $0x48] sm:$0xf] %v225
                %v227 = vld [vmem:[%s187 + $0x8c] sm:$0xf]
                %228 = vst [vmem:[%s188 + $0x4c] sm:$0xf] %v227
                %v229 = vld [vmem:[%s187 + $0x90] sm:$0xf]
                %230 = vst [vmem:[%s188 + $0x50] sm:$0xf] %v229
                %v231 = vld [vmem:[%s187 + $0x94] sm:$0xf]
                %232 = vst [vmem:[%s188 + $0x54] sm:$0xf] %v231
                %v233 = vld [vmem:[%s187 + $0x98] sm:$0xf]
                %234 = vst [vmem:[%s188 + $0x58] sm:$0xf] %v233
                %v235 = vld [vmem:[%s187 + $0x9c] sm:$0xf]
                %236 = vst [vmem:[%s188 + $0x5c] sm:$0xf] %v235
                %v237 = vld [vmem:[%s187 + $0xa0] sm:$0xf]
                %238 = vst [vmem:[%s188 + $0x60] sm:$0xf] %v237
                %v239 = vld [vmem:[%s187 + $0xa4] sm:$0xf]
                %240 = vst [vmem:[%s188 + $0x64] sm:$0xf] %v239
                %v241 = vld [vmem:[%s187 + $0xa8] sm:$0xf]
                %242 = vst [vmem:[%s188 + $0x68] sm:$0xf] %v241
                %v243 = vld [vmem:[%s187 + $0xac] sm:$0xf]
                %244 = vst [vmem:[%s188 + $0x6c] sm:$0xf] %v243
                %v245 = vld [vmem:[%s187 + $0xb0] sm:$0xf]
                %246 = vst [vmem:[%s188 + $0x70] sm:$0xf] %v245
                %v247 = vld [vmem:[%s187 + $0xb4] sm:$0xf]
                %248 = vst [vmem:[%s188 + $0x74] sm:$0xf] %v247
                %v249 = vld [vmem:[%s187 + $0xb8] sm:$0xf]
                %250 = vst [vmem:[%s188 + $0x78] sm:$0xf] %v249
                %v251 = vld [vmem:[%s187 + $0xbc] sm:$0xf]
                %252 = vst [vmem:[%s188 + $0x7c] sm:$0xf] %v251
              $region37: #{tpu_custom_call.1} parent=31 // loop_footer
                %s186 = sadd.s32 1, %s182
              $region38: #{tpu_custom_call.1} parent=31 // loop_footer_branch
                %181 = sbr.rel target = $region34
              $region39: #{tpu_custom_call.1} parent=31 // loop_exit
                _
            $region32: #{tpu_custom_call.1} parent=23 // pred_fallthru
              _
          $region24: #{tpu_custom_call.1} parent=19 // pred_fallthru
            _
          %336 = vnop
        $region20: #{tpu_custom_call.1} parent=15 // pred_fallthru
          _
        // Predicated region
        $region58: #{tpu_custom_call.1} parent=15 // pred_check
          %p337 = pneg %p81
        $region59: #{tpu_custom_call.1} parent=15 // pred_check_branch
          %339 = sbr.rel (%p337) target = $region61
        $region60: #{tpu_custom_call.1} parent=15 // pred_region
          %s340 = sand.u32 %s71, 1
          %s341 = sand.u32 %s71, 1
          %s342 = smul.addr %s341, 128
          %s343 = scalar_lea.vmem [#allocation6], %s342
          %s344 = smul.u32 16, %s21
          %s345 = smul.addr %s19, 64
          %s346 = sadd.s32 %s344, %s345
          %s347 = smul.addr %s346, 4
          %s348 = scalar_lea.vmem %s1, %s347
          // Predicated region
          $region62: #{tpu_custom_call.1} parent=60 // pred_check
            _
          $region63: #{tpu_custom_call.1} parent=60 // pred_check_branch
            %350 = sbr.rel (0) target = $region65
          $region64: #{tpu_custom_call.1} parent=60 // pred_region
            // Predicated region
            $region66: #{tpu_custom_call.1} parent=64 // pred_check
              _
            $region67: #{tpu_custom_call.1} parent=64 // pred_check_branch
              %352 = sbr.rel target = $region69
            $region68: #{tpu_custom_call.1} parent=64 // pred_region
              // Predicated region
              $region81: #{tpu_custom_call.1} parent=68 // pred_check
                _
              $region82: #{tpu_custom_call.1} parent=68 // pred_check_branch
                %429 = sbr.rel (0) target = $region84
              $region83: #{tpu_custom_call.1} parent=68 // pred_region
                loop: start=0, step=1, limit=1
                $region85: #{tpu_custom_call.1} parent=83 // loop_pre_header
                  _
                $region86: #{tpu_custom_call.1} parent=83 // loop_header
                  %s431 = sphi 0, %s435
                  %p432 = scmp.ge.s32.totalorder %s431, 1
                  %s436 = sphi %s348, %s348
                  %s437 = sphi %s343, %s343
                $region87: #{tpu_custom_call.1} parent=83 // loop_header_branch
                  %434 = sbr.rel (%p432) target = $region91
                $region88: #{tpu_custom_call.1} parent=83 // loop_body
                  _
                $region89: #{tpu_custom_call.1} parent=83 // loop_footer
                  %s435 = sadd.s32 1, %s431
                $region90: #{tpu_custom_call.1} parent=83 // loop_footer_branch
                  %430 = sbr.rel target = $region86
                $region91: #{tpu_custom_call.1} parent=83 // loop_exit
                  _
                loop: start=0, step=1, limit=1
                $region92: #{tpu_custom_call.1} parent=83 // loop_pre_header
                  _
                $region93: #{tpu_custom_call.1} parent=83 // loop_header
                  %s440 = sphi 0, %s444
                  %p441 = scmp.ge.s32.totalorder %s440, 1
                  %s445 = sphi %s348, %s348
                  %s446 = sphi %s343, %s343
                $region94: #{tpu_custom_call.1} parent=83 // loop_header_branch
                  %443 = sbr.rel (%p441) target = $region98
                $region95: #{tpu_custom_call.1} parent=83 // loop_body
                  %v447 = vld [vmem:[%s445] sm:$0xf]
                  %448 = vst [vmem:[%s446] sm:$0xf] %v447
                  %v449 = vld [vmem:[%s445 + $0x4] sm:$0xf]
                  %450 = vst [vmem:[%s446 + $0x4] sm:$0xf] %v449
                  %v451 = vld [vmem:[%s445 + $0x8] sm:$0xf]
                  %452 = vst [vmem:[%s446 + $0x8] sm:$0xf] %v451
                  %v453 = vld [vmem:[%s445 + $0xc] sm:$0xf]
                  %454 = vst [vmem:[%s446 + $0xc] sm:$0xf] %v453
                  %v455 = vld [vmem:[%s445 + $0x10] sm:$0xf]
                  %456 = vst [vmem:[%s446 + $0x10] sm:$0xf] %v455
                  %v457 = vld [vmem:[%s445 + $0x14] sm:$0xf]
                  %458 = vst [vmem:[%s446 + $0x14] sm:$0xf] %v457
                  %v459 = vld [vmem:[%s445 + $0x18] sm:$0xf]
                  %460 = vst [vmem:[%s446 + $0x18] sm:$0xf] %v459
                  %v461 = vld [vmem:[%s445 + $0x1c] sm:$0xf]
                  %462 = vst [vmem:[%s446 + $0x1c] sm:$0xf] %v461
                  %v463 = vld [vmem:[%s445 + $0x20] sm:$0xf]
                  %464 = vst [vmem:[%s446 + $0x20] sm:$0xf] %v463
                  %v465 = vld [vmem:[%s445 + $0x24] sm:$0xf]
                  %466 = vst [vmem:[%s446 + $0x24] sm:$0xf] %v465
                  %v467 = vld [vmem:[%s445 + $0x28] sm:$0xf]
                  %468 = vst [vmem:[%s446 + $0x28] sm:$0xf] %v467
                  %v469 = vld [vmem:[%s445 + $0x2c] sm:$0xf]
                  %470 = vst [vmem:[%s446 + $0x2c] sm:$0xf] %v469
                  %v471 = vld [vmem:[%s445 + $0x30] sm:$0xf]
                  %472 = vst [vmem:[%s446 + $0x30] sm:$0xf] %v471
                  %v473 = vld [vmem:[%s445 + $0x34] sm:$0xf]
                  %474 = vst [vmem:[%s446 + $0x34] sm:$0xf] %v473
                  %v475 = vld [vmem:[%s445 + $0x38] sm:$0xf]
                  %476 = vst [vmem:[%s446 + $0x38] sm:$0xf] %v475
                  %v477 = vld [vmem:[%s445 + $0x3c] sm:$0xf]
                  %478 = vst [vmem:[%s446 + $0x3c] sm:$0xf] %v477
                  %v479 = vld [vmem:[%s445 + $0x80] sm:$0xf]
                  %480 = vst [vmem:[%s446 + $0x40] sm:$0xf] %v479
                  %v481 = vld [vmem:[%s445 + $0x84] sm:$0xf]
                  %482 = vst [vmem:[%s446 + $0x44] sm:$0xf] %v481
                  %v483 = vld [vmem:[%s445 + $0x88] sm:$0xf]
                  %484 = vst [vmem:[%s446 + $0x48] sm:$0xf] %v483
                  %v485 = vld [vmem:[%s445 + $0x8c] sm:$0xf]
                  %486 = vst [vmem:[%s446 + $0x4c] sm:$0xf] %v485
                  %v487 = vld [vmem:[%s445 + $0x90] sm:$0xf]
                  %488 = vst [vmem:[%s446 + $0x50] sm:$0xf] %v487
                  %v489 = vld [vmem:[%s445 + $0x94] sm:$0xf]
                  %490 = vst [vmem:[%s446 + $0x54] sm:$0xf] %v489
                  %v491 = vld [vmem:[%s445 + $0x98] sm:$0xf]
                  %492 = vst [vmem:[%s446 + $0x58] sm:$0xf] %v491
                  %v493 = vld [vmem:[%s445 + $0x9c] sm:$0xf]
                  %494 = vst [vmem:[%s446 + $0x5c] sm:$0xf] %v493
                  %v495 = vld [vmem:[%s445 + $0xa0] sm:$0xf]
                  %496 = vst [vmem:[%s446 + $0x60] sm:$0xf] %v495
                  %v497 = vld [vmem:[%s445 + $0xa4] sm:$0xf]
                  %498 = vst [vmem:[%s446 + $0x64] sm:$0xf] %v497
                  %v499 = vld [vmem:[%s445 + $0xa8] sm:$0xf]
                  %500 = vst [vmem:[%s446 + $0x68] sm:$0xf] %v499
                  %v501 = vld [vmem:[%s445 + $0xac] sm:$0xf]
                  %502 = vst [vmem:[%s446 + $0x6c] sm:$0xf] %v501
                  %v503 = vld [vmem:[%s445 + $0xb0] sm:$0xf]
                  %504 = vst [vmem:[%s446 + $0x70] sm:$0xf] %v503
                  %v505 = vld [vmem:[%s445 + $0xb4] sm:$0xf]
                  %506 = vst [vmem:[%s446 + $0x74] sm:$0xf] %v505
                  %v507 = vld [vmem:[%s445 + $0xb8] sm:$0xf]
                  %508 = vst [vmem:[%s446 + $0x78] sm:$0xf] %v507
                  %v509 = vld [vmem:[%s445 + $0xbc] sm:$0xf]
                  %510 = vst [vmem:[%s446 + $0x7c] sm:$0xf] %v509
                $region96: #{tpu_custom_call.1} parent=83 // loop_footer
                  %s444 = sadd.s32 1, %s440
                $region97: #{tpu_custom_call.1} parent=83 // loop_footer_branch
                  %439 = sbr.rel target = $region93
                $region98: #{tpu_custom_call.1} parent=83 // loop_exit
                  _
              $region84: #{tpu_custom_call.1} parent=68 // pred_fallthru
                _
            $region69: #{tpu_custom_call.1} parent=64 // pred_fallthru
              _
            // Predicated region
            $region70: #{tpu_custom_call.1} parent=64 // pred_check
              _
            $region71: #{tpu_custom_call.1} parent=64 // pred_check_branch
              %354 = sbr.rel (0) target = $region73
            $region72: #{tpu_custom_call.1} parent=64 // pred_region
              loop: start=0, step=1, limit=1
              $region74: #{tpu_custom_call.1} parent=72 // loop_pre_header
                _
              $region75: #{tpu_custom_call.1} parent=72 // loop_header
                %s357 = sphi 0, %s361
                %p358 = scmp.ge.s32.totalorder %s357, 1
                %s362 = sphi %s348, %s348
                %s363 = sphi %s343, %s343
              $region76: #{tpu_custom_call.1} parent=72 // loop_header_branch
                %360 = sbr.rel (%p358) target = $region80
              $region77: #{tpu_custom_call.1} parent=72 // loop_body
                %v364 = vld [vmem:[%s362] sm:$0xf]
                %365 = vst [vmem:[%s363] sm:$0xf] %v364
                %v366 = vld [vmem:[%s362 + $0x4] sm:$0xf]
                %367 = vst [vmem:[%s363 + $0x4] sm:$0xf] %v366
                %v368 = vld [vmem:[%s362 + $0x8] sm:$0xf]
                %369 = vst [vmem:[%s363 + $0x8] sm:$0xf] %v368
                %v370 = vld [vmem:[%s362 + $0xc] sm:$0xf]
                %371 = vst [vmem:[%s363 + $0xc] sm:$0xf] %v370
                %v372 = vld [vmem:[%s362 + $0x10] sm:$0xf]
                %373 = vst [vmem:[%s363 + $0x10] sm:$0xf] %v372
                %v374 = vld [vmem:[%s362 + $0x14] sm:$0xf]
                %375 = vst [vmem:[%s363 + $0x14] sm:$0xf] %v374
                %v376 = vld [vmem:[%s362 + $0x18] sm:$0xf]
                %377 = vst [vmem:[%s363 + $0x18] sm:$0xf] %v376
                %v378 = vld [vmem:[%s362 + $0x1c] sm:$0xf]
                %379 = vst [vmem:[%s363 + $0x1c] sm:$0xf] %v378
                %v380 = vld [vmem:[%s362 + $0x20] sm:$0xf]
                %381 = vst [vmem:[%s363 + $0x20] sm:$0xf] %v380
                %v382 = vld [vmem:[%s362 + $0x24] sm:$0xf]
                %383 = vst [vmem:[%s363 + $0x24] sm:$0xf] %v382
                %v384 = vld [vmem:[%s362 + $0x28] sm:$0xf]
                %385 = vst [vmem:[%s363 + $0x28] sm:$0xf] %v384
                %v386 = vld [vmem:[%s362 + $0x2c] sm:$0xf]
                %387 = vst [vmem:[%s363 + $0x2c] sm:$0xf] %v386
                %v388 = vld [vmem:[%s362 + $0x30] sm:$0xf]
                %389 = vst [vmem:[%s363 + $0x30] sm:$0xf] %v388
                %v390 = vld [vmem:[%s362 + $0x34] sm:$0xf]
                %391 = vst [vmem:[%s363 + $0x34] sm:$0xf] %v390
                %v392 = vld [vmem:[%s362 + $0x38] sm:$0xf]
                %393 = vst [vmem:[%s363 + $0x38] sm:$0xf] %v392
                %v394 = vld [vmem:[%s362 + $0x3c] sm:$0xf]
                %395 = vst [vmem:[%s363 + $0x3c] sm:$0xf] %v394
                %v396 = vld [vmem:[%s362 + $0x80] sm:$0xf]
                %397 = vst [vmem:[%s363 + $0x40] sm:$0xf] %v396
                %v398 = vld [vmem:[%s362 + $0x84] sm:$0xf]
                %399 = vst [vmem:[%s363 + $0x44] sm:$0xf] %v398
                %v400 = vld [vmem:[%s362 + $0x88] sm:$0xf]
                %401 = vst [vmem:[%s363 + $0x48] sm:$0xf] %v400
                %v402 = vld [vmem:[%s362 + $0x8c] sm:$0xf]
                %403 = vst [vmem:[%s363 + $0x4c] sm:$0xf] %v402
                %v404 = vld [vmem:[%s362 + $0x90] sm:$0xf]
                %405 = vst [vmem:[%s363 + $0x50] sm:$0xf] %v404
                %v406 = vld [vmem:[%s362 + $0x94] sm:$0xf]
                %407 = vst [vmem:[%s363 + $0x54] sm:$0xf] %v406
                %v408 = vld [vmem:[%s362 + $0x98] sm:$0xf]
                %409 = vst [vmem:[%s363 + $0x58] sm:$0xf] %v408
                %v410 = vld [vmem:[%s362 + $0x9c] sm:$0xf]
                %411 = vst [vmem:[%s363 + $0x5c] sm:$0xf] %v410
                %v412 = vld [vmem:[%s362 + $0xa0] sm:$0xf]
                %413 = vst [vmem:[%s363 + $0x60] sm:$0xf] %v412
                %v414 = vld [vmem:[%s362 + $0xa4] sm:$0xf]
                %415 = vst [vmem:[%s363 + $0x64] sm:$0xf] %v414
                %v416 = vld [vmem:[%s362 + $0xa8] sm:$0xf]
                %417 = vst [vmem:[%s363 + $0x68] sm:$0xf] %v416
                %v418 = vld [vmem:[%s362 + $0xac] sm:$0xf]
                %419 = vst [vmem:[%s363 + $0x6c] sm:$0xf] %v418
                %v420 = vld [vmem:[%s362 + $0xb0] sm:$0xf]
                %421 = vst [vmem:[%s363 + $0x70] sm:$0xf] %v420
                %v422 = vld [vmem:[%s362 + $0xb4] sm:$0xf]
                %423 = vst [vmem:[%s363 + $0x74] sm:$0xf] %v422
                %v424 = vld [vmem:[%s362 + $0xb8] sm:$0xf]
                %425 = vst [vmem:[%s363 + $0x78] sm:$0xf] %v424
                %v426 = vld [vmem:[%s362 + $0xbc] sm:$0xf]
                %427 = vst [vmem:[%s363 + $0x7c] sm:$0xf] %v426
              $region78: #{tpu_custom_call.1} parent=72 // loop_footer
                %s361 = sadd.s32 1, %s357
              $region79: #{tpu_custom_call.1} parent=72 // loop_footer_branch
                %356 = sbr.rel target = $region75
              $region80: #{tpu_custom_call.1} parent=72 // loop_exit
                _
            $region73: #{tpu_custom_call.1} parent=64 // pred_fallthru
              _
          $region65: #{tpu_custom_call.1} parent=60 // pred_fallthru
            _
          %511 = vnop
        $region61: #{tpu_custom_call.1} parent=15 // pred_fallthru
          _
        // Predicated region
        $region99: #{tpu_custom_call.1} parent=15 // pred_check
          %p512 = pneg %p109
        $region100: #{tpu_custom_call.1} parent=15 // pred_check_branch
          %514 = sbr.rel (%p512) target = $region102
        $region101: #{tpu_custom_call.1} parent=15 // pred_region
          %s515 = sand.u32 %s99, 1
          %s516 = sand.u32 %s99, 1
          %s517 = smul.addr %s516, 128
          %s518 = scalar_lea.vmem [#allocation7], %s517
          %s519 = smul.u32 16, %s21
          %s520 = smul.addr %s19, 64
          %s521 = sadd.s32 %s519, %s520
          %s522 = smul.addr %s521, 4
          %s523 = scalar_lea.vmem %s2, %s522
          // Predicated region
          $region103: #{tpu_custom_call.1} parent=101 // pred_check
            _
          $region104: #{tpu_custom_call.1} parent=101 // pred_check_branch
            %525 = sbr.rel (0) target = $region106
          $region105: #{tpu_custom_call.1} parent=101 // pred_region
            // Predicated region
            $region107: #{tpu_custom_call.1} parent=105 // pred_check
              _
            $region108: #{tpu_custom_call.1} parent=105 // pred_check_branch
              %527 = sbr.rel target = $region110
            $region109: #{tpu_custom_call.1} parent=105 // pred_region
              // Predicated region
              $region122: #{tpu_custom_call.1} parent=109 // pred_check
                _
              $region123: #{tpu_custom_call.1} parent=109 // pred_check_branch
                %604 = sbr.rel (0) target = $region125
              $region124: #{tpu_custom_call.1} parent=109 // pred_region
                loop: start=0, step=1, limit=1
                $region126: #{tpu_custom_call.1} parent=124 // loop_pre_header
                  _
                $region127: #{tpu_custom_call.1} parent=124 // loop_header
                  %s606 = sphi 0, %s610
                  %p607 = scmp.ge.s32.totalorder %s606, 1
                  %s611 = sphi %s523, %s523
                  %s612 = sphi %s518, %s518
                $region128: #{tpu_custom_call.1} parent=124 // loop_header_branch
                  %609 = sbr.rel (%p607) target = $region132
                $region129: #{tpu_custom_call.1} parent=124 // loop_body
                  _
                $region130: #{tpu_custom_call.1} parent=124 // loop_footer
                  %s610 = sadd.s32 1, %s606
                $region131: #{tpu_custom_call.1} parent=124 // loop_footer_branch
                  %605 = sbr.rel target = $region127
                $region132: #{tpu_custom_call.1} parent=124 // loop_exit
                  _
                loop: start=0, step=1, limit=1
                $region133: #{tpu_custom_call.1} parent=124 // loop_pre_header
                  _
                $region134: #{tpu_custom_call.1} parent=124 // loop_header
                  %s615 = sphi 0, %s619
                  %p616 = scmp.ge.s32.totalorder %s615, 1
                  %s620 = sphi %s523, %s523
                  %s621 = sphi %s518, %s518
                $region135: #{tpu_custom_call.1} parent=124 // loop_header_branch
                  %618 = sbr.rel (%p616) target = $region139
                $region136: #{tpu_custom_call.1} parent=124 // loop_body
                  %v622 = vld [vmem:[%s620] sm:$0xf]
                  %623 = vst [vmem:[%s621] sm:$0xf] %v622
                  %v624 = vld [vmem:[%s620 + $0x4] sm:$0xf]
                  %625 = vst [vmem:[%s621 + $0x4] sm:$0xf] %v624
                  %v626 = vld [vmem:[%s620 + $0x8] sm:$0xf]
                  %627 = vst [vmem:[%s621 + $0x8] sm:$0xf] %v626
                  %v628 = vld [vmem:[%s620 + $0xc] sm:$0xf]
                  %629 = vst [vmem:[%s621 + $0xc] sm:$0xf] %v628
                  %v630 = vld [vmem:[%s620 + $0x10] sm:$0xf]
                  %631 = vst [vmem:[%s621 + $0x10] sm:$0xf] %v630
                  %v632 = vld [vmem:[%s620 + $0x14] sm:$0xf]
                  %633 = vst [vmem:[%s621 + $0x14] sm:$0xf] %v632
                  %v634 = vld [vmem:[%s620 + $0x18] sm:$0xf]
                  %635 = vst [vmem:[%s621 + $0x18] sm:$0xf] %v634
                  %v636 = vld [vmem:[%s620 + $0x1c] sm:$0xf]
                  %637 = vst [vmem:[%s621 + $0x1c] sm:$0xf] %v636
                  %v638 = vld [vmem:[%s620 + $0x20] sm:$0xf]
                  %639 = vst [vmem:[%s621 + $0x20] sm:$0xf] %v638
                  %v640 = vld [vmem:[%s620 + $0x24] sm:$0xf]
                  %641 = vst [vmem:[%s621 + $0x24] sm:$0xf] %v640
                  %v642 = vld [vmem:[%s620 + $0x28] sm:$0xf]
                  %643 = vst [vmem:[%s621 + $0x28] sm:$0xf] %v642
                  %v644 = vld [vmem:[%s620 + $0x2c] sm:$0xf]
                  %645 = vst [vmem:[%s621 + $0x2c] sm:$0xf] %v644
                  %v646 = vld [vmem:[%s620 + $0x30] sm:$0xf]
                  %647 = vst [vmem:[%s621 + $0x30] sm:$0xf] %v646
                  %v648 = vld [vmem:[%s620 + $0x34] sm:$0xf]
                  %649 = vst [vmem:[%s621 + $0x34] sm:$0xf] %v648
                  %v650 = vld [vmem:[%s620 + $0x38] sm:$0xf]
                  %651 = vst [vmem:[%s621 + $0x38] sm:$0xf] %v650
                  %v652 = vld [vmem:[%s620 + $0x3c] sm:$0xf]
                  %653 = vst [vmem:[%s621 + $0x3c] sm:$0xf] %v652
                  %v654 = vld [vmem:[%s620 + $0x80] sm:$0xf]
                  %655 = vst [vmem:[%s621 + $0x40] sm:$0xf] %v654
                  %v656 = vld [vmem:[%s620 + $0x84] sm:$0xf]
                  %657 = vst [vmem:[%s621 + $0x44] sm:$0xf] %v656
                  %v658 = vld [vmem:[%s620 + $0x88] sm:$0xf]
                  %659 = vst [vmem:[%s621 + $0x48] sm:$0xf] %v658
                  %v660 = vld [vmem:[%s620 + $0x8c] sm:$0xf]
                  %661 = vst [vmem:[%s621 + $0x4c] sm:$0xf] %v660
                  %v662 = vld [vmem:[%s620 + $0x90] sm:$0xf]
                  %663 = vst [vmem:[%s621 + $0x50] sm:$0xf] %v662
                  %v664 = vld [vmem:[%s620 + $0x94] sm:$0xf]
                  %665 = vst [vmem:[%s621 + $0x54] sm:$0xf] %v664
                  %v666 = vld [vmem:[%s620 + $0x98] sm:$0xf]
                  %667 = vst [vmem:[%s621 + $0x58] sm:$0xf] %v666
                  %v668 = vld [vmem:[%s620 + $0x9c] sm:$0xf]
                  %669 = vst [vmem:[%s621 + $0x5c] sm:$0xf] %v668
                  %v670 = vld [vmem:[%s620 + $0xa0] sm:$0xf]
                  %671 = vst [vmem:[%s621 + $0x60] sm:$0xf] %v670
                  %v672 = vld [vmem:[%s620 + $0xa4] sm:$0xf]
                  %673 = vst [vmem:[%s621 + $0x64] sm:$0xf] %v672
                  %v674 = vld [vmem:[%s620 + $0xa8] sm:$0xf]
                  %675 = vst [vmem:[%s621 + $0x68] sm:$0xf] %v674
                  %v676 = vld [vmem:[%s620 + $0xac] sm:$0xf]
                  %677 = vst [vmem:[%s621 + $0x6c] sm:$0xf] %v676
                  %v678 = vld [vmem:[%s620 + $0xb0] sm:$0xf]
                  %679 = vst [vmem:[%s621 + $0x70] sm:$0xf] %v678
                  %v680 = vld [vmem:[%s620 + $0xb4] sm:$0xf]
                  %681 = vst [vmem:[%s621 + $0x74] sm:$0xf] %v680
                  %v682 = vld [vmem:[%s620 + $0xb8] sm:$0xf]
                  %683 = vst [vmem:[%s621 + $0x78] sm:$0xf] %v682
                  %v684 = vld [vmem:[%s620 + $0xbc] sm:$0xf]
                  %685 = vst [vmem:[%s621 + $0x7c] sm:$0xf] %v684
                $region137: #{tpu_custom_call.1} parent=124 // loop_footer
                  %s619 = sadd.s32 1, %s615
                $region138: #{tpu_custom_call.1} parent=124 // loop_footer_branch
                  %614 = sbr.rel target = $region134
                $region139: #{tpu_custom_call.1} parent=124 // loop_exit
                  _
              $region125: #{tpu_custom_call.1} parent=109 // pred_fallthru
                _
            $region110: #{tpu_custom_call.1} parent=105 // pred_fallthru
              _
            // Predicated region
            $region111: #{tpu_custom_call.1} parent=105 // pred_check
              _
            $region112: #{tpu_custom_call.1} parent=105 // pred_check_branch
              %529 = sbr.rel (0) target = $region114
            $region113: #{tpu_custom_call.1} parent=105 // pred_region
              loop: start=0, step=1, limit=1
              $region115: #{tpu_custom_call.1} parent=113 // loop_pre_header
                _
              $region116: #{tpu_custom_call.1} parent=113 // loop_header
                %s532 = sphi 0, %s536
                %p533 = scmp.ge.s32.totalorder %s532, 1
                %s537 = sphi %s523, %s523
                %s538 = sphi %s518, %s518
              $region117: #{tpu_custom_call.1} parent=113 // loop_header_branch
                %535 = sbr.rel (%p533) target = $region121
              $region118: #{tpu_custom_call.1} parent=113 // loop_body
                %v539 = vld [vmem:[%s537] sm:$0xf]
                %540 = vst [vmem:[%s538] sm:$0xf] %v539
                %v541 = vld [vmem:[%s537 + $0x4] sm:$0xf]
                %542 = vst [vmem:[%s538 + $0x4] sm:$0xf] %v541
                %v543 = vld [vmem:[%s537 + $0x8] sm:$0xf]
                %544 = vst [vmem:[%s538 + $0x8] sm:$0xf] %v543
                %v545 = vld [vmem:[%s537 + $0xc] sm:$0xf]
                %546 = vst [vmem:[%s538 + $0xc] sm:$0xf] %v545
                %v547 = vld [vmem:[%s537 + $0x10] sm:$0xf]
                %548 = vst [vmem:[%s538 + $0x10] sm:$0xf] %v547
                %v549 = vld [vmem:[%s537 + $0x14] sm:$0xf]
                %550 = vst [vmem:[%s538 + $0x14] sm:$0xf] %v549
                %v551 = vld [vmem:[%s537 + $0x18] sm:$0xf]
                %552 = vst [vmem:[%s538 + $0x18] sm:$0xf] %v551
                %v553 = vld [vmem:[%s537 + $0x1c] sm:$0xf]
                %554 = vst [vmem:[%s538 + $0x1c] sm:$0xf] %v553
                %v555 = vld [vmem:[%s537 + $0x20] sm:$0xf]
                %556 = vst [vmem:[%s538 + $0x20] sm:$0xf] %v555
                %v557 = vld [vmem:[%s537 + $0x24] sm:$0xf]
                %558 = vst [vmem:[%s538 + $0x24] sm:$0xf] %v557
                %v559 = vld [vmem:[%s537 + $0x28] sm:$0xf]
                %560 = vst [vmem:[%s538 + $0x28] sm:$0xf] %v559
                %v561 = vld [vmem:[%s537 + $0x2c] sm:$0xf]
                %562 = vst [vmem:[%s538 + $0x2c] sm:$0xf] %v561
                %v563 = vld [vmem:[%s537 + $0x30] sm:$0xf]
                %564 = vst [vmem:[%s538 + $0x30] sm:$0xf] %v563
                %v565 = vld [vmem:[%s537 + $0x34] sm:$0xf]
                %566 = vst [vmem:[%s538 + $0x34] sm:$0xf] %v565
                %v567 = vld [vmem:[%s537 + $0x38] sm:$0xf]
                %568 = vst [vmem:[%s538 + $0x38] sm:$0xf] %v567
                %v569 = vld [vmem:[%s537 + $0x3c] sm:$0xf]
                %570 = vst [vmem:[%s538 + $0x3c] sm:$0xf] %v569
                %v571 = vld [vmem:[%s537 + $0x80] sm:$0xf]
                %572 = vst [vmem:[%s538 + $0x40] sm:$0xf] %v571
                %v573 = vld [vmem:[%s537 + $0x84] sm:$0xf]
                %574 = vst [vmem:[%s538 + $0x44] sm:$0xf] %v573
                %v575 = vld [vmem:[%s537 + $0x88] sm:$0xf]
                %576 = vst [vmem:[%s538 + $0x48] sm:$0xf] %v575
                %v577 = vld [vmem:[%s537 + $0x8c] sm:$0xf]
                %578 = vst [vmem:[%s538 + $0x4c] sm:$0xf] %v577
                %v579 = vld [vmem:[%s537 + $0x90] sm:$0xf]
                %580 = vst [vmem:[%s538 + $0x50] sm:$0xf] %v579
                %v581 = vld [vmem:[%s537 + $0x94] sm:$0xf]
                %582 = vst [vmem:[%s538 + $0x54] sm:$0xf] %v581
                %v583 = vld [vmem:[%s537 + $0x98] sm:$0xf]
                %584 = vst [vmem:[%s538 + $0x58] sm:$0xf] %v583
                %v585 = vld [vmem:[%s537 + $0x9c] sm:$0xf]
                %586 = vst [vmem:[%s538 + $0x5c] sm:$0xf] %v585
                %v587 = vld [vmem:[%s537 + $0xa0] sm:$0xf]
                %588 = vst [vmem:[%s538 + $0x60] sm:$0xf] %v587
                %v589 = vld [vmem:[%s537 + $0xa4] sm:$0xf]
                %590 = vst [vmem:[%s538 + $0x64] sm:$0xf] %v589
                %v591 = vld [vmem:[%s537 + $0xa8] sm:$0xf]
                %592 = vst [vmem:[%s538 + $0x68] sm:$0xf] %v591
                %v593 = vld [vmem:[%s537 + $0xac] sm:$0xf]
                %594 = vst [vmem:[%s538 + $0x6c] sm:$0xf] %v593
                %v595 = vld [vmem:[%s537 + $0xb0] sm:$0xf]
                %596 = vst [vmem:[%s538 + $0x70] sm:$0xf] %v595
                %v597 = vld [vmem:[%s537 + $0xb4] sm:$0xf]
                %598 = vst [vmem:[%s538 + $0x74] sm:$0xf] %v597
                %v599 = vld [vmem:[%s537 + $0xb8] sm:$0xf]
                %600 = vst [vmem:[%s538 + $0x78] sm:$0xf] %v599
                %v601 = vld [vmem:[%s537 + $0xbc] sm:$0xf]
                %602 = vst [vmem:[%s538 + $0x7c] sm:$0xf] %v601
              $region119: #{tpu_custom_call.1} parent=113 // loop_footer
                %s536 = sadd.s32 1, %s532
              $region120: #{tpu_custom_call.1} parent=113 // loop_footer_branch
                %531 = sbr.rel target = $region116
              $region121: #{tpu_custom_call.1} parent=113 // loop_exit
                _
            $region114: #{tpu_custom_call.1} parent=105 // pred_fallthru
              _
          $region106: #{tpu_custom_call.1} parent=101 // pred_fallthru
            _
          %686 = vnop
        $region102: #{tpu_custom_call.1} parent=15 // pred_fallthru
          _
      $region16: #{tpu_custom_call.1} parent=5 // pred_fallthru
        _
      %p687 = scmp.le.s32.totalorder 1, %s12
      %p688 = scmp.lt.s32.totalorder %s12, 9
      %p689 = pnand %p687, %p688
      %p690 = pneg %p689
      // Predicated region
      $region140: #{tpu_custom_call.1} parent=5 // pred_check
        _
      $region141: #{tpu_custom_call.1} parent=5 // pred_check_branch
        %692 = sbr.rel (%p689) target = $region143
      $region142: #{tpu_custom_call.1} parent=5 // pred_region
        %s693 = ssub.s32 %s12, 1
        %s694 = sand.u32 %s46, 1
        %s695 = sand.u32 %s46, 1
        %s696 = smul.addr %s695, 128
        %s697 = scalar_lea.vmem [#allocation5], %s696
        // Predicated region
        $region144: #{tpu_custom_call.1} parent=142 // pred_check
          %p698 = pneg %p59
        $region145: #{tpu_custom_call.1} parent=142 // pred_check_branch
          %700 = sbr.rel (%p698) target = $region147
        $region146: #{tpu_custom_call.1} parent=142 // pred_region
          _
        $region147: #{tpu_custom_call.1} parent=142 // pred_fallthru
          _
        %s701 = sand.u32 %s74, 1
        %s702 = sand.u32 %s74, 1
        %s703 = smul.addr %s702, 128
        %s704 = scalar_lea.vmem [#allocation6], %s703
        // Predicated region
        $region148: #{tpu_custom_call.1} parent=142 // pred_check
          %p705 = pneg %p87
        $region149: #{tpu_custom_call.1} parent=142 // pred_check_branch
          %707 = sbr.rel (%p705) target = $region151
        $region150: #{tpu_custom_call.1} parent=142 // pred_region
          _
        $region151: #{tpu_custom_call.1} parent=142 // pred_fallthru
          _
        %s708 = sand.u32 %s102, 1
        %s709 = sand.u32 %s102, 1
        %s710 = smul.addr %s709, 128
        %s711 = scalar_lea.vmem [#allocation7], %s710
        // Predicated region
        $region152: #{tpu_custom_call.1} parent=142 // pred_check
          %p712 = pneg %p115
        $region153: #{tpu_custom_call.1} parent=142 // pred_check_branch
          %714 = sbr.rel (%p712) target = $region155
        $region154: #{tpu_custom_call.1} parent=142 // pred_region
          _
        $region155: #{tpu_custom_call.1} parent=142 // pred_fallthru
          _
        %s715 = sand.u32 %s46, 1
        %s716 = sand.u32 %s46, 1
        %s717 = smul.addr %s716, 128
        %s718 = scalar_lea.vmem [#allocation5], %s717
        %p719 = pneg %p59
        %p720 = pneg %p56
        %s721 = sand.u32 %s74, 1
        %s722 = sand.u32 %s74, 1
        %s723 = smul.addr %s722, 128
        %s724 = scalar_lea.vmem [#allocation6], %s723
        %p725 = pneg %p87
        %p726 = pneg %p84
        %s727 = sand.u32 %s102, 1
        %s728 = sand.u32 %s102, 1
        %s729 = smul.addr %s728, 128
        %s730 = scalar_lea.vmem [#allocation7], %s729
        %p731 = pneg %p115
        %p732 = pneg %p112
        %p733 = pneg %p143
        %p734 = pneg %p140
        %s735 = sand.u32 %s130, 1
        %s736 = scalar_lea.sflag [#allocation9], %s735
        %s737 = sand.u32 %s130, 1
        %s738 = smul.addr %s737, 128
        %s739 = scalar_lea.vmem [#allocation8], %s738
        %s740 = smul.u32 16, %s23
        %s741 = smul.u32 16, %s24
        %s742 = smul.u32 16, %s24
        %s743 = smul.u32 16, %s23
        %p745 = scmp.eq.s32.totalorder %s24, 0
        // Predicated region
        $region156: #{tpu_custom_call.1} parent=142 // pred_check
          %p746 = pneg %p745
        $region157: #{tpu_custom_call.1} parent=142 // pred_check_branch
          %748 = sbr.rel (%p746) target = $region159
        $region158: #{tpu_custom_call.1} parent=142 // pred_region
          %vm749 = vcmask 7168
          %750 = vst.msk [vmem:[#allocation2] sm:$0xff] %vm749, -inf
          %751 = vst.msk [vmem:[#allocation2 + $0x8] sm:$0xff] %vm749, -inf
          %752 = vst.msk [vmem:[#allocation2 + $0x10] sm:$0xff] %vm749, -inf
          %753 = vst.msk [vmem:[#allocation2 + $0x18] sm:$0xff] %vm749, -inf
          %754 = vst.msk [vmem:[#allocation2 + $0x20] sm:$0xff] %vm749, -inf
          %755 = vst.msk [vmem:[#allocation2 + $0x28] sm:$0xff] %vm749, -inf
          %756 = vst.msk [vmem:[#allocation2 + $0x30] sm:$0xff] %vm749, -inf
          %757 = vst.msk [vmem:[#allocation2 + $0x38] sm:$0xff] %vm749, -inf
          %758 = vst.msk [vmem:[#allocation2 + $0x40] sm:$0xff] %vm749, -inf
          %759 = vst.msk [vmem:[#allocation2 + $0x48] sm:$0xff] %vm749, -inf
          %760 = vst.msk [vmem:[#allocation2 + $0x50] sm:$0xff] %vm749, -inf
          %761 = vst.msk [vmem:[#allocation2 + $0x58] sm:$0xff] %vm749, -inf
          %762 = vst.msk [vmem:[#allocation2 + $0x60] sm:$0xff] %vm749, -inf
          %763 = vst.msk [vmem:[#allocation2 + $0x68] sm:$0xff] %vm749, -inf
          %764 = vst.msk [vmem:[#allocation2 + $0x70] sm:$0xff] %vm749, -inf
          %765 = vst.msk [vmem:[#allocation2 + $0x78] sm:$0xff] %vm749, -inf
          %766 = vst.msk [vmem:[#allocation2 + $0x80] sm:$0xff] %vm749, -inf
          %767 = vst.msk [vmem:[#allocation2 + $0x88] sm:$0xff] %vm749, -inf
          %768 = vst.msk [vmem:[#allocation2 + $0x90] sm:$0xff] %vm749, -inf
          %769 = vst.msk [vmem:[#allocation2 + $0x98] sm:$0xff] %vm749, -inf
          %770 = vst.msk [vmem:[#allocation2 + $0xa0] sm:$0xff] %vm749, -inf
          %771 = vst.msk [vmem:[#allocation2 + $0xa8] sm:$0xff] %vm749, -inf
          %772 = vst.msk [vmem:[#allocation2 + $0xb0] sm:$0xff] %vm749, -inf
          %773 = vst.msk [vmem:[#allocation2 + $0xb8] sm:$0xff] %vm749, -inf
          %774 = vst.msk [vmem:[#allocation2 + $0xc0] sm:$0xff] %vm749, -inf
          %775 = vst.msk [vmem:[#allocation2 + $0xc8] sm:$0xff] %vm749, -inf
          %776 = vst.msk [vmem:[#allocation2 + $0xd0] sm:$0xff] %vm749, -inf
          %777 = vst.msk [vmem:[#allocation2 + $0xd8] sm:$0xff] %vm749, -inf
          %778 = vst.msk [vmem:[#allocation2 + $0xe0] sm:$0xff] %vm749, -inf
          %779 = vst.msk [vmem:[#allocation2 + $0xe8] sm:$0xff] %vm749, -inf
          %780 = vst.msk [vmem:[#allocation2 + $0xf0] sm:$0xff] %vm749, -inf
          %781 = vst.msk [vmem:[#allocation2 + $0xf8] sm:$0xff] %vm749, -inf
          %782 = vst.msk [vmem:[#allocation3] sm:$0xff] %vm749, 0.0
          %783 = vst.msk [vmem:[#allocation3 + $0x8] sm:$0xff] %vm749, 0.0
          %784 = vst.msk [vmem:[#allocation3 + $0x10] sm:$0xff] %vm749, 0.0
          %785 = vst.msk [vmem:[#allocation3 + $0x18] sm:$0xff] %vm749, 0.0
          %786 = vst.msk [vmem:[#allocation3 + $0x20] sm:$0xff] %vm749, 0.0
          %787 = vst.msk [vmem:[#allocation3 + $0x28] sm:$0xff] %vm749, 0.0
          %788 = vst.msk [vmem:[#allocation3 + $0x30] sm:$0xff] %vm749, 0.0
          %789 = vst.msk [vmem:[#allocation3 + $0x38] sm:$0xff] %vm749, 0.0
          %790 = vst.msk [vmem:[#allocation3 + $0x40] sm:$0xff] %vm749, 0.0
          %791 = vst.msk [vmem:[#allocation3 + $0x48] sm:$0xff] %vm749, 0.0
          %792 = vst.msk [vmem:[#allocation3 + $0x50] sm:$0xff] %vm749, 0.0
          %793 = vst.msk [vmem:[#allocation3 + $0x58] sm:$0xff] %vm749, 0.0
          %794 = vst.msk [vmem:[#allocation3 + $0x60] sm:$0xff] %vm749, 0.0
          %795 = vst.msk [vmem:[#allocation3 + $0x68] sm:$0xff] %vm749, 0.0
          %796 = vst.msk [vmem:[#allocation3 + $0x70] sm:$0xff] %vm749, 0.0
          %797 = vst.msk [vmem:[#allocation3 + $0x78] sm:$0xff] %vm749, 0.0
          %798 = vst.msk [vmem:[#allocation3 + $0x80] sm:$0xff] %vm749, 0.0
          %799 = vst.msk [vmem:[#allocation3 + $0x88] sm:$0xff] %vm749, 0.0
          %800 = vst.msk [vmem:[#allocation3 + $0x90] sm:$0xff] %vm749, 0.0
          %801 = vst.msk [vmem:[#allocation3 + $0x98] sm:$0xff] %vm749, 0.0
          %802 = vst.msk [vmem:[#allocation3 + $0xa0] sm:$0xff] %vm749, 0.0
          %803 = vst.msk [vmem:[#allocation3 + $0xa8] sm:$0xff] %vm749, 0.0
          %804 = vst.msk [vmem:[#allocation3 + $0xb0] sm:$0xff] %vm749, 0.0
          %805 = vst.msk [vmem:[#allocation3 + $0xb8] sm:$0xff] %vm749, 0.0
          %806 = vst.msk [vmem:[#allocation3 + $0xc0] sm:$0xff] %vm749, 0.0
          %807 = vst.msk [vmem:[#allocation3 + $0xc8] sm:$0xff] %vm749, 0.0
          %808 = vst.msk [vmem:[#allocation3 + $0xd0] sm:$0xff] %vm749, 0.0
          %809 = vst.msk [vmem:[#allocation3 + $0xd8] sm:$0xff] %vm749, 0.0
          %810 = vst.msk [vmem:[#allocation3 + $0xe0] sm:$0xff] %vm749, 0.0
          %811 = vst.msk [vmem:[#allocation3 + $0xe8] sm:$0xff] %vm749, 0.0
          %812 = vst.msk [vmem:[#allocation3 + $0xf0] sm:$0xff] %vm749, 0.0
          %813 = vst.msk [vmem:[#allocation3 + $0xf8] sm:$0xff] %vm749, 0.0
          %vm814 = vcmask 523264
          %815 = vst.msk [vmem:[#allocation4] sm:$0xff] %vm814, 0.0
          %816 = vst.msk [vmem:[#allocation4 + $0x8] sm:$0xff] %vm814, 0.0
          %817 = vst.msk [vmem:[#allocation4 + $0x10] sm:$0xff] %vm814, 0.0
          %818 = vst.msk [vmem:[#allocation4 + $0x18] sm:$0xff] %vm814, 0.0
          %819 = vst.msk [vmem:[#allocation4 + $0x20] sm:$0xff] %vm814, 0.0
          %820 = vst.msk [vmem:[#allocation4 + $0x28] sm:$0xff] %vm814, 0.0
          %821 = vst.msk [vmem:[#allocation4 + $0x30] sm:$0xff] %vm814, 0.0
          %822 = vst.msk [vmem:[#allocation4 + $0x38] sm:$0xff] %vm814, 0.0
          %823 = vst.msk [vmem:[#allocation4 + $0x40] sm:$0xff] %vm814, 0.0
          %824 = vst.msk [vmem:[#allocation4 + $0x48] sm:$0xff] %vm814, 0.0
          %825 = vst.msk [vmem:[#allocation4 + $0x50] sm:$0xff] %vm814, 0.0
          %826 = vst.msk [vmem:[#allocation4 + $0x58] sm:$0xff] %vm814, 0.0
          %827 = vst.msk [vmem:[#allocation4 + $0x60] sm:$0xff] %vm814, 0.0
          %828 = vst.msk [vmem:[#allocation4 + $0x68] sm:$0xff] %vm814, 0.0
          %829 = vst.msk [vmem:[#allocation4 + $0x70] sm:$0xff] %vm814, 0.0
          %830 = vst.msk [vmem:[#allocation4 + $0x78] sm:$0xff] %vm814, 0.0
          %831 = vst.msk [vmem:[#allocation4 + $0x80] sm:$0xff] %vm814, 0.0
          %832 = vst.msk [vmem:[#allocation4 + $0x88] sm:$0xff] %vm814, 0.0
          %833 = vst.msk [vmem:[#allocation4 + $0x90] sm:$0xff] %vm814, 0.0
          %834 = vst.msk [vmem:[#allocation4 + $0x98] sm:$0xff] %vm814, 0.0
          %835 = vst.msk [vmem:[#allocation4 + $0xa0] sm:$0xff] %vm814, 0.0
          %836 = vst.msk [vmem:[#allocation4 + $0xa8] sm:$0xff] %vm814, 0.0
          %837 = vst.msk [vmem:[#allocation4 + $0xb0] sm:$0xff] %vm814, 0.0
          %838 = vst.msk [vmem:[#allocation4 + $0xb8] sm:$0xff] %vm814, 0.0
          %839 = vst.msk [vmem:[#allocation4 + $0xc0] sm:$0xff] %vm814, 0.0
          %840 = vst.msk [vmem:[#allocation4 + $0xc8] sm:$0xff] %vm814, 0.0
          %841 = vst.msk [vmem:[#allocation4 + $0xd0] sm:$0xff] %vm814, 0.0
          %842 = vst.msk [vmem:[#allocation4 + $0xd8] sm:$0xff] %vm814, 0.0
          %843 = vst.msk [vmem:[#allocation4 + $0xe0] sm:$0xff] %vm814, 0.0
          %844 = vst.msk [vmem:[#allocation4 + $0xe8] sm:$0xff] %vm814, 0.0
          %845 = vst.msk [vmem:[#allocation4 + $0xf0] sm:$0xff] %vm814, 0.0
          %846 = vst.msk [vmem:[#allocation4 + $0xf8] sm:$0xff] %vm814, 0.0
        $region159: #{tpu_custom_call.1} parent=142 // pred_fallthru
          _
        %v847 = vld [vmem:[%s697] sm:$0xf]
        %v848 = vld [vmem:[%s697 + $0x4] sm:$0xf]
        %v849 = vld [vmem:[%s697 + $0x8] sm:$0xf]
        %v850 = vld [vmem:[%s697 + $0xc] sm:$0xf]
        %v851 = vld [vmem:[%s697 + $0x10] sm:$0xf]
        %v852 = vld [vmem:[%s697 + $0x14] sm:$0xf]
        %v853 = vld [vmem:[%s697 + $0x18] sm:$0xf]
        %v854 = vld [vmem:[%s697 + $0x1c] sm:$0xf]
        %v855 = vld [vmem:[%s697 + $0x20] sm:$0xf]
        %v856 = vld [vmem:[%s697 + $0x24] sm:$0xf]
        %v857 = vld [vmem:[%s697 + $0x28] sm:$0xf]
        %v858 = vld [vmem:[%s697 + $0x2c] sm:$0xf]
        %v859 = vld [vmem:[%s697 + $0x30] sm:$0xf]
        %v860 = vld [vmem:[%s697 + $0x34] sm:$0xf]
        %v861 = vld [vmem:[%s697 + $0x38] sm:$0xf]
        %v862 = vld [vmem:[%s697 + $0x3c] sm:$0xf]
        %v863 = vld [vmem:[%s704] sm:$0xf]
        %v864 = vld [vmem:[%s704 + $0x4] sm:$0xf]
        %v865 = vld [vmem:[%s704 + $0x8] sm:$0xf]
        %v866 = vld [vmem:[%s704 + $0xc] sm:$0xf]
        %v867 = vld [vmem:[%s704 + $0x10] sm:$0xf]
        %v868 = vld [vmem:[%s704 + $0x14] sm:$0xf]
        %v869 = vld [vmem:[%s704 + $0x18] sm:$0xf]
        %v870 = vld [vmem:[%s704 + $0x1c] sm:$0xf]
        %v871 = vld [vmem:[%s704 + $0x20] sm:$0xf]
        %v872 = vld [vmem:[%s704 + $0x24] sm:$0xf]
        %v873 = vld [vmem:[%s704 + $0x28] sm:$0xf]
        %v874 = vld [vmem:[%s704 + $0x2c] sm:$0xf]
        %v875 = vld [vmem:[%s704 + $0x30] sm:$0xf]
        %v876 = vld [vmem:[%s704 + $0x34] sm:$0xf]
        %v877 = vld [vmem:[%s704 + $0x38] sm:$0xf]
        %v878 = vld [vmem:[%s704 + $0x3c] sm:$0xf]
        %v879 = vld [vmem:[%s711] sm:$0xf]
        %v880 = vld [vmem:[%s711 + $0x4] sm:$0xf]
        %v881 = vld [vmem:[%s711 + $0x8] sm:$0xf]
        %v882 = vld [vmem:[%s711 + $0xc] sm:$0xf]
        %v883 = vld [vmem:[%s711 + $0x10] sm:$0xf]
        %v884 = vld [vmem:[%s711 + $0x14] sm:$0xf]
        %v885 = vld [vmem:[%s711 + $0x18] sm:$0xf]
        %v886 = vld [vmem:[%s711 + $0x1c] sm:$0xf]
        %v887 = vld [vmem:[%s711 + $0x20] sm:$0xf]
        %v888 = vld [vmem:[%s711 + $0x24] sm:$0xf]
        %v889 = vld [vmem:[%s711 + $0x28] sm:$0xf]
        %v890 = vld [vmem:[%s711 + $0x2c] sm:$0xf]
        %v891 = vld [vmem:[%s711 + $0x30] sm:$0xf]
        %v892 = vld [vmem:[%s711 + $0x34] sm:$0xf]
        %v893 = vld [vmem:[%s711 + $0x38] sm:$0xf]
        %v894 = vld [vmem:[%s711 + $0x3c] sm:$0xf]
        %v911 = vunpack.c.l.b16 %v847
        %v912 = vunpack.c.l.b16 %v848
        %v913 = vunpack.c.l.b16 %v849
        %v914 = vunpack.c.l.b16 %v850
        %v915 = vunpack.c.l.b16 %v851
        %v916 = vunpack.c.l.b16 %v852
        %v917 = vunpack.c.l.b16 %v853
        %v918 = vunpack.c.l.b16 %v854
        %v919 = vunpack.c.l.b16 %v855
        %v920 = vunpack.c.l.b16 %v856
        %v921 = vunpack.c.l.b16 %v857
        %v922 = vunpack.c.l.b16 %v858
        %v923 = vunpack.c.l.b16 %v859
        %v924 = vunpack.c.l.b16 %v860
        %v925 = vunpack.c.l.b16 %v861
        %v926 = vunpack.c.l.b16 %v862
        %v927 = vpack.c.b16 %v912, %v911
        %v928 = vpack.c.b16 %v914, %v913
        %v929 = vpack.c.b16 %v916, %v915
        %v930 = vpack.c.b16 %v918, %v917
        %v931 = vpack.c.b16 %v920, %v919
        %v932 = vpack.c.b16 %v922, %v921
        %v933 = vpack.c.b16 %v924, %v923
        %v934 = vpack.c.b16 %v926, %v925
        %v951 = vunpack.c.l.b16 %v863
        %v952 = vunpack.c.l.b16 %v864
        %v953 = vunpack.c.l.b16 %v865
        %v954 = vunpack.c.l.b16 %v866
        %v955 = vunpack.c.l.b16 %v867
        %v956 = vunpack.c.l.b16 %v868
        %v957 = vunpack.c.l.b16 %v869
        %v958 = vunpack.c.l.b16 %v870
        %v959 = vunpack.c.l.b16 %v871
        %v960 = vunpack.c.l.b16 %v872
        %v961 = vunpack.c.l.b16 %v873
        %v962 = vunpack.c.l.b16 %v874
        %v963 = vunpack.c.l.b16 %v875
        %v964 = vunpack.c.l.b16 %v876
        %v965 = vunpack.c.l.b16 %v877
        %v966 = vunpack.c.l.b16 %v878
        %v967 = vpack.c.b16 %v952, %v951
        %v968 = vpack.c.b16 %v954, %v953
        %v969 = vpack.c.b16 %v956, %v955
        %v970 = vpack.c.b16 %v958, %v957
        %v971 = vpack.c.b16 %v960, %v959
        %v972 = vpack.c.b16 %v962, %v961
        %v973 = vpack.c.b16 %v964, %v963
        %v974 = vpack.c.b16 %v966, %v965
        %vm975 = vcmask 523264
        %v977 = vsel %vm975, %v927, 0
        %v980 = vsel %vm975, %v928, 0
        %v983 = vsel %vm975, %v929, 0
        %v986 = vsel %vm975, %v930, 0
        %v989 = vsel %vm975, %v931, 0
        %v992 = vsel %vm975, %v932, 0
        %v995 = vsel %vm975, %v933, 0
        %v998 = vsel %vm975, %v934, 0
        %v1001 = vsel %vm975, %v967, 0
        %v1004 = vsel %vm975, %v968, 0
        %v1007 = vsel %vm975, %v969, 0
        %v1010 = vsel %vm975, %v970, 0
        %v1013 = vsel %vm975, %v971, 0
        %v1016 = vsel %vm975, %v972, 0
        %v1019 = vsel %vm975, %v973, 0
        %v1022 = vsel %vm975, %v974, 0
        %1024 = vmatprep.subr.bf16.mxu0 0
        %1025 = vmatpush1.bf16.xpose.msra.mxu0 %v1001
        %1026 = vmatprep.subr.bf16.mxu0 0
        %1027 = vmatpush1.bf16.xpose.msra.mxu0 %v1004
        %1028 = vmatprep.subr.bf16.mxu0 0
        %1029 = vmatpush1.bf16.xpose.msra.mxu0 %v1007
        %1030 = vmatprep.subr.bf16.mxu0 0
        %1031 = vmatpush1.bf16.xpose.msra.mxu0 %v1010
        %1032 = vmatprep.subr.bf16.mxu0 0
        %1033 = vmatpush1.bf16.xpose.msra.mxu0 %v1013
        %1034 = vmatprep.subr.bf16.mxu0 0
        %1035 = vmatpush1.bf16.xpose.msra.mxu0 %v1016
        %1036 = vmatprep.subr.bf16.mxu0 0
        %1037 = vmatpush1.bf16.xpose.msra.mxu0 %v1019
        %1038 = vmatprep.subr.bf16.mxu0 0
        %1039 = vmatpush1.bf16.xpose.msra.mxu0 %v1022
        %1040 = vmatprep.subr.bf16.mxu0 0
        %1041 = vmatpush1.bf16.xpose.msra.mxu0 0
        %1042 = vmatprep.subr.bf16.mxu0 0
        %1043 = vmatpush1.bf16.xpose.msra.mxu0 0
        %1044 = vmatprep.subr.bf16.mxu0 0
        %1045 = vmatpush1.bf16.xpose.msra.mxu0 0
        %1046 = vmatprep.subr.bf16.mxu0 0
        %1047 = vmatpush1.bf16.xpose.msra.mxu0 0
        %1048 = vmatprep.subr.bf16.mxu0 0
        %1049 = vmatpush1.bf16.xpose.msra.mxu0 0
        %1050 = vmatprep.subr.bf16.mxu0 0
        %1051 = vmatpush1.bf16.xpose.msra.mxu0 0
        %1052 = vmatprep.subr.bf16.mxu0 0
        %1053 = vmatpush1.bf16.xpose.msra.mxu0 0
        %1054 = vmatprep.subr.bf16.mxu0 0
        %1055 = vmatpush1.bf16.xpose.msra.mxu0 0
        %1056 = vmatprep.mubr.bf16.mxu0 0
        %1057 = vmatmul.mubr.bf16.gmra.mrb[0].mxu0 %v977
        %v1058 = vpop.f32.mrb[0].mxu0
        %v1059 = vadd.f32 0.0, %v1058
        %v1060 = vpop.f32.mrb[0].mxu0
        %v1061 = vpop.f32.mrb[0].mxu0
        %v1062 = vadd.f32 0.0, %v1061
        %v1063 = vpop.f32.mrb[0].mxu0
        %1064 = vmatprep.mubr.bf16.mxu0 0
        %1065 = vmatmul.mubr.bf16.gmra.mrb[0].mxu0 %v980
        %v1066 = vpop.f32.mrb[0].mxu0
        %v1067 = vadd.f32 0.0, %v1066
        %v1068 = vpop.f32.mrb[0].mxu0
        %v1069 = vpop.f32.mrb[0].mxu0
        %v1070 = vadd.f32 0.0, %v1069
        %v1071 = vpop.f32.mrb[0].mxu0
        %1072 = vmatprep.mubr.bf16.mxu0 0
        %1073 = vmatmul.mubr.bf16.gmra.mrb[0].mxu0 %v983
        %v1074 = vpop.f32.mrb[0].mxu0
        %v1075 = vadd.f32 0.0, %v1074
        %v1076 = vpop.f32.mrb[0].mxu0
        %v1077 = vpop.f32.mrb[0].mxu0
        %v1078 = vadd.f32 0.0, %v1077
        %v1079 = vpop.f32.mrb[0].mxu0
        %1080 = vmatprep.mubr.bf16.mxu0 0
        %1081 = vmatmul.mubr.bf16.gmra.mrb[0].mxu0 %v986
        %v1082 = vpop.f32.mrb[0].mxu0
        %v1083 = vadd.f32 0.0, %v1082
        %v1084 = vpop.f32.mrb[0].mxu0
        %v1085 = vpop.f32.mrb[0].mxu0
        %v1086 = vadd.f32 0.0, %v1085
        %v1087 = vpop.f32.mrb[0].mxu0
        %1088 = vmatprep.mubr.bf16.mxu0 0
        %1089 = vmatmul.mubr.bf16.gmra.mrb[0].mxu0 %v989
        %v1090 = vpop.f32.mrb[0].mxu0
        %v1091 = vadd.f32 0.0, %v1090
        %v1092 = vpop.f32.mrb[0].mxu0
        %v1093 = vpop.f32.mrb[0].mxu0
        %v1094 = vadd.f32 0.0, %v1093
        %v1095 = vpop.f32.mrb[0].mxu0
        %1096 = vmatprep.mubr.bf16.mxu0 0
        %1097 = vmatmul.mubr.bf16.gmra.mrb[0].mxu0 %v992
        %v1098 = vpop.f32.mrb[0].mxu0
        %v1099 = vadd.f32 0.0, %v1098
        %v1100 = vpop.f32.mrb[0].mxu0
        %v1101 = vpop.f32.mrb[0].mxu0
        %v1102 = vadd.f32 0.0, %v1101
        %v1103 = vpop.f32.mrb[0].mxu0
        %1104 = vmatprep.mubr.bf16.mxu0 0
        %1105 = vmatmul.mubr.bf16.gmra.mrb[0].mxu0 %v995
        %v1106 = vpop.f32.mrb[0].mxu0
        %v1107 = vadd.f32 0.0, %v1106
        %v1108 = vpop.f32.mrb[0].mxu0
        %v1109 = vpop.f32.mrb[0].mxu0
        %v1110 = vadd.f32 0.0, %v1109
        %v1111 = vpop.f32.mrb[0].mxu0
        %1112 = vmatprep.mubr.bf16.mxu0 0
        %1113 = vmatmul.mubr.bf16.gmra.mrb[0].mxu0 %v998
        %v1114 = vpop.f32.mrb[0].mxu0
        %v1115 = vadd.f32 0.0, %v1114
        %v1116 = vpop.f32.mrb[0].mxu0
        %v1117 = vpop.f32.mrb[0].mxu0
        %v1118 = vadd.f32 0.0, %v1117
        %v1119 = vpop.f32.mrb[0].mxu0
        %1120 = vdwg.mxu0
        %v1121 = vmul.f32 %v1059, 0.125
        %v1122 = vmul.f32 %v1062, 0.125
        %v1123 = vmul.f32 %v1067, 0.125
        %v1124 = vmul.f32 %v1070, 0.125
        %v1125 = vmul.f32 %v1075, 0.125
        %v1126 = vmul.f32 %v1078, 0.125
        %v1127 = vmul.f32 %v1083, 0.125
        %v1128 = vmul.f32 %v1086, 0.125
        %v1129 = vmul.f32 %v1091, 0.125
        %v1130 = vmul.f32 %v1094, 0.125
        %v1131 = vmul.f32 %v1099, 0.125
        %v1132 = vmul.f32 %v1102, 0.125
        %v1133 = vmul.f32 %v1107, 0.125
        %v1134 = vmul.f32 %v1110, 0.125
        %v1135 = vmul.f32 %v1115, 0.125
        %v1136 = vmul.f32 %v1118, 0.125
        %v1137 = vld [vmem:[#allocation2] sm:$0xff]
        %v1138 = vld [vmem:[#allocation2 + $0x8] sm:$0xff]
        %v1139 = vld [vmem:[#allocation2 + $0x10] sm:$0xff]
        %v1140 = vld [vmem:[#allocation2 + $0x18] sm:$0xff]
        %v1141 = vld [vmem:[#allocation2 + $0x20] sm:$0xff]
        %v1142 = vld [vmem:[#allocation2 + $0x28] sm:$0xff]
        %v1143 = vld [vmem:[#allocation2 + $0x30] sm:$0xff]
        %v1144 = vld [vmem:[#allocation2 + $0x38] sm:$0xff]
        %v1145 = vld [vmem:[#allocation2 + $0x40] sm:$0xff]
        %v1146 = vld [vmem:[#allocation2 + $0x48] sm:$0xff]
        %v1147 = vld [vmem:[#allocation2 + $0x50] sm:$0xff]
        %v1148 = vld [vmem:[#allocation2 + $0x58] sm:$0xff]
        %v1149 = vld [vmem:[#allocation2 + $0x60] sm:$0xff]
        %v1150 = vld [vmem:[#allocation2 + $0x68] sm:$0xff]
        %v1151 = vld [vmem:[#allocation2 + $0x70] sm:$0xff]
        %v1152 = vld [vmem:[#allocation2 + $0x78] sm:$0xff]
        %1153 = vmax.xlane.f32.xlu0 %v1121
        %v1154 = vpop.xlane.xlu0 %1153
        %1155 = vmax.xlane.f32.xlu0 %v1122
        %v1156 = vpop.xlane.xlu0 %1155
        %1157 = vmax.xlane.f32.xlu0 %v1123
        %v1158 = vpop.xlane.xlu0 %1157
        %1159 = vmax.xlane.f32.xlu0 %v1124
        %v1160 = vpop.xlane.xlu0 %1159
        %1161 = vmax.xlane.f32.xlu0 %v1125
        %v1162 = vpop.xlane.xlu0 %1161
        %1163 = vmax.xlane.f32.xlu0 %v1126
        %v1164 = vpop.xlane.xlu0 %1163
        %1165 = vmax.xlane.f32.xlu0 %v1127
        %v1166 = vpop.xlane.xlu0 %1165
        %1167 = vmax.xlane.f32.xlu0 %v1128
        %v1168 = vpop.xlane.xlu0 %1167
        %1169 = vmax.xlane.f32.xlu0 %v1129
        %v1170 = vpop.xlane.xlu0 %1169
        %1171 = vmax.xlane.f32.xlu0 %v1130
        %v1172 = vpop.xlane.xlu0 %1171
        %1173 = vmax.xlane.f32.xlu0 %v1131
        %v1174 = vpop.xlane.xlu0 %1173
        %1175 = vmax.xlane.f32.xlu0 %v1132
        %v1176 = vpop.xlane.xlu0 %1175
        %1177 = vmax.xlane.f32.xlu0 %v1133
        %v1178 = vpop.xlane.xlu0 %1177
        %1179 = vmax.xlane.f32.xlu0 %v1134
        %v1180 = vpop.xlane.xlu0 %1179
        %1181 = vmax.xlane.f32.xlu0 %v1135
        %v1182 = vpop.xlane.xlu0 %1181
        %1183 = vmax.xlane.f32.xlu0 %v1136
        %v1184 = vpop.xlane.xlu0 %1183
        %v1185 = vmax.f32 %v1137, %v1154
        %v1186 = vmax.f32 %v1138, %v1156
        %v1187 = vmax.f32 %v1139, %v1158
        %v1188 = vmax.f32 %v1140, %v1160
        %v1189 = vmax.f32 %v1141, %v1162
        %v1190 = vmax.f32 %v1142, %v1164
        %v1191 = vmax.f32 %v1143, %v1166
        %v1192 = vmax.f32 %v1144, %v1168
        %v1193 = vmax.f32 %v1145, %v1170
        %v1194 = vmax.f32 %v1146, %v1172
        %v1195 = vmax.f32 %v1147, %v1174
        %v1196 = vmax.f32 %v1148, %v1176
        %v1197 = vmax.f32 %v1149, %v1178
        %v1198 = vmax.f32 %v1150, %v1180
        %v1199 = vmax.f32 %v1151, %v1182
        %v1200 = vmax.f32 %v1152, %v1184
        %v1201 = vsub.f32 %v1137, %v1185
        %v1202 = vsub.f32 %v1138, %v1186
        %v1203 = vsub.f32 %v1139, %v1187
        %v1204 = vsub.f32 %v1140, %v1188
        %v1205 = vsub.f32 %v1141, %v1189
        %v1206 = vsub.f32 %v1142, %v1190
        %v1207 = vsub.f32 %v1143, %v1191
        %v1208 = vsub.f32 %v1144, %v1192
        %v1209 = vsub.f32 %v1145, %v1193
        %v1210 = vsub.f32 %v1146, %v1194
        %v1211 = vsub.f32 %v1147, %v1195
        %v1212 = vsub.f32 %v1148, %v1196
        %v1213 = vsub.f32 %v1149, %v1197
        %v1214 = vsub.f32 %v1150, %v1198
        %v1215 = vsub.f32 %v1151, %v1199
        %v1216 = vsub.f32 %v1152, %v1200
        %v1217 = vmul.f32 %v1201, 1.442695
        %v1218 = vpow.pop %v1217
        %v1219 = vmul.f32 %v1202, 1.442695
        %v1220 = vpow.pop %v1219
        %v1221 = vmul.f32 %v1203, 1.442695
        %v1222 = vpow.pop %v1221
        %v1223 = vmul.f32 %v1204, 1.442695
        %v1224 = vpow.pop %v1223
        %v1225 = vmul.f32 %v1205, 1.442695
        %v1226 = vpow.pop %v1225
        %v1227 = vmul.f32 %v1206, 1.442695
        %v1228 = vpow.pop %v1227
        %v1229 = vmul.f32 %v1207, 1.442695
        %v1230 = vpow.pop %v1229
        %v1231 = vmul.f32 %v1208, 1.442695
        %v1232 = vpow.pop %v1231
        %v1233 = vmul.f32 %v1209, 1.442695
        %v1234 = vpow.pop %v1233
        %v1235 = vmul.f32 %v1210, 1.442695
        %v1236 = vpow.pop %v1235
        %v1237 = vmul.f32 %v1211, 1.442695
        %v1238 = vpow.pop %v1237
        %v1239 = vmul.f32 %v1212, 1.442695
        %v1240 = vpow.pop %v1239
        %v1241 = vmul.f32 %v1213, 1.442695
        %v1242 = vpow.pop %v1241
        %v1243 = vmul.f32 %v1214, 1.442695
        %v1244 = vpow.pop %v1243
        %v1245 = vmul.f32 %v1215, 1.442695
        %v1246 = vpow.pop %v1245
        %v1247 = vmul.f32 %v1216, 1.442695
        %v1248 = vpow.pop %v1247
        %1250 = vset.pattern.permute.xlu0 0
        %1251 = vperm.xlu0 %1250, %v1185
        %v1252 = vpop.permute.xlu0 %1251
        %1255 = vset.pattern.permute.xlu0 0
        %1256 = vperm.xlu0 %1255, %v1186
        %v1257 = vpop.permute.xlu0 %1256
        %1260 = vset.pattern.permute.xlu0 0
        %1261 = vperm.xlu0 %1260, %v1187
        %v1262 = vpop.permute.xlu0 %1261
        %1265 = vset.pattern.permute.xlu0 0
        %1266 = vperm.xlu0 %1265, %v1188
        %v1267 = vpop.permute.xlu0 %1266
        %1270 = vset.pattern.permute.xlu0 0
        %1271 = vperm.xlu0 %1270, %v1189
        %v1272 = vpop.permute.xlu0 %1271
        %1275 = vset.pattern.permute.xlu0 0
        %1276 = vperm.xlu0 %1275, %v1190
        %v1277 = vpop.permute.xlu0 %1276
        %1280 = vset.pattern.permute.xlu0 0
        %1281 = vperm.xlu0 %1280, %v1191
        %v1282 = vpop.permute.xlu0 %1281
        %1285 = vset.pattern.permute.xlu0 0
        %1286 = vperm.xlu0 %1285, %v1192
        %v1287 = vpop.permute.xlu0 %1286
        %1290 = vset.pattern.permute.xlu0 0
        %1291 = vperm.xlu0 %1290, %v1193
        %v1292 = vpop.permute.xlu0 %1291
        %1295 = vset.pattern.permute.xlu0 0
        %1296 = vperm.xlu0 %1295, %v1194
        %v1297 = vpop.permute.xlu0 %1296
        %1300 = vset.pattern.permute.xlu0 0
        %1301 = vperm.xlu0 %1300, %v1195
        %v1302 = vpop.permute.xlu0 %1301
        %1305 = vset.pattern.permute.xlu0 0
        %1306 = vperm.xlu0 %1305, %v1196
        %v1307 = vpop.permute.xlu0 %1306
        %1310 = vset.pattern.permute.xlu0 0
        %1311 = vperm.xlu0 %1310, %v1197
        %v1312 = vpop.permute.xlu0 %1311
        %1315 = vset.pattern.permute.xlu0 0
        %1316 = vperm.xlu0 %1315, %v1198
        %v1317 = vpop.permute.xlu0 %1316
        %1320 = vset.pattern.permute.xlu0 0
        %1321 = vperm.xlu0 %1320, %v1199
        %v1322 = vpop.permute.xlu0 %1321
        %1325 = vset.pattern.permute.xlu0 0
        %1326 = vperm.xlu0 %1325, %v1200
        %v1327 = vpop.permute.xlu0 %1326
        %v1329 = vsub.f32 %v1121, %v1252
        %v1330 = vsub.f32 %v1122, %v1257
        %v1331 = vsub.f32 %v1123, %v1262
        %v1332 = vsub.f32 %v1124, %v1267
        %v1333 = vsub.f32 %v1125, %v1272
        %v1334 = vsub.f32 %v1126, %v1277
        %v1335 = vsub.f32 %v1127, %v1282
        %v1336 = vsub.f32 %v1128, %v1287
        %v1337 = vsub.f32 %v1129, %v1292
        %v1338 = vsub.f32 %v1130, %v1297
        %v1339 = vsub.f32 %v1131, %v1302
        %v1340 = vsub.f32 %v1132, %v1307
        %v1341 = vsub.f32 %v1133, %v1312
        %v1342 = vsub.f32 %v1134, %v1317
        %v1343 = vsub.f32 %v1135, %v1322
        %v1344 = vsub.f32 %v1136, %v1327
        %v1345 = vmul.f32 %v1329, 1.442695
        %v1346 = vpow.pop %v1345
        %v1347 = vmul.f32 %v1330, 1.442695
        %v1348 = vpow.pop %v1347
        %v1349 = vmul.f32 %v1331, 1.442695
        %v1350 = vpow.pop %v1349
        %v1351 = vmul.f32 %v1332, 1.442695
        %v1352 = vpow.pop %v1351
        %v1353 = vmul.f32 %v1333, 1.442695
        %v1354 = vpow.pop %v1353
        %v1355 = vmul.f32 %v1334, 1.442695
        %v1356 = vpow.pop %v1355
        %v1357 = vmul.f32 %v1335, 1.442695
        %v1358 = vpow.pop %v1357
        %v1359 = vmul.f32 %v1336, 1.442695
        %v1360 = vpow.pop %v1359
        %v1361 = vmul.f32 %v1337, 1.442695
        %v1362 = vpow.pop %v1361
        %v1363 = vmul.f32 %v1338, 1.442695
        %v1364 = vpow.pop %v1363
        %v1365 = vmul.f32 %v1339, 1.442695
        %v1366 = vpow.pop %v1365
        %v1367 = vmul.f32 %v1340, 1.442695
        %v1368 = vpow.pop %v1367
        %v1369 = vmul.f32 %v1341, 1.442695
        %v1370 = vpow.pop %v1369
        %v1371 = vmul.f32 %v1342, 1.442695
        %v1372 = vpow.pop %v1371
        %v1373 = vmul.f32 %v1343, 1.442695
        %v1374 = vpow.pop %v1373
        %v1375 = vmul.f32 %v1344, 1.442695
        %v1376 = vpow.pop %v1375
        %v1377 = vld [vmem:[#allocation3] sm:$0xff]
        %v1378 = vld [vmem:[#allocation3 + $0x8] sm:$0xff]
        %v1379 = vld [vmem:[#allocation3 + $0x10] sm:$0xff]
        %v1380 = vld [vmem:[#allocation3 + $0x18] sm:$0xff]
        %v1381 = vld [vmem:[#allocation3 + $0x20] sm:$0xff]
        %v1382 = vld [vmem:[#allocation3 + $0x28] sm:$0xff]
        %v1383 = vld [vmem:[#allocation3 + $0x30] sm:$0xff]
        %v1384 = vld [vmem:[#allocation3 + $0x38] sm:$0xff]
        %v1385 = vld [vmem:[#allocation3 + $0x40] sm:$0xff]
        %v1386 = vld [vmem:[#allocation3 + $0x48] sm:$0xff]
        %v1387 = vld [vmem:[#allocation3 + $0x50] sm:$0xff]
        %v1388 = vld [vmem:[#allocation3 + $0x58] sm:$0xff]
        %v1389 = vld [vmem:[#allocation3 + $0x60] sm:$0xff]
        %v1390 = vld [vmem:[#allocation3 + $0x68] sm:$0xff]
        %v1391 = vld [vmem:[#allocation3 + $0x70] sm:$0xff]
        %v1392 = vld [vmem:[#allocation3 + $0x78] sm:$0xff]
        %v1393 = vmul.f32 %v1218, %v1377
        %v1394 = vmul.f32 %v1220, %v1378
        %v1395 = vmul.f32 %v1222, %v1379
        %v1396 = vmul.f32 %v1224, %v1380
        %v1397 = vmul.f32 %v1226, %v1381
        %v1398 = vmul.f32 %v1228, %v1382
        %v1399 = vmul.f32 %v1230, %v1383
        %v1400 = vmul.f32 %v1232, %v1384
        %v1401 = vmul.f32 %v1234, %v1385
        %v1402 = vmul.f32 %v1236, %v1386
        %v1403 = vmul.f32 %v1238, %v1387
        %v1404 = vmul.f32 %v1240, %v1388
        %v1405 = vmul.f32 %v1242, %v1389
        %v1406 = vmul.f32 %v1244, %v1390
        %v1407 = vmul.f32 %v1246, %v1391
        %v1408 = vmul.f32 %v1248, %v1392
        %1409 = vadd.xlane.f32.xlu0 %v1346
        %v1410 = vpop.xlane.xlu0 %1409
        %1411 = vadd.xlane.f32.xlu0 %v1348
        %v1412 = vpop.xlane.xlu0 %1411
        %1413 = vadd.xlane.f32.xlu0 %v1350
        %v1414 = vpop.xlane.xlu0 %1413
        %1415 = vadd.xlane.f32.xlu0 %v1352
        %v1416 = vpop.xlane.xlu0 %1415
        %1417 = vadd.xlane.f32.xlu0 %v1354
        %v1418 = vpop.xlane.xlu0 %1417
        %1419 = vadd.xlane.f32.xlu0 %v1356
        %v1420 = vpop.xlane.xlu0 %1419
        %1421 = vadd.xlane.f32.xlu0 %v1358
        %v1422 = vpop.xlane.xlu0 %1421
        %1423 = vadd.xlane.f32.xlu0 %v1360
        %v1424 = vpop.xlane.xlu0 %1423
        %1425 = vadd.xlane.f32.xlu0 %v1362
        %v1426 = vpop.xlane.xlu0 %1425
        %1427 = vadd.xlane.f32.xlu0 %v1364
        %v1428 = vpop.xlane.xlu0 %1427
        %1429 = vadd.xlane.f32.xlu0 %v1366
        %v1430 = vpop.xlane.xlu0 %1429
        %1431 = vadd.xlane.f32.xlu0 %v1368
        %v1432 = vpop.xlane.xlu0 %1431
        %1433 = vadd.xlane.f32.xlu0 %v1370
        %v1434 = vpop.xlane.xlu0 %1433
        %1435 = vadd.xlane.f32.xlu0 %v1372
        %v1436 = vpop.xlane.xlu0 %1435
        %1437 = vadd.xlane.f32.xlu0 %v1374
        %v1438 = vpop.xlane.xlu0 %1437
        %1439 = vadd.xlane.f32.xlu0 %v1376
        %v1440 = vpop.xlane.xlu0 %1439
        %v1441 = vadd.f32 %v1393, %v1410
        %v1442 = vadd.f32 %v1394, %v1412
        %v1443 = vadd.f32 %v1395, %v1414
        %v1444 = vadd.f32 %v1396, %v1416
        %v1445 = vadd.f32 %v1397, %v1418
        %v1446 = vadd.f32 %v1398, %v1420
        %v1447 = vadd.f32 %v1399, %v1422
        %v1448 = vadd.f32 %v1400, %v1424
        %v1449 = vadd.f32 %v1401, %v1426
        %v1450 = vadd.f32 %v1402, %v1428
        %v1451 = vadd.f32 %v1403, %v1430
        %v1452 = vadd.f32 %v1404, %v1432
        %v1453 = vadd.f32 %v1405, %v1434
        %v1454 = vadd.f32 %v1406, %v1436
        %v1455 = vadd.f32 %v1407, %v1438
        %v1456 = vadd.f32 %v1408, %v1440
        %vm1457 = vcmask 7168
        %1458 = vst.msk [vmem:[#allocation3] sm:$0xff] %vm1457, %v1441
        %1459 = vst.msk [vmem:[#allocation3 + $0x8] sm:$0xff] %vm1457, %v1442
        %1460 = vst.msk [vmem:[#allocation3 + $0x10] sm:$0xff] %vm1457, %v1443
        %1461 = vst.msk [vmem:[#allocation3 + $0x18] sm:$0xff] %vm1457, %v1444
        %1462 = vst.msk [vmem:[#allocation3 + $0x20] sm:$0xff] %vm1457, %v1445
        %1463 = vst.msk [vmem:[#allocation3 + $0x28] sm:$0xff] %vm1457, %v1446
        %1464 = vst.msk [vmem:[#allocation3 + $0x30] sm:$0xff] %vm1457, %v1447
        %1465 = vst.msk [vmem:[#allocation3 + $0x38] sm:$0xff] %vm1457, %v1448
        %1466 = vst.msk [vmem:[#allocation3 + $0x40] sm:$0xff] %vm1457, %v1449
        %1467 = vst.msk [vmem:[#allocation3 + $0x48] sm:$0xff] %vm1457, %v1450
        %1468 = vst.msk [vmem:[#allocation3 + $0x50] sm:$0xff] %vm1457, %v1451
        %1469 = vst.msk [vmem:[#allocation3 + $0x58] sm:$0xff] %vm1457, %v1452
        %1470 = vst.msk [vmem:[#allocation3 + $0x60] sm:$0xff] %vm1457, %v1453
        %1471 = vst.msk [vmem:[#allocation3 + $0x68] sm:$0xff] %vm1457, %v1454
        %1472 = vst.msk [vmem:[#allocation3 + $0x70] sm:$0xff] %vm1457, %v1455
        %1473 = vst.msk [vmem:[#allocation3 + $0x78] sm:$0xff] %vm1457, %v1456
        %v1474 = vld [vmem:[#allocation4] sm:$0xff]
        %v1475 = vld [vmem:[#allocation4 + $0x8] sm:$0xff]
        %v1476 = vld [vmem:[#allocation4 + $0x10] sm:$0xff]
        %v1477 = vld [vmem:[#allocation4 + $0x18] sm:$0xff]
        %v1478 = vld [vmem:[#allocation4 + $0x20] sm:$0xff]
        %v1479 = vld [vmem:[#allocation4 + $0x28] sm:$0xff]
        %v1480 = vld [vmem:[#allocation4 + $0x30] sm:$0xff]
        %v1481 = vld [vmem:[#allocation4 + $0x38] sm:$0xff]
        %v1482 = vld [vmem:[#allocation4 + $0x40] sm:$0xff]
        %v1483 = vld [vmem:[#allocation4 + $0x48] sm:$0xff]
        %v1484 = vld [vmem:[#allocation4 + $0x50] sm:$0xff]
        %v1485 = vld [vmem:[#allocation4 + $0x58] sm:$0xff]
        %v1486 = vld [vmem:[#allocation4 + $0x60] sm:$0xff]
        %v1487 = vld [vmem:[#allocation4 + $0x68] sm:$0xff]
        %v1488 = vld [vmem:[#allocation4 + $0x70] sm:$0xff]
        %v1489 = vld [vmem:[#allocation4 + $0x78] sm:$0xff]
        %1491 = vset.pattern.permute.xlu0 0
        %1492 = vperm.xlu0 %1491, %v1218
        %v1493 = vpop.permute.xlu0 %1492
        %1496 = vset.pattern.permute.xlu0 0
        %1497 = vperm.xlu0 %1496, %v1220
        %v1498 = vpop.permute.xlu0 %1497
        %1501 = vset.pattern.permute.xlu0 0
        %1502 = vperm.xlu0 %1501, %v1222
        %v1503 = vpop.permute.xlu0 %1502
        %1506 = vset.pattern.permute.xlu0 0
        %1507 = vperm.xlu0 %1506, %v1224
        %v1508 = vpop.permute.xlu0 %1507
        %1511 = vset.pattern.permute.xlu0 0
        %1512 = vperm.xlu0 %1511, %v1226
        %v1513 = vpop.permute.xlu0 %1512
        %1516 = vset.pattern.permute.xlu0 0
        %1517 = vperm.xlu0 %1516, %v1228
        %v1518 = vpop.permute.xlu0 %1517
        %1521 = vset.pattern.permute.xlu0 0
        %1522 = vperm.xlu0 %1521, %v1230
        %v1523 = vpop.permute.xlu0 %1522
        %1526 = vset.pattern.permute.xlu0 0
        %1527 = vperm.xlu0 %1526, %v1232
        %v1528 = vpop.permute.xlu0 %1527
        %1531 = vset.pattern.permute.xlu0 0
        %1532 = vperm.xlu0 %1531, %v1234
        %v1533 = vpop.permute.xlu0 %1532
        %1536 = vset.pattern.permute.xlu0 0
        %1537 = vperm.xlu0 %1536, %v1236
        %v1538 = vpop.permute.xlu0 %1537
        %1541 = vset.pattern.permute.xlu0 0
        %1542 = vperm.xlu0 %1541, %v1238
        %v1543 = vpop.permute.xlu0 %1542
        %1546 = vset.pattern.permute.xlu0 0
        %1547 = vperm.xlu0 %1546, %v1240
        %v1548 = vpop.permute.xlu0 %1547
        %1551 = vset.pattern.permute.xlu0 0
        %1552 = vperm.xlu0 %1551, %v1242
        %v1553 = vpop.permute.xlu0 %1552
        %1556 = vset.pattern.permute.xlu0 0
        %1557 = vperm.xlu0 %1556, %v1244
        %v1558 = vpop.permute.xlu0 %1557
        %1561 = vset.pattern.permute.xlu0 0
        %1562 = vperm.xlu0 %1561, %v1246
        %v1563 = vpop.permute.xlu0 %1562
        %1566 = vset.pattern.permute.xlu0 0
        %1567 = vperm.xlu0 %1566, %v1248
        %v1568 = vpop.permute.xlu0 %1567
        %v1570 = vmul.f32 %v1493, %v1474
        %v1571 = vmul.f32 %v1498, %v1475
        %v1572 = vmul.f32 %v1503, %v1476
        %v1573 = vmul.f32 %v1508, %v1477
        %v1574 = vmul.f32 %v1513, %v1478
        %v1575 = vmul.f32 %v1518, %v1479
        %v1576 = vmul.f32 %v1523, %v1480
        %v1577 = vmul.f32 %v1528, %v1481
        %v1578 = vmul.f32 %v1533, %v1482
        %v1579 = vmul.f32 %v1538, %v1483
        %v1580 = vmul.f32 %v1543, %v1484
        %v1581 = vmul.f32 %v1548, %v1485
        %v1582 = vmul.f32 %v1553, %v1486
        %v1583 = vmul.f32 %v1558, %v1487
        %v1584 = vmul.f32 %v1563, %v1488
        %v1585 = vmul.f32 %v1568, %v1489
        %v1586 = vpack.c.bf16 %v1348, %v1346
        %v1587 = vpack.c.bf16 %v1352, %v1350
        %v1588 = vpack.c.bf16 %v1356, %v1354
        %v1589 = vpack.c.bf16 %v1360, %v1358
        %v1590 = vpack.c.bf16 %v1364, %v1362
        %v1591 = vpack.c.bf16 %v1368, %v1366
        %v1592 = vpack.c.bf16 %v1372, %v1370
        %v1593 = vpack.c.bf16 %v1376, %v1374
        %v1610 = vunpack.c.l.b16 %v879
        %v1611 = vunpack.c.l.b16 %v880
        %v1612 = vunpack.c.l.b16 %v881
        %v1613 = vunpack.c.l.b16 %v882
        %v1614 = vunpack.c.l.b16 %v883
        %v1615 = vunpack.c.l.b16 %v884
        %v1616 = vunpack.c.l.b16 %v885
        %v1617 = vunpack.c.l.b16 %v886
        %v1618 = vunpack.c.l.b16 %v887
        %v1619 = vunpack.c.l.b16 %v888
        %v1620 = vunpack.c.l.b16 %v889
        %v1621 = vunpack.c.l.b16 %v890
        %v1622 = vunpack.c.l.b16 %v891
        %v1623 = vunpack.c.l.b16 %v892
        %v1624 = vunpack.c.l.b16 %v893
        %v1625 = vunpack.c.l.b16 %v894
        %v1626 = vpack.c.b16 %v1611, %v1610
        %v1627 = vpack.c.b16 %v1613, %v1612
        %v1628 = vpack.c.b16 %v1615, %v1614
        %v1629 = vpack.c.b16 %v1617, %v1616
        %v1630 = vpack.c.b16 %v1619, %v1618
        %v1631 = vpack.c.b16 %v1621, %v1620
        %v1632 = vpack.c.b16 %v1623, %v1622
        %v1633 = vpack.c.b16 %v1625, %v1624
        %1642 = vmatprep.subr.bf16.mxu0 0
        %1643 = vmatpush1.bf16.msra.mxu0 %v1626
        %1644 = vmatprep.subr.bf16.mxu0 0
        %1645 = vmatpush1.bf16.msra.mxu0 %v1627
        %1646 = vmatprep.subr.bf16.mxu0 0
        %1647 = vmatpush1.bf16.msra.mxu0 %v1628
        %1648 = vmatprep.subr.bf16.mxu0 0
        %1649 = vmatpush1.bf16.msra.mxu0 %v1629
        %1650 = vmatprep.subr.bf16.mxu0 0
        %1651 = vmatpush1.bf16.msra.mxu0 %v1630
        %1652 = vmatprep.subr.bf16.mxu0 0
        %1653 = vmatpush1.bf16.msra.mxu0 %v1631
        %1654 = vmatprep.subr.bf16.mxu0 0
        %1655 = vmatpush1.bf16.msra.mxu0 %v1632
        %1656 = vmatprep.subr.bf16.mxu0 0
        %1657 = vmatpush1.bf16.msra.mxu0 %v1633
        %1658 = vmatprep.subr.bf16.mxu0 0
        %1659 = vmatpush1.bf16.msra.mxu0 0
        %1660 = vmatprep.subr.bf16.mxu0 0
        %1661 = vmatpush1.bf16.msra.mxu0 0
        %1662 = vmatprep.subr.bf16.mxu0 0
        %1663 = vmatpush1.bf16.msra.mxu0 0
        %1664 = vmatprep.subr.bf16.mxu0 0
        %1665 = vmatpush1.bf16.msra.mxu0 0
        %1666 = vmatprep.subr.bf16.mxu0 0
        %1667 = vmatpush1.bf16.msra.mxu0 0
        %1668 = vmatprep.subr.bf16.mxu0 0
        %1669 = vmatpush1.bf16.msra.mxu0 0
        %1670 = vmatprep.subr.bf16.mxu0 0
        %1671 = vmatpush1.bf16.msra.mxu0 0
        %1672 = vmatprep.subr.bf16.mxu0 0
        %1673 = vmatpush1.bf16.msra.mxu0 0
        %1674 = vmatprep.mubr.bf16.mxu0 0
        %1675 = vmatmul.mubr.bf16.gmra.mrb[0].mxu0 %v1586
        %v1676 = vpop.f32.mrb[0].mxu0
        %v1677 = vadd.f32 0.0, %v1676
        %v1678 = vpop.f32.mrb[0].mxu0
        %v1679 = vpop.f32.mrb[0].mxu0
        %v1680 = vadd.f32 0.0, %v1679
        %v1681 = vpop.f32.mrb[0].mxu0
        %1682 = vmatprep.mubr.bf16.mxu0 0
        %1683 = vmatmul.mubr.bf16.gmra.mrb[0].mxu0 %v1587
        %v1684 = vpop.f32.mrb[0].mxu0
        %v1685 = vadd.f32 0.0, %v1684
        %v1686 = vpop.f32.mrb[0].mxu0
        %v1687 = vpop.f32.mrb[0].mxu0
        %v1688 = vadd.f32 0.0, %v1687
        %v1689 = vpop.f32.mrb[0].mxu0
        %1690 = vmatprep.mubr.bf16.mxu0 0
        %1691 = vmatmul.mubr.bf16.gmra.mrb[0].mxu0 %v1588
        %v1692 = vpop.f32.mrb[0].mxu0
        %v1693 = vadd.f32 0.0, %v1692
        %v1694 = vpop.f32.mrb[0].mxu0
        %v1695 = vpop.f32.mrb[0].mxu0
        %v1696 = vadd.f32 0.0, %v1695
        %v1697 = vpop.f32.mrb[0].mxu0
        %1698 = vmatprep.mubr.bf16.mxu0 0
        %1699 = vmatmul.mubr.bf16.gmra.mrb[0].mxu0 %v1589
        %v1700 = vpop.f32.mrb[0].mxu0
        %v1701 = vadd.f32 0.0, %v1700
        %v1702 = vpop.f32.mrb[0].mxu0
        %v1703 = vpop.f32.mrb[0].mxu0
        %v1704 = vadd.f32 0.0, %v1703
        %v1705 = vpop.f32.mrb[0].mxu0
        %1706 = vmatprep.mubr.bf16.mxu0 0
        %1707 = vmatmul.mubr.bf16.gmra.mrb[0].mxu0 %v1590
        %v1708 = vpop.f32.mrb[0].mxu0
        %v1709 = vadd.f32 0.0, %v1708
        %v1710 = vpop.f32.mrb[0].mxu0
        %v1711 = vpop.f32.mrb[0].mxu0
        %v1712 = vadd.f32 0.0, %v1711
        %v1713 = vpop.f32.mrb[0].mxu0
        %1714 = vmatprep.mubr.bf16.mxu0 0
        %1715 = vmatmul.mubr.bf16.gmra.mrb[0].mxu0 %v1591
        %v1716 = vpop.f32.mrb[0].mxu0
        %v1717 = vadd.f32 0.0, %v1716
        %v1718 = vpop.f32.mrb[0].mxu0
        %v1719 = vpop.f32.mrb[0].mxu0
        %v1720 = vadd.f32 0.0, %v1719
        %v1721 = vpop.f32.mrb[0].mxu0
        %1722 = vmatprep.mubr.bf16.mxu0 0
        %1723 = vmatmul.mubr.bf16.gmra.mrb[0].mxu0 %v1592
        %v1724 = vpop.f32.mrb[0].mxu0
        %v1725 = vadd.f32 0.0, %v1724
        %v1726 = vpop.f32.mrb[0].mxu0
        %v1727 = vpop.f32.mrb[0].mxu0
        %v1728 = vadd.f32 0.0, %v1727
        %v1729 = vpop.f32.mrb[0].mxu0
        %1730 = vmatprep.mubr.bf16.mxu0 0
        %1731 = vmatmul.mubr.bf16.gmra.mrb[0].mxu0 %v1593
        %v1732 = vpop.f32.mrb[0].mxu0
        %v1733 = vadd.f32 0.0, %v1732
        %v1734 = vpop.f32.mrb[0].mxu0
        %v1735 = vpop.f32.mrb[0].mxu0
        %v1736 = vadd.f32 0.0, %v1735
        %v1737 = vpop.f32.mrb[0].mxu0
        %1738 = vdwg.mxu0
        %v1739 = vadd.f32 %v1570, %v1677
        %v1740 = vadd.f32 %v1571, %v1680
        %v1741 = vadd.f32 %v1572, %v1685
        %v1742 = vadd.f32 %v1573, %v1688
        %v1743 = vadd.f32 %v1574, %v1693
        %v1744 = vadd.f32 %v1575, %v1696
        %v1745 = vadd.f32 %v1576, %v1701
        %v1746 = vadd.f32 %v1577, %v1704
        %v1747 = vadd.f32 %v1578, %v1709
        %v1748 = vadd.f32 %v1579, %v1712
        %v1749 = vadd.f32 %v1580, %v1717
        %v1750 = vadd.f32 %v1581, %v1720
        %v1751 = vadd.f32 %v1582, %v1725
        %v1752 = vadd.f32 %v1583, %v1728
        %v1753 = vadd.f32 %v1584, %v1733
        %v1754 = vadd.f32 %v1585, %v1736
        %1755 = vst.msk [vmem:[#allocation4] sm:$0xff] %vm975, %v1739
        %1756 = vst.msk [vmem:[#allocation4 + $0x8] sm:$0xff] %vm975, %v1740
        %1757 = vst.msk [vmem:[#allocation4 + $0x10] sm:$0xff] %vm975, %v1741
        %1758 = vst.msk [vmem:[#allocation4 + $0x18] sm:$0xff] %vm975, %v1742
        %1759 = vst.msk [vmem:[#allocation4 + $0x20] sm:$0xff] %vm975, %v1743
        %1760 = vst.msk [vmem:[#allocation4 + $0x28] sm:$0xff] %vm975, %v1744
        %1761 = vst.msk [vmem:[#allocation4 + $0x30] sm:$0xff] %vm975, %v1745
        %1762 = vst.msk [vmem:[#allocation4 + $0x38] sm:$0xff] %vm975, %v1746
        %1763 = vst.msk [vmem:[#allocation4 + $0x40] sm:$0xff] %vm975, %v1747
        %1764 = vst.msk [vmem:[#allocation4 + $0x48] sm:$0xff] %vm975, %v1748
        %1765 = vst.msk [vmem:[#allocation4 + $0x50] sm:$0xff] %vm975, %v1749
        %1766 = vst.msk [vmem:[#allocation4 + $0x58] sm:$0xff] %vm975, %v1750
        %1767 = vst.msk [vmem:[#allocation4 + $0x60] sm:$0xff] %vm975, %v1751
        %1768 = vst.msk [vmem:[#allocation4 + $0x68] sm:$0xff] %vm975, %v1752
        %1769 = vst.msk [vmem:[#allocation4 + $0x70] sm:$0xff] %vm975, %v1753
        %1770 = vst.msk [vmem:[#allocation4 + $0x78] sm:$0xff] %vm975, %v1754
        %1771 = vst.msk [vmem:[#allocation2] sm:$0xff] %vm1457, %v1185
        %1772 = vst.msk [vmem:[#allocation2 + $0x8] sm:$0xff] %vm1457, %v1186
        %1773 = vst.msk [vmem:[#allocation2 + $0x10] sm:$0xff] %vm1457, %v1187
        %1774 = vst.msk [vmem:[#allocation2 + $0x18] sm:$0xff] %vm1457, %v1188
        %1775 = vst.msk [vmem:[#allocation2 + $0x20] sm:$0xff] %vm1457, %v1189
        %1776 = vst.msk [vmem:[#allocation2 + $0x28] sm:$0xff] %vm1457, %v1190
        %1777 = vst.msk [vmem:[#allocation2 + $0x30] sm:$0xff] %vm1457, %v1191
        %1778 = vst.msk [vmem:[#allocation2 + $0x38] sm:$0xff] %vm1457, %v1192
        %1779 = vst.msk [vmem:[#allocation2 + $0x40] sm:$0xff] %vm1457, %v1193
        %1780 = vst.msk [vmem:[#allocation2 + $0x48] sm:$0xff] %vm1457, %v1194
        %1781 = vst.msk [vmem:[#allocation2 + $0x50] sm:$0xff] %vm1457, %v1195
        %1782 = vst.msk [vmem:[#allocation2 + $0x58] sm:$0xff] %vm1457, %v1196
        %1783 = vst.msk [vmem:[#allocation2 + $0x60] sm:$0xff] %vm1457, %v1197
        %1784 = vst.msk [vmem:[#allocation2 + $0x68] sm:$0xff] %vm1457, %v1198
        %1785 = vst.msk [vmem:[#allocation2 + $0x70] sm:$0xff] %vm1457, %v1199
        %1786 = vst.msk [vmem:[#allocation2 + $0x78] sm:$0xff] %vm1457, %v1200
        %s1787 = scalar_lea.vmem %s697, 64 [#allocation5]
        %v1788 = vld [vmem:[%s1787] sm:$0xf]
        %v1789 = vld [vmem:[%s1787 + $0x4] sm:$0xf]
        %v1790 = vld [vmem:[%s1787 + $0x8] sm:$0xf]
        %v1791 = vld [vmem:[%s1787 + $0xc] sm:$0xf]
        %v1792 = vld [vmem:[%s1787 + $0x10] sm:$0xf]
        %v1793 = vld [vmem:[%s1787 + $0x14] sm:$0xf]
        %v1794 = vld [vmem:[%s1787 + $0x18] sm:$0xf]
        %v1795 = vld [vmem:[%s1787 + $0x1c] sm:$0xf]
        %v1796 = vld [vmem:[%s1787 + $0x20] sm:$0xf]
        %v1797 = vld [vmem:[%s1787 + $0x24] sm:$0xf]
        %v1798 = vld [vmem:[%s1787 + $0x28] sm:$0xf]
        %v1799 = vld [vmem:[%s1787 + $0x2c] sm:$0xf]
        %v1800 = vld [vmem:[%s1787 + $0x30] sm:$0xf]
        %v1801 = vld [vmem:[%s1787 + $0x34] sm:$0xf]
        %v1802 = vld [vmem:[%s1787 + $0x38] sm:$0xf]
        %v1803 = vld [vmem:[%s1787 + $0x3c] sm:$0xf]
        %s1804 = scalar_lea.vmem %s704, 64 [#allocation6]
        %v1805 = vld [vmem:[%s1804] sm:$0xf]
        %v1806 = vld [vmem:[%s1804 + $0x4] sm:$0xf]
        %v1807 = vld [vmem:[%s1804 + $0x8] sm:$0xf]
        %v1808 = vld [vmem:[%s1804 + $0xc] sm:$0xf]
        %v1809 = vld [vmem:[%s1804 + $0x10] sm:$0xf]
        %v1810 = vld [vmem:[%s1804 + $0x14] sm:$0xf]
        %v1811 = vld [vmem:[%s1804 + $0x18] sm:$0xf]
        %v1812 = vld [vmem:[%s1804 + $0x1c] sm:$0xf]
        %v1813 = vld [vmem:[%s1804 + $0x20] sm:$0xf]
        %v1814 = vld [vmem:[%s1804 + $0x24] sm:$0xf]
        %v1815 = vld [vmem:[%s1804 + $0x28] sm:$0xf]
        %v1816 = vld [vmem:[%s1804 + $0x2c] sm:$0xf]
        %v1817 = vld [vmem:[%s1804 + $0x30] sm:$0xf]
        %v1818 = vld [vmem:[%s1804 + $0x34] sm:$0xf]
        %v1819 = vld [vmem:[%s1804 + $0x38] sm:$0xf]
        %v1820 = vld [vmem:[%s1804 + $0x3c] sm:$0xf]
        %s1821 = scalar_lea.vmem %s711, 64 [#allocation7]
        %v1822 = vld [vmem:[%s1821] sm:$0xf]
        %v1823 = vld [vmem:[%s1821 + $0x4] sm:$0xf]
        %v1824 = vld [vmem:[%s1821 + $0x8] sm:$0xf]
        %v1825 = vld [vmem:[%s1821 + $0xc] sm:$0xf]
        %v1826 = vld [vmem:[%s1821 + $0x10] sm:$0xf]
        %v1827 = vld [vmem:[%s1821 + $0x14] sm:$0xf]
        %v1828 = vld [vmem:[%s1821 + $0x18] sm:$0xf]
        %v1829 = vld [vmem:[%s1821 + $0x1c] sm:$0xf]
        %v1830 = vld [vmem:[%s1821 + $0x20] sm:$0xf]
        %v1831 = vld [vmem:[%s1821 + $0x24] sm:$0xf]
        %v1832 = vld [vmem:[%s1821 + $0x28] sm:$0xf]
        %v1833 = vld [vmem:[%s1821 + $0x2c] sm:$0xf]
        %v1834 = vld [vmem:[%s1821 + $0x30] sm:$0xf]
        %v1835 = vld [vmem:[%s1821 + $0x34] sm:$0xf]
        %v1836 = vld [vmem:[%s1821 + $0x38] sm:$0xf]
        %v1837 = vld [vmem:[%s1821 + $0x3c] sm:$0xf]
        %v1854 = vunpack.c.l.b16 %v1788
        %v1855 = vunpack.c.l.b16 %v1789
        %v1856 = vunpack.c.l.b16 %v1790
        %v1857 = vunpack.c.l.b16 %v1791
        %v1858 = vunpack.c.l.b16 %v1792
        %v1859 = vunpack.c.l.b16 %v1793
        %v1860 = vunpack.c.l.b16 %v1794
        %v1861 = vunpack.c.l.b16 %v1795
        %v1862 = vunpack.c.l.b16 %v1796
        %v1863 = vunpack.c.l.b16 %v1797
        %v1864 = vunpack.c.l.b16 %v1798
        %v1865 = vunpack.c.l.b16 %v1799
        %v1866 = vunpack.c.l.b16 %v1800
        %v1867 = vunpack.c.l.b16 %v1801
        %v1868 = vunpack.c.l.b16 %v1802
        %v1869 = vunpack.c.l.b16 %v1803
        %v1870 = vpack.c.b16 %v1855, %v1854
        %v1871 = vpack.c.b16 %v1857, %v1856
        %v1872 = vpack.c.b16 %v1859, %v1858
        %v1873 = vpack.c.b16 %v1861, %v1860
        %v1874 = vpack.c.b16 %v1863, %v1862
        %v1875 = vpack.c.b16 %v1865, %v1864
        %v1876 = vpack.c.b16 %v1867, %v1866
        %v1877 = vpack.c.b16 %v1869, %v1868
        %v1894 = vunpack.c.l.b16 %v1805
        %v1895 = vunpack.c.l.b16 %v1806
        %v1896 = vunpack.c.l.b16 %v1807
        %v1897 = vunpack.c.l.b16 %v1808
        %v1898 = vunpack.c.l.b16 %v1809
        %v1899 = vunpack.c.l.b16 %v1810
        %v1900 = vunpack.c.l.b16 %v1811
        %v1901 = vunpack.c.l.b16 %v1812
        %v1902 = vunpack.c.l.b16 %v1813
        %v1903 = vunpack.c.l.b16 %v1814
        %v1904 = vunpack.c.l.b16 %v1815
        %v1905 = vunpack.c.l.b16 %v1816
        %v1906 = vunpack.c.l.b16 %v1817
        %v1907 = vunpack.c.l.b16 %v1818
        %v1908 = vunpack.c.l.b16 %v1819
        %v1909 = vunpack.c.l.b16 %v1820
        %v1910 = vpack.c.b16 %v1895, %v1894
        %v1911 = vpack.c.b16 %v1897, %v1896
        %v1912 = vpack.c.b16 %v1899, %v1898
        %v1913 = vpack.c.b16 %v1901, %v1900
        %v1914 = vpack.c.b16 %v1903, %v1902
        %v1915 = vpack.c.b16 %v1905, %v1904
        %v1916 = vpack.c.b16 %v1907, %v1906
        %v1917 = vpack.c.b16 %v1909, %v1908
        %v1919 = vsel %vm975, %v1870, 0
        %v1922 = vsel %vm975, %v1871, 0
        %v1925 = vsel %vm975, %v1872, 0
        %v1928 = vsel %vm975, %v1873, 0
        %v1931 = vsel %vm975, %v1874, 0
        %v1934 = vsel %vm975, %v1875, 0
        %v1937 = vsel %vm975, %v1876, 0
        %v1940 = vsel %vm975, %v1877, 0
        %v1943 = vsel %vm975, %v1910, 0
        %v1946 = vsel %vm975, %v1911, 0
        %v1949 = vsel %vm975, %v1912, 0
        %v1952 = vsel %vm975, %v1913, 0
        %v1955 = vsel %vm975, %v1914, 0
        %v1958 = vsel %vm975, %v1915, 0
        %v1961 = vsel %vm975, %v1916, 0
        %v1964 = vsel %vm975, %v1917, 0
        %1966 = vmatprep.subr.bf16.mxu0 0
        %1967 = vmatpush1.bf16.xpose.msra.mxu0 %v1943
        %1968 = vmatprep.subr.bf16.mxu0 0
        %1969 = vmatpush1.bf16.xpose.msra.mxu0 %v1946
        %1970 = vmatprep.subr.bf16.mxu0 0
        %1971 = vmatpush1.bf16.xpose.msra.mxu0 %v1949
        %1972 = vmatprep.subr.bf16.mxu0 0
        %1973 = vmatpush1.bf16.xpose.msra.mxu0 %v1952
        %1974 = vmatprep.subr.bf16.mxu0 0
        %1975 = vmatpush1.bf16.xpose.msra.mxu0 %v1955
        %1976 = vmatprep.subr.bf16.mxu0 0
        %1977 = vmatpush1.bf16.xpose.msra.mxu0 %v1958
        %1978 = vmatprep.subr.bf16.mxu0 0
        %1979 = vmatpush1.bf16.xpose.msra.mxu0 %v1961
        %1980 = vmatprep.subr.bf16.mxu0 0
        %1981 = vmatpush1.bf16.xpose.msra.mxu0 %v1964
        %1982 = vmatprep.subr.bf16.mxu0 0
        %1983 = vmatpush1.bf16.xpose.msra.mxu0 0
        %1984 = vmatprep.subr.bf16.mxu0 0
        %1985 = vmatpush1.bf16.xpose.msra.mxu0 0
        %1986 = vmatprep.subr.bf16.mxu0 0
        %1987 = vmatpush1.bf16.xpose.msra.mxu0 0
        %1988 = vmatprep.subr.bf16.mxu0 0
        %1989 = vmatpush1.bf16.xpose.msra.mxu0 0
        %1990 = vmatprep.subr.bf16.mxu0 0
        %1991 = vmatpush1.bf16.xpose.msra.mxu0 0
        %1992 = vmatprep.subr.bf16.mxu0 0
        %1993 = vmatpush1.bf16.xpose.msra.mxu0 0
        %1994 = vmatprep.subr.bf16.mxu0 0
        %1995 = vmatpush1.bf16.xpose.msra.mxu0 0
        %1996 = vmatprep.subr.bf16.mxu0 0
        %1997 = vmatpush1.bf16.xpose.msra.mxu0 0
        %1998 = vmatprep.mubr.bf16.mxu0 0
        %1999 = vmatmul.mubr.bf16.gmra.mrb[0].mxu0 %v1919
        %v2000 = vpop.f32.mrb[0].mxu0
        %v2001 = vadd.f32 0.0, %v2000
        %v2002 = vpop.f32.mrb[0].mxu0
        %v2003 = vpop.f32.mrb[0].mxu0
        %v2004 = vadd.f32 0.0, %v2003
        %v2005 = vpop.f32.mrb[0].mxu0
        %2006 = vmatprep.mubr.bf16.mxu0 0
        %2007 = vmatmul.mubr.bf16.gmra.mrb[0].mxu0 %v1922
        %v2008 = vpop.f32.mrb[0].mxu0
        %v2009 = vadd.f32 0.0, %v2008
        %v2010 = vpop.f32.mrb[0].mxu0
        %v2011 = vpop.f32.mrb[0].mxu0
        %v2012 = vadd.f32 0.0, %v2011
        %v2013 = vpop.f32.mrb[0].mxu0
        %2014 = vmatprep.mubr.bf16.mxu0 0
        %2015 = vmatmul.mubr.bf16.gmra.mrb[0].mxu0 %v1925
        %v2016 = vpop.f32.mrb[0].mxu0
        %v2017 = vadd.f32 0.0, %v2016
        %v2018 = vpop.f32.mrb[0].mxu0
        %v2019 = vpop.f32.mrb[0].mxu0
        %v2020 = vadd.f32 0.0, %v2019
        %v2021 = vpop.f32.mrb[0].mxu0
        %2022 = vmatprep.mubr.bf16.mxu0 0
        %2023 = vmatmul.mubr.bf16.gmra.mrb[0].mxu0 %v1928
        %v2024 = vpop.f32.mrb[0].mxu0
        %v2025 = vadd.f32 0.0, %v2024
        %v2026 = vpop.f32.mrb[0].mxu0
        %v2027 = vpop.f32.mrb[0].mxu0
        %v2028 = vadd.f32 0.0, %v2027
        %v2029 = vpop.f32.mrb[0].mxu0
        %2030 = vmatprep.mubr.bf16.mxu0 0
        %2031 = vmatmul.mubr.bf16.gmra.mrb[0].mxu0 %v1931
        %v2032 = vpop.f32.mrb[0].mxu0
        %v2033 = vadd.f32 0.0, %v2032
        %v2034 = vpop.f32.mrb[0].mxu0
        %v2035 = vpop.f32.mrb[0].mxu0
        %v2036 = vadd.f32 0.0, %v2035
        %v2037 = vpop.f32.mrb[0].mxu0
        %2038 = vmatprep.mubr.bf16.mxu0 0
        %2039 = vmatmul.mubr.bf16.gmra.mrb[0].mxu0 %v1934
        %v2040 = vpop.f32.mrb[0].mxu0
        %v2041 = vadd.f32 0.0, %v2040
        %v2042 = vpop.f32.mrb[0].mxu0
        %v2043 = vpop.f32.mrb[0].mxu0
        %v2044 = vadd.f32 0.0, %v2043
        %v2045 = vpop.f32.mrb[0].mxu0
        %2046 = vmatprep.mubr.bf16.mxu0 0
        %2047 = vmatmul.mubr.bf16.gmra.mrb[0].mxu0 %v1937
        %v2048 = vpop.f32.mrb[0].mxu0
        %v2049 = vadd.f32 0.0, %v2048
        %v2050 = vpop.f32.mrb[0].mxu0
        %v2051 = vpop.f32.mrb[0].mxu0
        %v2052 = vadd.f32 0.0, %v2051
        %v2053 = vpop.f32.mrb[0].mxu0
        %2054 = vmatprep.mubr.bf16.mxu0 0
        %2055 = vmatmul.mubr.bf16.gmra.mrb[0].mxu0 %v1940
        %v2056 = vpop.f32.mrb[0].mxu0
        %v2057 = vadd.f32 0.0, %v2056
        %v2058 = vpop.f32.mrb[0].mxu0
        %v2059 = vpop.f32.mrb[0].mxu0
        %v2060 = vadd.f32 0.0, %v2059
        %v2061 = vpop.f32.mrb[0].mxu0
        %2062 = vdwg.mxu0
        %v2063 = vmul.f32 %v2001, 0.125
        %v2064 = vmul.f32 %v2004, 0.125
        %v2065 = vmul.f32 %v2009, 0.125
        %v2066 = vmul.f32 %v2012, 0.125
        %v2067 = vmul.f32 %v2017, 0.125
        %v2068 = vmul.f32 %v2020, 0.125
        %v2069 = vmul.f32 %v2025, 0.125
        %v2070 = vmul.f32 %v2028, 0.125
        %v2071 = vmul.f32 %v2033, 0.125
        %v2072 = vmul.f32 %v2036, 0.125
        %v2073 = vmul.f32 %v2041, 0.125
        %v2074 = vmul.f32 %v2044, 0.125
        %v2075 = vmul.f32 %v2049, 0.125
        %v2076 = vmul.f32 %v2052, 0.125
        %v2077 = vmul.f32 %v2057, 0.125
        %v2078 = vmul.f32 %v2060, 0.125
        %s2079 = scalar_lea.vmem [#allocation2], 128
        %v2080 = vld [vmem:[%s2079] sm:$0xff]
        %v2081 = vld [vmem:[%s2079 + $0x8] sm:$0xff]
        %v2082 = vld [vmem:[%s2079 + $0x10] sm:$0xff]
        %v2083 = vld [vmem:[%s2079 + $0x18] sm:$0xff]
        %v2084 = vld [vmem:[%s2079 + $0x20] sm:$0xff]
        %v2085 = vld [vmem:[%s2079 + $0x28] sm:$0xff]
        %v2086 = vld [vmem:[%s2079 + $0x30] sm:$0xff]
        %v2087 = vld [vmem:[%s2079 + $0x38] sm:$0xff]
        %v2088 = vld [vmem:[%s2079 + $0x40] sm:$0xff]
        %v2089 = vld [vmem:[%s2079 + $0x48] sm:$0xff]
        %v2090 = vld [vmem:[%s2079 + $0x50] sm:$0xff]
        %v2091 = vld [vmem:[%s2079 + $0x58] sm:$0xff]
        %v2092 = vld [vmem:[%s2079 + $0x60] sm:$0xff]
        %v2093 = vld [vmem:[%s2079 + $0x68] sm:$0xff]
        %v2094 = vld [vmem:[%s2079 + $0x70] sm:$0xff]
        %v2095 = vld [vmem:[%s2079 + $0x78] sm:$0xff]
        %2096 = vmax.xlane.f32.xlu0 %v2063
        %v2097 = vpop.xlane.xlu0 %2096
        %2098 = vmax.xlane.f32.xlu0 %v2064
        %v2099 = vpop.xlane.xlu0 %2098
        %2100 = vmax.xlane.f32.xlu0 %v2065
        %v2101 = vpop.xlane.xlu0 %2100
        %2102 = vmax.xlane.f32.xlu0 %v2066
        %v2103 = vpop.xlane.xlu0 %2102
        %2104 = vmax.xlane.f32.xlu0 %v2067
        %v2105 = vpop.xlane.xlu0 %2104
        %2106 = vmax.xlane.f32.xlu0 %v2068
        %v2107 = vpop.xlane.xlu0 %2106
        %2108 = vmax.xlane.f32.xlu0 %v2069
        %v2109 = vpop.xlane.xlu0 %2108
        %2110 = vmax.xlane.f32.xlu0 %v2070
        %v2111 = vpop.xlane.xlu0 %2110
        %2112 = vmax.xlane.f32.xlu0 %v2071
        %v2113 = vpop.xlane.xlu0 %2112
        %2114 = vmax.xlane.f32.xlu0 %v2072
        %v2115 = vpop.xlane.xlu0 %2114
        %2116 = vmax.xlane.f32.xlu0 %v2073
        %v2117 = vpop.xlane.xlu0 %2116
        %2118 = vmax.xlane.f32.xlu0 %v2074
        %v2119 = vpop.xlane.xlu0 %2118
        %2120 = vmax.xlane.f32.xlu0 %v2075
        %v2121 = vpop.xlane.xlu0 %2120
        %2122 = vmax.xlane.f32.xlu0 %v2076
        %v2123 = vpop.xlane.xlu0 %2122
        %2124 = vmax.xlane.f32.xlu0 %v2077
        %v2125 = vpop.xlane.xlu0 %2124
        %2126 = vmax.xlane.f32.xlu0 %v2078
        %v2127 = vpop.xlane.xlu0 %2126
        %v2128 = vmax.f32 %v2080, %v2097
        %v2129 = vmax.f32 %v2081, %v2099
        %v2130 = vmax.f32 %v2082, %v2101
        %v2131 = vmax.f32 %v2083, %v2103
        %v2132 = vmax.f32 %v2084, %v2105
        %v2133 = vmax.f32 %v2085, %v2107
        %v2134 = vmax.f32 %v2086, %v2109
        %v2135 = vmax.f32 %v2087, %v2111
        %v2136 = vmax.f32 %v2088, %v2113
        %v2137 = vmax.f32 %v2089, %v2115
        %v2138 = vmax.f32 %v2090, %v2117
        %v2139 = vmax.f32 %v2091, %v2119
        %v2140 = vmax.f32 %v2092, %v2121
        %v2141 = vmax.f32 %v2093, %v2123
        %v2142 = vmax.f32 %v2094, %v2125
        %v2143 = vmax.f32 %v2095, %v2127
        %v2144 = vsub.f32 %v2080, %v2128
        %v2145 = vsub.f32 %v2081, %v2129
        %v2146 = vsub.f32 %v2082, %v2130
        %v2147 = vsub.f32 %v2083, %v2131
        %v2148 = vsub.f32 %v2084, %v2132
        %v2149 = vsub.f32 %v2085, %v2133
        %v2150 = vsub.f32 %v2086, %v2134
        %v2151 = vsub.f32 %v2087, %v2135
        %v2152 = vsub.f32 %v2088, %v2136
        %v2153 = vsub.f32 %v2089, %v2137
        %v2154 = vsub.f32 %v2090, %v2138
        %v2155 = vsub.f32 %v2091, %v2139
        %v2156 = vsub.f32 %v2092, %v2140
        %v2157 = vsub.f32 %v2093, %v2141
        %v2158 = vsub.f32 %v2094, %v2142
        %v2159 = vsub.f32 %v2095, %v2143
        %v2160 = vmul.f32 %v2144, 1.442695
        %v2161 = vpow.pop %v2160
        %v2162 = vmul.f32 %v2145, 1.442695
        %v2163 = vpow.pop %v2162
        %v2164 = vmul.f32 %v2146, 1.442695
        %v2165 = vpow.pop %v2164
        %v2166 = vmul.f32 %v2147, 1.442695
        %v2167 = vpow.pop %v2166
        %v2168 = vmul.f32 %v2148, 1.442695
        %v2169 = vpow.pop %v2168
        %v2170 = vmul.f32 %v2149, 1.442695
        %v2171 = vpow.pop %v2170
        %v2172 = vmul.f32 %v2150, 1.442695
        %v2173 = vpow.pop %v2172
        %v2174 = vmul.f32 %v2151, 1.442695
        %v2175 = vpow.pop %v2174
        %v2176 = vmul.f32 %v2152, 1.442695
        %v2177 = vpow.pop %v2176
        %v2178 = vmul.f32 %v2153, 1.442695
        %v2179 = vpow.pop %v2178
        %v2180 = vmul.f32 %v2154, 1.442695
        %v2181 = vpow.pop %v2180
        %v2182 = vmul.f32 %v2155, 1.442695
        %v2183 = vpow.pop %v2182
        %v2184 = vmul.f32 %v2156, 1.442695
        %v2185 = vpow.pop %v2184
        %v2186 = vmul.f32 %v2157, 1.442695
        %v2187 = vpow.pop %v2186
        %v2188 = vmul.f32 %v2158, 1.442695
        %v2189 = vpow.pop %v2188
        %v2190 = vmul.f32 %v2159, 1.442695
        %v2191 = vpow.pop %v2190
        %2193 = vset.pattern.permute.xlu0 0
        %2194 = vperm.xlu0 %2193, %v2128
        %v2195 = vpop.permute.xlu0 %2194
        %2198 = vset.pattern.permute.xlu0 0
        %2199 = vperm.xlu0 %2198, %v2129
        %v2200 = vpop.permute.xlu0 %2199
        %2203 = vset.pattern.permute.xlu0 0
        %2204 = vperm.xlu0 %2203, %v2130
        %v2205 = vpop.permute.xlu0 %2204
        %2208 = vset.pattern.permute.xlu0 0
        %2209 = vperm.xlu0 %2208, %v2131
        %v2210 = vpop.permute.xlu0 %2209
        %2213 = vset.pattern.permute.xlu0 0
        %2214 = vperm.xlu0 %2213, %v2132
        %v2215 = vpop.permute.xlu0 %2214
        %2218 = vset.pattern.permute.xlu0 0
        %2219 = vperm.xlu0 %2218, %v2133
        %v2220 = vpop.permute.xlu0 %2219
        %2223 = vset.pattern.permute.xlu0 0
        %2224 = vperm.xlu0 %2223, %v2134
        %v2225 = vpop.permute.xlu0 %2224
        %2228 = vset.pattern.permute.xlu0 0
        %2229 = vperm.xlu0 %2228, %v2135
        %v2230 = vpop.permute.xlu0 %2229
        %2233 = vset.pattern.permute.xlu0 0
        %2234 = vperm.xlu0 %2233, %v2136
        %v2235 = vpop.permute.xlu0 %2234
        %2238 = vset.pattern.permute.xlu0 0
        %2239 = vperm.xlu0 %2238, %v2137
        %v2240 = vpop.permute.xlu0 %2239
        %2243 = vset.pattern.permute.xlu0 0
        %2244 = vperm.xlu0 %2243, %v2138
        %v2245 = vpop.permute.xlu0 %2244
        %2248 = vset.pattern.permute.xlu0 0
        %2249 = vperm.xlu0 %2248, %v2139
        %v2250 = vpop.permute.xlu0 %2249
        %2253 = vset.pattern.permute.xlu0 0
        %2254 = vperm.xlu0 %2253, %v2140
        %v2255 = vpop.permute.xlu0 %2254
        %2258 = vset.pattern.permute.xlu0 0
        %2259 = vperm.xlu0 %2258, %v2141
        %v2260 = vpop.permute.xlu0 %2259
        %2263 = vset.pattern.permute.xlu0 0
        %2264 = vperm.xlu0 %2263, %v2142
        %v2265 = vpop.permute.xlu0 %2264
        %2268 = vset.pattern.permute.xlu0 0
        %2269 = vperm.xlu0 %2268, %v2143
        %v2270 = vpop.permute.xlu0 %2269
        %v2272 = vsub.f32 %v2063, %v2195
        %v2273 = vsub.f32 %v2064, %v2200
        %v2274 = vsub.f32 %v2065, %v2205
        %v2275 = vsub.f32 %v2066, %v2210
        %v2276 = vsub.f32 %v2067, %v2215
        %v2277 = vsub.f32 %v2068, %v2220
        %v2278 = vsub.f32 %v2069, %v2225
        %v2279 = vsub.f32 %v2070, %v2230
        %v2280 = vsub.f32 %v2071, %v2235
        %v2281 = vsub.f32 %v2072, %v2240
        %v2282 = vsub.f32 %v2073, %v2245
        %v2283 = vsub.f32 %v2074, %v2250
        %v2284 = vsub.f32 %v2075, %v2255
        %v2285 = vsub.f32 %v2076, %v2260
        %v2286 = vsub.f32 %v2077, %v2265
        %v2287 = vsub.f32 %v2078, %v2270
        %v2288 = vmul.f32 %v2272, 1.442695
        %v2289 = vpow.pop %v2288
        %v2290 = vmul.f32 %v2273, 1.442695
        %v2291 = vpow.pop %v2290
        %v2292 = vmul.f32 %v2274, 1.442695
        %v2293 = vpow.pop %v2292
        %v2294 = vmul.f32 %v2275, 1.442695
        %v2295 = vpow.pop %v2294
        %v2296 = vmul.f32 %v2276, 1.442695
        %v2297 = vpow.pop %v2296
        %v2298 = vmul.f32 %v2277, 1.442695
        %v2299 = vpow.pop %v2298
        %v2300 = vmul.f32 %v2278, 1.442695
        %v2301 = vpow.pop %v2300
        %v2302 = vmul.f32 %v2279, 1.442695
        %v2303 = vpow.pop %v2302
        %v2304 = vmul.f32 %v2280, 1.442695
        %v2305 = vpow.pop %v2304
        %v2306 = vmul.f32 %v2281, 1.442695
        %v2307 = vpow.pop %v2306
        %v2308 = vmul.f32 %v2282, 1.442695
        %v2309 = vpow.pop %v2308
        %v2310 = vmul.f32 %v2283, 1.442695
        %v2311 = vpow.pop %v2310
        %v2312 = vmul.f32 %v2284, 1.442695
        %v2313 = vpow.pop %v2312
        %v2314 = vmul.f32 %v2285, 1.442695
        %v2315 = vpow.pop %v2314
        %v2316 = vmul.f32 %v2286, 1.442695
        %v2317 = vpow.pop %v2316
        %v2318 = vmul.f32 %v2287, 1.442695
        %v2319 = vpow.pop %v2318
        %s2320 = scalar_lea.vmem [#allocation3], 128
        %v2321 = vld [vmem:[%s2320] sm:$0xff]
        %v2322 = vld [vmem:[%s2320 + $0x8] sm:$0xff]
        %v2323 = vld [vmem:[%s2320 + $0x10] sm:$0xff]
        %v2324 = vld [vmem:[%s2320 + $0x18] sm:$0xff]
        %v2325 = vld [vmem:[%s2320 + $0x20] sm:$0xff]
        %v2326 = vld [vmem:[%s2320 + $0x28] sm:$0xff]
        %v2327 = vld [vmem:[%s2320 + $0x30] sm:$0xff]
        %v2328 = vld [vmem:[%s2320 + $0x38] sm:$0xff]
        %v2329 = vld [vmem:[%s2320 + $0x40] sm:$0xff]
        %v2330 = vld [vmem:[%s2320 + $0x48] sm:$0xff]
        %v2331 = vld [vmem:[%s2320 + $0x50] sm:$0xff]
        %v2332 = vld [vmem:[%s2320 + $0x58] sm:$0xff]
        %v2333 = vld [vmem:[%s2320 + $0x60] sm:$0xff]
        %v2334 = vld [vmem:[%s2320 + $0x68] sm:$0xff]
        %v2335 = vld [vmem:[%s2320 + $0x70] sm:$0xff]
        %v2336 = vld [vmem:[%s2320 + $0x78] sm:$0xff]
        %v2337 = vmul.f32 %v2161, %v2321
        %v2338 = vmul.f32 %v2163, %v2322
        %v2339 = vmul.f32 %v2165, %v2323
        %v2340 = vmul.f32 %v2167, %v2324
        %v2341 = vmul.f32 %v2169, %v2325
        %v2342 = vmul.f32 %v2171, %v2326
        %v2343 = vmul.f32 %v2173, %v2327
        %v2344 = vmul.f32 %v2175, %v2328
        %v2345 = vmul.f32 %v2177, %v2329
        %v2346 = vmul.f32 %v2179, %v2330
        %v2347 = vmul.f32 %v2181, %v2331
        %v2348 = vmul.f32 %v2183, %v2332
        %v2349 = vmul.f32 %v2185, %v2333
        %v2350 = vmul.f32 %v2187, %v2334
        %v2351 = vmul.f32 %v2189, %v2335
        %v2352 = vmul.f32 %v2191, %v2336
        %2353 = vadd.xlane.f32.xlu0 %v2289
        %v2354 = vpop.xlane.xlu0 %2353
        %2355 = vadd.xlane.f32.xlu0 %v2291
        %v2356 = vpop.xlane.xlu0 %2355
        %2357 = vadd.xlane.f32.xlu0 %v2293
        %v2358 = vpop.xlane.xlu0 %2357
        %2359 = vadd.xlane.f32.xlu0 %v2295
        %v2360 = vpop.xlane.xlu0 %2359
        %2361 = vadd.xlane.f32.xlu0 %v2297
        %v2362 = vpop.xlane.xlu0 %2361
        %2363 = vadd.xlane.f32.xlu0 %v2299
        %v2364 = vpop.xlane.xlu0 %2363
        %2365 = vadd.xlane.f32.xlu0 %v2301
        %v2366 = vpop.xlane.xlu0 %2365
        %2367 = vadd.xlane.f32.xlu0 %v2303
        %v2368 = vpop.xlane.xlu0 %2367
        %2369 = vadd.xlane.f32.xlu0 %v2305
        %v2370 = vpop.xlane.xlu0 %2369
        %2371 = vadd.xlane.f32.xlu0 %v2307
        %v2372 = vpop.xlane.xlu0 %2371
        %2373 = vadd.xlane.f32.xlu0 %v2309
        %v2374 = vpop.xlane.xlu0 %2373
        %2375 = vadd.xlane.f32.xlu0 %v2311
        %v2376 = vpop.xlane.xlu0 %2375
        %2377 = vadd.xlane.f32.xlu0 %v2313
        %v2378 = vpop.xlane.xlu0 %2377
        %2379 = vadd.xlane.f32.xlu0 %v2315
        %v2380 = vpop.xlane.xlu0 %2379
        %2381 = vadd.xlane.f32.xlu0 %v2317
        %v2382 = vpop.xlane.xlu0 %2381
        %2383 = vadd.xlane.f32.xlu0 %v2319
        %v2384 = vpop.xlane.xlu0 %2383
        %v2385 = vadd.f32 %v2337, %v2354
        %v2386 = vadd.f32 %v2338, %v2356
        %v2387 = vadd.f32 %v2339, %v2358
        %v2388 = vadd.f32 %v2340, %v2360
        %v2389 = vadd.f32 %v2341, %v2362
        %v2390 = vadd.f32 %v2342, %v2364
        %v2391 = vadd.f32 %v2343, %v2366
        %v2392 = vadd.f32 %v2344, %v2368
        %v2393 = vadd.f32 %v2345, %v2370
        %v2394 = vadd.f32 %v2346, %v2372
        %v2395 = vadd.f32 %v2347, %v2374
        %v2396 = vadd.f32 %v2348, %v2376
        %v2397 = vadd.f32 %v2349, %v2378
        %v2398 = vadd.f32 %v2350, %v2380
        %v2399 = vadd.f32 %v2351, %v2382
        %v2400 = vadd.f32 %v2352, %v2384
        %2401 = vst.msk [vmem:[%s2320] sm:$0xff] %vm1457, %v2385
        %2402 = vst.msk [vmem:[%s2320 + $0x8] sm:$0xff] %vm1457, %v2386
        %2403 = vst.msk [vmem:[%s2320 + $0x10] sm:$0xff] %vm1457, %v2387
        %2404 = vst.msk [vmem:[%s2320 + $0x18] sm:$0xff] %vm1457, %v2388
        %2405 = vst.msk [vmem:[%s2320 + $0x20] sm:$0xff] %vm1457, %v2389
        %2406 = vst.msk [vmem:[%s2320 + $0x28] sm:$0xff] %vm1457, %v2390
        %2407 = vst.msk [vmem:[%s2320 + $0x30] sm:$0xff] %vm1457, %v2391
        %2408 = vst.msk [vmem:[%s2320 + $0x38] sm:$0xff] %vm1457, %v2392
        %2409 = vst.msk [vmem:[%s2320 + $0x40] sm:$0xff] %vm1457, %v2393
        %2410 = vst.msk [vmem:[%s2320 + $0x48] sm:$0xff] %vm1457, %v2394
        %2411 = vst.msk [vmem:[%s2320 + $0x50] sm:$0xff] %vm1457, %v2395
        %2412 = vst.msk [vmem:[%s2320 + $0x58] sm:$0xff] %vm1457, %v2396
        %2413 = vst.msk [vmem:[%s2320 + $0x60] sm:$0xff] %vm1457, %v2397
        %2414 = vst.msk [vmem:[%s2320 + $0x68] sm:$0xff] %vm1457, %v2398
        %2415 = vst.msk [vmem:[%s2320 + $0x70] sm:$0xff] %vm1457, %v2399
        %2416 = vst.msk [vmem:[%s2320 + $0x78] sm:$0xff] %vm1457, %v2400
        %s2417 = scalar_lea.vmem [#allocation4], 128
        %v2418 = vld [vmem:[%s2417] sm:$0xff]
        %v2419 = vld [vmem:[%s2417 + $0x8] sm:$0xff]
        %v2420 = vld [vmem:[%s2417 + $0x10] sm:$0xff]
        %v2421 = vld [vmem:[%s2417 + $0x18] sm:$0xff]
        %v2422 = vld [vmem:[%s2417 + $0x20] sm:$0xff]
        %v2423 = vld [vmem:[%s2417 + $0x28] sm:$0xff]
        %v2424 = vld [vmem:[%s2417 + $0x30] sm:$0xff]
        %v2425 = vld [vmem:[%s2417 + $0x38] sm:$0xff]
        %v2426 = vld [vmem:[%s2417 + $0x40] sm:$0xff]
        %v2427 = vld [vmem:[%s2417 + $0x48] sm:$0xff]
        %v2428 = vld [vmem:[%s2417 + $0x50] sm:$0xff]
        %v2429 = vld [vmem:[%s2417 + $0x58] sm:$0xff]
        %v2430 = vld [vmem:[%s2417 + $0x60] sm:$0xff]
        %v2431 = vld [vmem:[%s2417 + $0x68] sm:$0xff]
        %v2432 = vld [vmem:[%s2417 + $0x70] sm:$0xff]
        %v2433 = vld [vmem:[%s2417 + $0x78] sm:$0xff]
        %2435 = vset.pattern.permute.xlu0 0
        %2436 = vperm.xlu0 %2435, %v2161
        %v2437 = vpop.permute.xlu0 %2436
        %2440 = vset.pattern.permute.xlu0 0
        %2441 = vperm.xlu0 %2440, %v2163
        %v2442 = vpop.permute.xlu0 %2441
        %2445 = vset.pattern.permute.xlu0 0
        %2446 = vperm.xlu0 %2445, %v2165
        %v2447 = vpop.permute.xlu0 %2446
        %2450 = vset.pattern.permute.xlu0 0
        %2451 = vperm.xlu0 %2450, %v2167
        %v2452 = vpop.permute.xlu0 %2451
        %2455 = vset.pattern.permute.xlu0 0
        %2456 = vperm.xlu0 %2455, %v2169
        %v2457 = vpop.permute.xlu0 %2456
        %2460 = vset.pattern.permute.xlu0 0
        %2461 = vperm.xlu0 %2460, %v2171
        %v2462 = vpop.permute.xlu0 %2461
        %2465 = vset.pattern.permute.xlu0 0
        %2466 = vperm.xlu0 %2465, %v2173
        %v2467 = vpop.permute.xlu0 %2466
        %2470 = vset.pattern.permute.xlu0 0
        %2471 = vperm.xlu0 %2470, %v2175
        %v2472 = vpop.permute.xlu0 %2471
        %2475 = vset.pattern.permute.xlu0 0
        %2476 = vperm.xlu0 %2475, %v2177
        %v2477 = vpop.permute.xlu0 %2476
        %2480 = vset.pattern.permute.xlu0 0
        %2481 = vperm.xlu0 %2480, %v2179
        %v2482 = vpop.permute.xlu0 %2481
        %2485 = vset.pattern.permute.xlu0 0
        %2486 = vperm.xlu0 %2485, %v2181
        %v2487 = vpop.permute.xlu0 %2486
        %2490 = vset.pattern.permute.xlu0 0
        %2491 = vperm.xlu0 %2490, %v2183
        %v2492 = vpop.permute.xlu0 %2491
        %2495 = vset.pattern.permute.xlu0 0
        %2496 = vperm.xlu0 %2495, %v2185
        %v2497 = vpop.permute.xlu0 %2496
        %2500 = vset.pattern.permute.xlu0 0
        %2501 = vperm.xlu0 %2500, %v2187
        %v2502 = vpop.permute.xlu0 %2501
        %2505 = vset.pattern.permute.xlu0 0
        %2506 = vperm.xlu0 %2505, %v2189
        %v2507 = vpop.permute.xlu0 %2506
        %2510 = vset.pattern.permute.xlu0 0
        %2511 = vperm.xlu0 %2510, %v2191
        %v2512 = vpop.permute.xlu0 %2511
        %v2514 = vmul.f32 %v2437, %v2418
        %v2515 = vmul.f32 %v2442, %v2419
        %v2516 = vmul.f32 %v2447, %v2420
        %v2517 = vmul.f32 %v2452, %v2421
        %v2518 = vmul.f32 %v2457, %v2422
        %v2519 = vmul.f32 %v2462, %v2423
        %v2520 = vmul.f32 %v2467, %v2424
        %v2521 = vmul.f32 %v2472, %v2425
        %v2522 = vmul.f32 %v2477, %v2426
        %v2523 = vmul.f32 %v2482, %v2427
        %v2524 = vmul.f32 %v2487, %v2428
        %v2525 = vmul.f32 %v2492, %v2429
        %v2526 = vmul.f32 %v2497, %v2430
        %v2527 = vmul.f32 %v2502, %v2431
        %v2528 = vmul.f32 %v2507, %v2432
        %v2529 = vmul.f32 %v2512, %v2433
        %v2530 = vpack.c.bf16 %v2291, %v2289
        %v2531 = vpack.c.bf16 %v2295, %v2293
        %v2532 = vpack.c.bf16 %v2299, %v2297
        %v2533 = vpack.c.bf16 %v2303, %v2301
        %v2534 = vpack.c.bf16 %v2307, %v2305
        %v2535 = vpack.c.bf16 %v2311, %v2309
        %v2536 = vpack.c.bf16 %v2315, %v2313
        %v2537 = vpack.c.bf16 %v2319, %v2317
        %v2554 = vunpack.c.l.b16 %v1822
        %v2555 = vunpack.c.l.b16 %v1823
        %v2556 = vunpack.c.l.b16 %v1824
        %v2557 = vunpack.c.l.b16 %v1825
        %v2558 = vunpack.c.l.b16 %v1826
        %v2559 = vunpack.c.l.b16 %v1827
        %v2560 = vunpack.c.l.b16 %v1828
        %v2561 = vunpack.c.l.b16 %v1829
        %v2562 = vunpack.c.l.b16 %v1830
        %v2563 = vunpack.c.l.b16 %v1831
        %v2564 = vunpack.c.l.b16 %v1832
        %v2565 = vunpack.c.l.b16 %v1833
        %v2566 = vunpack.c.l.b16 %v1834
        %v2567 = vunpack.c.l.b16 %v1835
        %v2568 = vunpack.c.l.b16 %v1836
        %v2569 = vunpack.c.l.b16 %v1837
        %v2570 = vpack.c.b16 %v2555, %v2554
        %v2571 = vpack.c.b16 %v2557, %v2556
        %v2572 = vpack.c.b16 %v2559, %v2558
        %v2573 = vpack.c.b16 %v2561, %v2560
        %v2574 = vpack.c.b16 %v2563, %v2562
        %v2575 = vpack.c.b16 %v2565, %v2564
        %v2576 = vpack.c.b16 %v2567, %v2566
        %v2577 = vpack.c.b16 %v2569, %v2568
        %2586 = vmatprep.subr.bf16.mxu0 0
        %2587 = vmatpush1.bf16.msra.mxu0 %v2570
        %2588 = vmatprep.subr.bf16.mxu0 0
        %2589 = vmatpush1.bf16.msra.mxu0 %v2571
        %2590 = vmatprep.subr.bf16.mxu0 0
        %2591 = vmatpush1.bf16.msra.mxu0 %v2572
        %2592 = vmatprep.subr.bf16.mxu0 0
        %2593 = vmatpush1.bf16.msra.mxu0 %v2573
        %2594 = vmatprep.subr.bf16.mxu0 0
        %2595 = vmatpush1.bf16.msra.mxu0 %v2574
        %2596 = vmatprep.subr.bf16.mxu0 0
        %2597 = vmatpush1.bf16.msra.mxu0 %v2575
        %2598 = vmatprep.subr.bf16.mxu0 0
        %2599 = vmatpush1.bf16.msra.mxu0 %v2576
        %2600 = vmatprep.subr.bf16.mxu0 0
        %2601 = vmatpush1.bf16.msra.mxu0 %v2577
        %2602 = vmatprep.subr.bf16.mxu0 0
        %2603 = vmatpush1.bf16.msra.mxu0 0
        %2604 = vmatprep.subr.bf16.mxu0 0
        %2605 = vmatpush1.bf16.msra.mxu0 0
        %2606 = vmatprep.subr.bf16.mxu0 0
        %2607 = vmatpush1.bf16.msra.mxu0 0
        %2608 = vmatprep.subr.bf16.mxu0 0
        %2609 = vmatpush1.bf16.msra.mxu0 0
        %2610 = vmatprep.subr.bf16.mxu0 0
        %2611 = vmatpush1.bf16.msra.mxu0 0
        %2612 = vmatprep.subr.bf16.mxu0 0
        %2613 = vmatpush1.bf16.msra.mxu0 0
        %2614 = vmatprep.subr.bf16.mxu0 0
        %2615 = vmatpush1.bf16.msra.mxu0 0
        %2616 = vmatprep.subr.bf16.mxu0 0
        %2617 = vmatpush1.bf16.msra.mxu0 0
        %2618 = vmatprep.mubr.bf16.mxu0 0
        %2619 = vmatmul.mubr.bf16.gmra.mrb[0].mxu0 %v2530
        %v2620 = vpop.f32.mrb[0].mxu0
        %v2621 = vadd.f32 0.0, %v2620
        %v2622 = vpop.f32.mrb[0].mxu0
        %v2623 = vpop.f32.mrb[0].mxu0
        %v2624 = vadd.f32 0.0, %v2623
        %v2625 = vpop.f32.mrb[0].mxu0
        %2626 = vmatprep.mubr.bf16.mxu0 0
        %2627 = vmatmul.mubr.bf16.gmra.mrb[0].mxu0 %v2531
        %v2628 = vpop.f32.mrb[0].mxu0
        %v2629 = vadd.f32 0.0, %v2628
        %v2630 = vpop.f32.mrb[0].mxu0
        %v2631 = vpop.f32.mrb[0].mxu0
        %v2632 = vadd.f32 0.0, %v2631
        %v2633 = vpop.f32.mrb[0].mxu0
        %2634 = vmatprep.mubr.bf16.mxu0 0
        %2635 = vmatmul.mubr.bf16.gmra.mrb[0].mxu0 %v2532
        %v2636 = vpop.f32.mrb[0].mxu0
        %v2637 = vadd.f32 0.0, %v2636
        %v2638 = vpop.f32.mrb[0].mxu0
        %v2639 = vpop.f32.mrb[0].mxu0
        %v2640 = vadd.f32 0.0, %v2639
        %v2641 = vpop.f32.mrb[0].mxu0
        %2642 = vmatprep.mubr.bf16.mxu0 0
        %2643 = vmatmul.mubr.bf16.gmra.mrb[0].mxu0 %v2533
        %v2644 = vpop.f32.mrb[0].mxu0
        %v2645 = vadd.f32 0.0, %v2644
        %v2646 = vpop.f32.mrb[0].mxu0
        %v2647 = vpop.f32.mrb[0].mxu0
        %v2648 = vadd.f32 0.0, %v2647
        %v2649 = vpop.f32.mrb[0].mxu0
        %2650 = vmatprep.mubr.bf16.mxu0 0
        %2651 = vmatmul.mubr.bf16.gmra.mrb[0].mxu0 %v2534
        %v2652 = vpop.f32.mrb[0].mxu0
        %v2653 = vadd.f32 0.0, %v2652
        %v2654 = vpop.f32.mrb[0].mxu0
        %v2655 = vpop.f32.mrb[0].mxu0
        %v2656 = vadd.f32 0.0, %v2655
        %v2657 = vpop.f32.mrb[0].mxu0
        %2658 = vmatprep.mubr.bf16.mxu0 0
        %2659 = vmatmul.mubr.bf16.gmra.mrb[0].mxu0 %v2535
        %v2660 = vpop.f32.mrb[0].mxu0
        %v2661 = vadd.f32 0.0, %v2660
        %v2662 = vpop.f32.mrb[0].mxu0
        %v2663 = vpop.f32.mrb[0].mxu0
        %v2664 = vadd.f32 0.0, %v2663
        %v2665 = vpop.f32.mrb[0].mxu0
        %2666 = vmatprep.mubr.bf16.mxu0 0
        %2667 = vmatmul.mubr.bf16.gmra.mrb[0].mxu0 %v2536
        %v2668 = vpop.f32.mrb[0].mxu0
        %v2669 = vadd.f32 0.0, %v2668
        %v2670 = vpop.f32.mrb[0].mxu0
        %v2671 = vpop.f32.mrb[0].mxu0
        %v2672 = vadd.f32 0.0, %v2671
        %v2673 = vpop.f32.mrb[0].mxu0
        %2674 = vmatprep.mubr.bf16.mxu0 0
        %2675 = vmatmul.mubr.bf16.gmra.mrb[0].mxu0 %v2537
        %v2676 = vpop.f32.mrb[0].mxu0
        %v2677 = vadd.f32 0.0, %v2676
        %v2678 = vpop.f32.mrb[0].mxu0
        %v2679 = vpop.f32.mrb[0].mxu0
        %v2680 = vadd.f32 0.0, %v2679
        %v2681 = vpop.f32.mrb[0].mxu0
        %2682 = vdwg.mxu0
        %v2683 = vadd.f32 %v2514, %v2621
        %v2684 = vadd.f32 %v2515, %v2624
        %v2685 = vadd.f32 %v2516, %v2629
        %v2686 = vadd.f32 %v2517, %v2632
        %v2687 = vadd.f32 %v2518, %v2637
        %v2688 = vadd.f32 %v2519, %v2640
        %v2689 = vadd.f32 %v2520, %v2645
        %v2690 = vadd.f32 %v2521, %v2648
        %v2691 = vadd.f32 %v2522, %v2653
        %v2692 = vadd.f32 %v2523, %v2656
        %v2693 = vadd.f32 %v2524, %v2661
        %v2694 = vadd.f32 %v2525, %v2664
        %v2695 = vadd.f32 %v2526, %v2669
        %v2696 = vadd.f32 %v2527, %v2672
        %v2697 = vadd.f32 %v2528, %v2677
        %v2698 = vadd.f32 %v2529, %v2680
        %2699 = vst.msk [vmem:[%s2417] sm:$0xff] %vm975, %v2683
        %2700 = vst.msk [vmem:[%s2417 + $0x8] sm:$0xff] %vm975, %v2684
        %2701 = vst.msk [vmem:[%s2417 + $0x10] sm:$0xff] %vm975, %v2685
        %2702 = vst.msk [vmem:[%s2417 + $0x18] sm:$0xff] %vm975, %v2686
        %2703 = vst.msk [vmem:[%s2417 + $0x20] sm:$0xff] %vm975, %v2687
        %2704 = vst.msk [vmem:[%s2417 + $0x28] sm:$0xff] %vm975, %v2688
        %2705 = vst.msk [vmem:[%s2417 + $0x30] sm:$0xff] %vm975, %v2689
        %2706 = vst.msk [vmem:[%s2417 + $0x38] sm:$0xff] %vm975, %v2690
        %2707 = vst.msk [vmem:[%s2417 + $0x40] sm:$0xff] %vm975, %v2691
        %2708 = vst.msk [vmem:[%s2417 + $0x48] sm:$0xff] %vm975, %v2692
        %2709 = vst.msk [vmem:[%s2417 + $0x50] sm:$0xff] %vm975, %v2693
        %2710 = vst.msk [vmem:[%s2417 + $0x58] sm:$0xff] %vm975, %v2694
        %2711 = vst.msk [vmem:[%s2417 + $0x60] sm:$0xff] %vm975, %v2695
        %2712 = vst.msk [vmem:[%s2417 + $0x68] sm:$0xff] %vm975, %v2696
        %2713 = vst.msk [vmem:[%s2417 + $0x70] sm:$0xff] %vm975, %v2697
        %2714 = vst.msk [vmem:[%s2417 + $0x78] sm:$0xff] %vm975, %v2698
        %2715 = vst.msk [vmem:[%s2079] sm:$0xff] %vm1457, %v2128
        %2716 = vst.msk [vmem:[%s2079 + $0x8] sm:$0xff] %vm1457, %v2129
        %2717 = vst.msk [vmem:[%s2079 + $0x10] sm:$0xff] %vm1457, %v2130
        %2718 = vst.msk [vmem:[%s2079 + $0x18] sm:$0xff] %vm1457, %v2131
        %2719 = vst.msk [vmem:[%s2079 + $0x20] sm:$0xff] %vm1457, %v2132
        %2720 = vst.msk [vmem:[%s2079 + $0x28] sm:$0xff] %vm1457, %v2133
        %2721 = vst.msk [vmem:[%s2079 + $0x30] sm:$0xff] %vm1457, %v2134
        %2722 = vst.msk [vmem:[%s2079 + $0x38] sm:$0xff] %vm1457, %v2135
        %2723 = vst.msk [vmem:[%s2079 + $0x40] sm:$0xff] %vm1457, %v2136
        %2724 = vst.msk [vmem:[%s2079 + $0x48] sm:$0xff] %vm1457, %v2137
        %2725 = vst.msk [vmem:[%s2079 + $0x50] sm:$0xff] %vm1457, %v2138
        %2726 = vst.msk [vmem:[%s2079 + $0x58] sm:$0xff] %vm1457, %v2139
        %2727 = vst.msk [vmem:[%s2079 + $0x60] sm:$0xff] %vm1457, %v2140
        %2728 = vst.msk [vmem:[%s2079 + $0x68] sm:$0xff] %vm1457, %v2141
        %2729 = vst.msk [vmem:[%s2079 + $0x70] sm:$0xff] %vm1457, %v2142
        %2730 = vst.msk [vmem:[%s2079 + $0x78] sm:$0xff] %vm1457, %v2143
        %p2731 = scmp.eq.s32.totalorder %s24, 1
        // Predicated region
        $region160: #{tpu_custom_call.1} parent=142 // pred_check
          %p2732 = pneg %p2731
        $region161: #{tpu_custom_call.1} parent=142 // pred_check_branch
          %2734 = sbr.rel (%p2732) target = $region163
        $region162: #{tpu_custom_call.1} parent=142 // pred_region
          %v2735 = vld [vmem:[#allocation3] sm:$0xff]
          %v2736 = vld [vmem:[#allocation3 + $0x8] sm:$0xff]
          %v2737 = vld [vmem:[#allocation3 + $0x10] sm:$0xff]
          %v2738 = vld [vmem:[#allocation3 + $0x18] sm:$0xff]
          %v2739 = vld [vmem:[#allocation3 + $0x20] sm:$0xff]
          %v2740 = vld [vmem:[#allocation3 + $0x28] sm:$0xff]
          %v2741 = vld [vmem:[#allocation3 + $0x30] sm:$0xff]
          %v2742 = vld [vmem:[#allocation3 + $0x38] sm:$0xff]
          %v2743 = vld [vmem:[#allocation3 + $0x40] sm:$0xff]
          %v2744 = vld [vmem:[#allocation3 + $0x48] sm:$0xff]
          %v2745 = vld [vmem:[#allocation3 + $0x50] sm:$0xff]
          %v2746 = vld [vmem:[#allocation3 + $0x58] sm:$0xff]
          %v2747 = vld [vmem:[#allocation3 + $0x60] sm:$0xff]
          %v2748 = vld [vmem:[#allocation3 + $0x68] sm:$0xff]
          %v2749 = vld [vmem:[#allocation3 + $0x70] sm:$0xff]
          %v2750 = vld [vmem:[#allocation3 + $0x78] sm:$0xff]
          %v2751 = vrcp.pop %v2735
          %v2752 = vrcp.pop %v2736
          %v2753 = vrcp.pop %v2737
          %v2754 = vrcp.pop %v2738
          %v2755 = vrcp.pop %v2739
          %v2756 = vrcp.pop %v2740
          %v2757 = vrcp.pop %v2741
          %v2758 = vrcp.pop %v2742
          %v2759 = vrcp.pop %v2743
          %v2760 = vrcp.pop %v2744
          %v2761 = vrcp.pop %v2745
          %v2762 = vrcp.pop %v2746
          %v2763 = vrcp.pop %v2747
          %v2764 = vrcp.pop %v2748
          %v2765 = vrcp.pop %v2749
          %v2766 = vrcp.pop %v2750
          %v2767 = vld [vmem:[#allocation4] sm:$0xff]
          %v2768 = vld [vmem:[#allocation4 + $0x8] sm:$0xff]
          %v2769 = vld [vmem:[#allocation4 + $0x10] sm:$0xff]
          %v2770 = vld [vmem:[#allocation4 + $0x18] sm:$0xff]
          %v2771 = vld [vmem:[#allocation4 + $0x20] sm:$0xff]
          %v2772 = vld [vmem:[#allocation4 + $0x28] sm:$0xff]
          %v2773 = vld [vmem:[#allocation4 + $0x30] sm:$0xff]
          %v2774 = vld [vmem:[#allocation4 + $0x38] sm:$0xff]
          %v2775 = vld [vmem:[#allocation4 + $0x40] sm:$0xff]
          %v2776 = vld [vmem:[#allocation4 + $0x48] sm:$0xff]
          %v2777 = vld [vmem:[#allocation4 + $0x50] sm:$0xff]
          %v2778 = vld [vmem:[#allocation4 + $0x58] sm:$0xff]
          %v2779 = vld [vmem:[#allocation4 + $0x60] sm:$0xff]
          %v2780 = vld [vmem:[#allocation4 + $0x68] sm:$0xff]
          %v2781 = vld [vmem:[#allocation4 + $0x70] sm:$0xff]
          %v2782 = vld [vmem:[#allocation4 + $0x78] sm:$0xff]
          %2784 = vset.pattern.permute.xlu0 0
          %2785 = vperm.xlu0 %2784, %v2751
          %v2786 = vpop.permute.xlu0 %2785
          %2789 = vset.pattern.permute.xlu0 0
          %2790 = vperm.xlu0 %2789, %v2752
          %v2791 = vpop.permute.xlu0 %2790
          %2794 = vset.pattern.permute.xlu0 0
          %2795 = vperm.xlu0 %2794, %v2753
          %v2796 = vpop.permute.xlu0 %2795
          %2799 = vset.pattern.permute.xlu0 0
          %2800 = vperm.xlu0 %2799, %v2754
          %v2801 = vpop.permute.xlu0 %2800
          %2804 = vset.pattern.permute.xlu0 0
          %2805 = vperm.xlu0 %2804, %v2755
          %v2806 = vpop.permute.xlu0 %2805
          %2809 = vset.pattern.permute.xlu0 0
          %2810 = vperm.xlu0 %2809, %v2756
          %v2811 = vpop.permute.xlu0 %2810
          %2814 = vset.pattern.permute.xlu0 0
          %2815 = vperm.xlu0 %2814, %v2757
          %v2816 = vpop.permute.xlu0 %2815
          %2819 = vset.pattern.permute.xlu0 0
          %2820 = vperm.xlu0 %2819, %v2758
          %v2821 = vpop.permute.xlu0 %2820
          %2824 = vset.pattern.permute.xlu0 0
          %2825 = vperm.xlu0 %2824, %v2759
          %v2826 = vpop.permute.xlu0 %2825
          %2829 = vset.pattern.permute.xlu0 0
          %2830 = vperm.xlu0 %2829, %v2760
          %v2831 = vpop.permute.xlu0 %2830
          %2834 = vset.pattern.permute.xlu0 0
          %2835 = vperm.xlu0 %2834, %v2761
          %v2836 = vpop.permute.xlu0 %2835
          %2839 = vset.pattern.permute.xlu0 0
          %2840 = vperm.xlu0 %2839, %v2762
          %v2841 = vpop.permute.xlu0 %2840
          %2844 = vset.pattern.permute.xlu0 0
          %2845 = vperm.xlu0 %2844, %v2763
          %v2846 = vpop.permute.xlu0 %2845
          %2849 = vset.pattern.permute.xlu0 0
          %2850 = vperm.xlu0 %2849, %v2764
          %v2851 = vpop.permute.xlu0 %2850
          %2854 = vset.pattern.permute.xlu0 0
          %2855 = vperm.xlu0 %2854, %v2765
          %v2856 = vpop.permute.xlu0 %2855
          %2859 = vset.pattern.permute.xlu0 0
          %2860 = vperm.xlu0 %2859, %v2766
          %v2861 = vpop.permute.xlu0 %2860
          %v2863 = vmul.f32 %v2767, %v2786
          %v2864 = vmul.f32 %v2768, %v2791
          %v2865 = vmul.f32 %v2769, %v2796
          %v2866 = vmul.f32 %v2770, %v2801
          %v2867 = vmul.f32 %v2771, %v2806
          %v2868 = vmul.f32 %v2772, %v2811
          %v2869 = vmul.f32 %v2773, %v2816
          %v2870 = vmul.f32 %v2774, %v2821
          %v2871 = vmul.f32 %v2775, %v2826
          %v2872 = vmul.f32 %v2776, %v2831
          %v2873 = vmul.f32 %v2777, %v2836
          %v2874 = vmul.f32 %v2778, %v2841
          %v2875 = vmul.f32 %v2779, %v2846
          %v2876 = vmul.f32 %v2780, %v2851
          %v2877 = vmul.f32 %v2781, %v2856
          %v2878 = vmul.f32 %v2782, %v2861
          %2879 = vst.msk [vmem:[%s739] sm:$0xff] %vm975, %v2863
          %2880 = vst.msk [vmem:[%s739 + $0x8] sm:$0xff] %vm975, %v2864
          %2881 = vst.msk [vmem:[%s739 + $0x10] sm:$0xff] %vm975, %v2865
          %2882 = vst.msk [vmem:[%s739 + $0x18] sm:$0xff] %vm975, %v2866
          %2883 = vst.msk [vmem:[%s739 + $0x20] sm:$0xff] %vm975, %v2867
          %2884 = vst.msk [vmem:[%s739 + $0x28] sm:$0xff] %vm975, %v2868
          %2885 = vst.msk [vmem:[%s739 + $0x30] sm:$0xff] %vm975, %v2869
          %2886 = vst.msk [vmem:[%s739 + $0x38] sm:$0xff] %vm975, %v2870
          %2887 = vst.msk [vmem:[%s739 + $0x40] sm:$0xff] %vm975, %v2871
          %2888 = vst.msk [vmem:[%s739 + $0x48] sm:$0xff] %vm975, %v2872
          %2889 = vst.msk [vmem:[%s739 + $0x50] sm:$0xff] %vm975, %v2873
          %2890 = vst.msk [vmem:[%s739 + $0x58] sm:$0xff] %vm975, %v2874
          %2891 = vst.msk [vmem:[%s739 + $0x60] sm:$0xff] %vm975, %v2875
          %2892 = vst.msk [vmem:[%s739 + $0x68] sm:$0xff] %vm975, %v2876
          %2893 = vst.msk [vmem:[%s739 + $0x70] sm:$0xff] %vm975, %v2877
          %2894 = vst.msk [vmem:[%s739 + $0x78] sm:$0xff] %vm975, %v2878
          %v2895 = vld [vmem:[%s2320] sm:$0xff]
          %v2896 = vld [vmem:[%s2320 + $0x8] sm:$0xff]
          %v2897 = vld [vmem:[%s2320 + $0x10] sm:$0xff]
          %v2898 = vld [vmem:[%s2320 + $0x18] sm:$0xff]
          %v2899 = vld [vmem:[%s2320 + $0x20] sm:$0xff]
          %v2900 = vld [vmem:[%s2320 + $0x28] sm:$0xff]
          %v2901 = vld [vmem:[%s2320 + $0x30] sm:$0xff]
          %v2902 = vld [vmem:[%s2320 + $0x38] sm:$0xff]
          %v2903 = vld [vmem:[%s2320 + $0x40] sm:$0xff]
          %v2904 = vld [vmem:[%s2320 + $0x48] sm:$0xff]
          %v2905 = vld [vmem:[%s2320 + $0x50] sm:$0xff]
          %v2906 = vld [vmem:[%s2320 + $0x58] sm:$0xff]
          %v2907 = vld [vmem:[%s2320 + $0x60] sm:$0xff]
          %v2908 = vld [vmem:[%s2320 + $0x68] sm:$0xff]
          %v2909 = vld [vmem:[%s2320 + $0x70] sm:$0xff]
          %v2910 = vld [vmem:[%s2320 + $0x78] sm:$0xff]
          %v2911 = vrcp.pop %v2895
          %v2912 = vrcp.pop %v2896
          %v2913 = vrcp.pop %v2897
          %v2914 = vrcp.pop %v2898
          %v2915 = vrcp.pop %v2899
          %v2916 = vrcp.pop %v2900
          %v2917 = vrcp.pop %v2901
          %v2918 = vrcp.pop %v2902
          %v2919 = vrcp.pop %v2903
          %v2920 = vrcp.pop %v2904
          %v2921 = vrcp.pop %v2905
          %v2922 = vrcp.pop %v2906
          %v2923 = vrcp.pop %v2907
          %v2924 = vrcp.pop %v2908
          %v2925 = vrcp.pop %v2909
          %v2926 = vrcp.pop %v2910
          %v2927 = vld [vmem:[%s2417] sm:$0xff]
          %v2928 = vld [vmem:[%s2417 + $0x8] sm:$0xff]
          %v2929 = vld [vmem:[%s2417 + $0x10] sm:$0xff]
          %v2930 = vld [vmem:[%s2417 + $0x18] sm:$0xff]
          %v2931 = vld [vmem:[%s2417 + $0x20] sm:$0xff]
          %v2932 = vld [vmem:[%s2417 + $0x28] sm:$0xff]
          %v2933 = vld [vmem:[%s2417 + $0x30] sm:$0xff]
          %v2934 = vld [vmem:[%s2417 + $0x38] sm:$0xff]
          %v2935 = vld [vmem:[%s2417 + $0x40] sm:$0xff]
          %v2936 = vld [vmem:[%s2417 + $0x48] sm:$0xff]
          %v2937 = vld [vmem:[%s2417 + $0x50] sm:$0xff]
          %v2938 = vld [vmem:[%s2417 + $0x58] sm:$0xff]
          %v2939 = vld [vmem:[%s2417 + $0x60] sm:$0xff]
          %v2940 = vld [vmem:[%s2417 + $0x68] sm:$0xff]
          %v2941 = vld [vmem:[%s2417 + $0x70] sm:$0xff]
          %v2942 = vld [vmem:[%s2417 + $0x78] sm:$0xff]
          %2944 = vset.pattern.permute.xlu0 0
          %2945 = vperm.xlu0 %2944, %v2911
          %v2946 = vpop.permute.xlu0 %2945
          %2949 = vset.pattern.permute.xlu0 0
          %2950 = vperm.xlu0 %2949, %v2912
          %v2951 = vpop.permute.xlu0 %2950
          %2954 = vset.pattern.permute.xlu0 0
          %2955 = vperm.xlu0 %2954, %v2913
          %v2956 = vpop.permute.xlu0 %2955
          %2959 = vset.pattern.permute.xlu0 0
          %2960 = vperm.xlu0 %2959, %v2914
          %v2961 = vpop.permute.xlu0 %2960
          %2964 = vset.pattern.permute.xlu0 0
          %2965 = vperm.xlu0 %2964, %v2915
          %v2966 = vpop.permute.xlu0 %2965
          %2969 = vset.pattern.permute.xlu0 0
          %2970 = vperm.xlu0 %2969, %v2916
          %v2971 = vpop.permute.xlu0 %2970
          %2974 = vset.pattern.permute.xlu0 0
          %2975 = vperm.xlu0 %2974, %v2917
          %v2976 = vpop.permute.xlu0 %2975
          %2979 = vset.pattern.permute.xlu0 0
          %2980 = vperm.xlu0 %2979, %v2918
          %v2981 = vpop.permute.xlu0 %2980
          %2984 = vset.pattern.permute.xlu0 0
          %2985 = vperm.xlu0 %2984, %v2919
          %v2986 = vpop.permute.xlu0 %2985
          %2989 = vset.pattern.permute.xlu0 0
          %2990 = vperm.xlu0 %2989, %v2920
          %v2991 = vpop.permute.xlu0 %2990
          %2994 = vset.pattern.permute.xlu0 0
          %2995 = vperm.xlu0 %2994, %v2921
          %v2996 = vpop.permute.xlu0 %2995
          %2999 = vset.pattern.permute.xlu0 0
          %3000 = vperm.xlu0 %2999, %v2922
          %v3001 = vpop.permute.xlu0 %3000
          %3004 = vset.pattern.permute.xlu0 0
          %3005 = vperm.xlu0 %3004, %v2923
          %v3006 = vpop.permute.xlu0 %3005
          %3009 = vset.pattern.permute.xlu0 0
          %3010 = vperm.xlu0 %3009, %v2924
          %v3011 = vpop.permute.xlu0 %3010
          %3014 = vset.pattern.permute.xlu0 0
          %3015 = vperm.xlu0 %3014, %v2925
          %v3016 = vpop.permute.xlu0 %3015
          %3019 = vset.pattern.permute.xlu0 0
          %3020 = vperm.xlu0 %3019, %v2926
          %v3021 = vpop.permute.xlu0 %3020
          %v3023 = vmul.f32 %v2927, %v2946
          %v3024 = vmul.f32 %v2928, %v2951
          %v3025 = vmul.f32 %v2929, %v2956
          %v3026 = vmul.f32 %v2930, %v2961
          %v3027 = vmul.f32 %v2931, %v2966
          %v3028 = vmul.f32 %v2932, %v2971
          %v3029 = vmul.f32 %v2933, %v2976
          %v3030 = vmul.f32 %v2934, %v2981
          %v3031 = vmul.f32 %v2935, %v2986
          %v3032 = vmul.f32 %v2936, %v2991
          %v3033 = vmul.f32 %v2937, %v2996
          %v3034 = vmul.f32 %v2938, %v3001
          %v3035 = vmul.f32 %v2939, %v3006
          %v3036 = vmul.f32 %v2940, %v3011
          %v3037 = vmul.f32 %v2941, %v3016
          %v3038 = vmul.f32 %v2942, %v3021
          %3055 = vrot.lane.b32.xlu0 %v3023, 64
          %v3056 = vpop.permute.xlu0 %3055
          %3057 = vrot.lane.b32.xlu0 %v3024, 64
          %v3058 = vpop.permute.xlu0 %3057
          %3059 = vrot.lane.b32.xlu0 %v3025, 64
          %v3060 = vpop.permute.xlu0 %3059
          %3061 = vrot.lane.b32.xlu0 %v3026, 64
          %v3062 = vpop.permute.xlu0 %3061
          %3063 = vrot.lane.b32.xlu0 %v3027, 64
          %v3064 = vpop.permute.xlu0 %3063
          %3065 = vrot.lane.b32.xlu0 %v3028, 64
          %v3066 = vpop.permute.xlu0 %3065
          %3067 = vrot.lane.b32.xlu0 %v3029, 64
          %v3068 = vpop.permute.xlu0 %3067
          %3069 = vrot.lane.b32.xlu0 %v3030, 64
          %v3070 = vpop.permute.xlu0 %3069
          %3071 = vrot.lane.b32.xlu0 %v3031, 64
          %v3072 = vpop.permute.xlu0 %3071
          %3073 = vrot.lane.b32.xlu0 %v3032, 64
          %v3074 = vpop.permute.xlu0 %3073
          %3075 = vrot.lane.b32.xlu0 %v3033, 64
          %v3076 = vpop.permute.xlu0 %3075
          %3077 = vrot.lane.b32.xlu0 %v3034, 64
          %v3078 = vpop.permute.xlu0 %3077
          %3079 = vrot.lane.b32.xlu0 %v3035, 64
          %v3080 = vpop.permute.xlu0 %3079
          %3081 = vrot.lane.b32.xlu0 %v3036, 64
          %v3082 = vpop.permute.xlu0 %3081
          %3083 = vrot.lane.b32.xlu0 %v3037, 64
          %v3084 = vpop.permute.xlu0 %3083
          %3085 = vrot.lane.b32.xlu0 %v3038, 64
          %v3086 = vpop.permute.xlu0 %3085
          %vm3103 = vcmask 1048064
          %3104 = vst.msk [vmem:[%s739] sm:$0xff] %vm3103, %v3056
          %3105 = vst.msk [vmem:[%s739 + $0x8] sm:$0xff] %vm3103, %v3058
          %3106 = vst.msk [vmem:[%s739 + $0x10] sm:$0xff] %vm3103, %v3060
          %3107 = vst.msk [vmem:[%s739 + $0x18] sm:$0xff] %vm3103, %v3062
          %3108 = vst.msk [vmem:[%s739 + $0x20] sm:$0xff] %vm3103, %v3064
          %3109 = vst.msk [vmem:[%s739 + $0x28] sm:$0xff] %vm3103, %v3066
          %3110 = vst.msk [vmem:[%s739 + $0x30] sm:$0xff] %vm3103, %v3068
          %3111 = vst.msk [vmem:[%s739 + $0x38] sm:$0xff] %vm3103, %v3070
          %3112 = vst.msk [vmem:[%s739 + $0x40] sm:$0xff] %vm3103, %v3072
          %3113 = vst.msk [vmem:[%s739 + $0x48] sm:$0xff] %vm3103, %v3074
          %3114 = vst.msk [vmem:[%s739 + $0x50] sm:$0xff] %vm3103, %v3076
          %3115 = vst.msk [vmem:[%s739 + $0x58] sm:$0xff] %vm3103, %v3078
          %3116 = vst.msk [vmem:[%s739 + $0x60] sm:$0xff] %vm3103, %v3080
          %3117 = vst.msk [vmem:[%s739 + $0x68] sm:$0xff] %vm3103, %v3082
          %3118 = vst.msk [vmem:[%s739 + $0x70] sm:$0xff] %vm3103, %v3084
          %3119 = vst.msk [vmem:[%s739 + $0x78] sm:$0xff] %vm3103, %v3086
        $region163: #{tpu_custom_call.1} parent=142 // pred_fallthru
          _
        %s3120 = sand.u32 %s130, 1
        %s3121 = scalar_lea.sflag [#allocation9], %s3120
        %s3122 = sand.u32 %s130, 1
        %s3123 = smul.addr %s3122, 128
        %s3124 = scalar_lea.vmem [#allocation8], %s3123
        // Predicated region
        $region164: #{tpu_custom_call.1} parent=142 // pred_check
          %p3125 = pneg %p140
        $region165: #{tpu_custom_call.1} parent=142 // pred_check_branch
          %3127 = sbr.rel (%p3125) target = $region167
        $region166: #{tpu_custom_call.1} parent=142 // pred_region
          %s3128 = smul.u32 16, %s23
          %s3130 = ssub.s32 2048, 2048
          %3131 = vsyncadd %s3121, %s3130
          %s3132 = smul.addr %s22, 32
          %s3133 = sadd.s32 %s3128, %s3132
          %s3134 = smul.addr %s3133, 128
          %s3135 = scalar_lea.hbm %s3, %s3134
          %s3136 = sshll.u32 %s3124, 4
          %s3137 = int_to_ptr.vmem [resolvable:$true] %s3136
          %3142 = dma.vmem_to_hbm [thread:$0]  %s3137, 2048, %s3135, %s3121, 128, 128, 8
        $region167: #{tpu_custom_call.1} parent=142 // pred_fallthru
          _
      $region143: #{tpu_custom_call.1} parent=5 // pred_fallthru
        _
      %p3143 = scmp.le.s32.totalorder 2, %s12
      // Predicated region
      $region168: #{tpu_custom_call.1} parent=5 // pred_check
        %p3144 = pneg %p3143
      $region169: #{tpu_custom_call.1} parent=5 // pred_check_branch
        %3146 = sbr.rel (%p3144) target = $region171
      $region170: #{tpu_custom_call.1} parent=5 // pred_region
        %s3147 = ssub.s32 %s12, 2
        // Predicated region
        $region172: #{tpu_custom_call.1} parent=170 // pred_check
          %p3148 = pneg %p146
        $region173: #{tpu_custom_call.1} parent=170 // pred_check_branch
          %3150 = sbr.rel (%p3148) target = $region175
        $region174: #{tpu_custom_call.1} parent=170 // pred_region
          %s3151 = sand.u32 %s131, 1
          %s3152 = scalar_lea.sflag [#allocation9], %s3151
          %s3153 = sand.u32 %s131, 1
          %s3154 = smul.addr %s3153, 128
          %s3155 = scalar_lea.vmem [#allocation8], %s3154
          %3156 = dma.done %s3152, 2048
        $region175: #{tpu_custom_call.1} parent=170 // pred_fallthru
          _
      $region171: #{tpu_custom_call.1} parent=5 // pred_fallthru
        _
    $region6: #{tpu_custom_call.1} parent=1 // loop_footer
      %s16 = sadd.s32 1, %s12
    $region7: #{tpu_custom_call.1} parent=1 // loop_footer_branch
      %11 = sbr.rel target = $region3
    $region8: #{tpu_custom_call.1} parent=1 // loop_exit
      _
    %3157 = vsyncpa [#allocation9], 1
    %s3158 = scalar_lea.sflag [#allocation9], 1
    %3159 = vsyncpa %s3158, 1

</llo_original>
